<compile_context>
chip_gen: v7x
topology: tpu7x:2x2x1
jax: 0.10.0
libtpu: 0.0.40
codegen_flags: <defaults>
</compile_context>

<pallas_src>
import functools

import jax
import jax.numpy as jnp
import numpy as np
from jax.experimental import pallas as pl
from jax.experimental.pallas import tpu as pltpu

EPS = 1e-12  # args.layer_norm_eps (the module passes it to LayerNorm AND BatchNorm1d)


# --------------------------- fused Pallas kernel -----------------------------

def fused_bytenet_kernel(r_list, B, L, H,
                         x_ref, up_w, up_b,
                         W1, W2, W3, VEC,
                         dw1, db1, dw2, db2,
                         o_ref):
    # Single grid step: the whole (batch-folded) forward stays in VMEM/vregs.
    BL = B * L
    twoH = 2 * H

    # ---- AbEmbeddings tail: LayerNorm(E) (affine folded into up_w/up_b) -----
    x = x_ref[...]                                                # (B*L, E)
    mu = jnp.mean(x, axis=-1, keepdims=True)
    var = jnp.mean((x - mu) ** 2, axis=-1, keepdims=True)
    xn = (x - mu) * jax.lax.rsqrt(var + EPS)
    # TODO(synk): Dropout omitted (inference-mode identity; torch RNG not reproducible).
    x = jnp.dot(xn, up_w[...], preferred_element_type=jnp.float32) + up_b[...]  # (B*L, 2H)

    # Per-row local sequence index (no div/mod: concat B copies of a per-sample iota).
    base = jax.lax.broadcasted_iota(jnp.int32, (L, 1), 0)
    local = jnp.concatenate([base] * B, axis=0)                   # (B*L, 1)

    # ---- ByteNet blocks (statically unrolled; r_list is compile-time) -------
    for li, r in enumerate(r_list):
        v = VEC[li:li + 1, :]                                     # (1, 8H) packed vectors
        s1 = v[:, 0:twoH]                 # BN1 scale
        t1 = v[:, twoH:2 * twoH]          # BN1 shift
        t2 = v[:, 2 * twoH:2 * twoH + H]  # conv1 bias folded into BN2 shift
        t3 = v[:, 2 * twoH + H:3 * twoH]  # conv2 bias folded into BN3 shift
        b3 = v[:, 3 * twoH:4 * twoH]      # conv3 bias

        # BN1(eval)+ReLU, then conv_1 (1x1, 2H->H) with BN2 scale folded into W1.
        h = jnp.maximum(x * s1 + t1, 0.0)
        h = jnp.maximum(
            jnp.dot(h, W1[li], preferred_element_type=jnp.float32) + t2, 0.0)  # (B*L, H)

        # ConstantPad1d(r, r) + Conv1d(k=3, dilation=r): the +/-r taps are XLU
        # sublane rolls, zeroed where the shift would cross a sample boundary
        # (mask is static in r).  Taps are lane-concatenated and hit the MXU
        # once against the merged (3H, H) weight (BN3 scale folded in).
        mdn = (local >= r).astype(jnp.float32)
        mup = (local < L - r).astype(jnp.float32)
        hdn = pltpu.roll(h, r, 0) * mdn          # h[i-r] within sample, else 0
        hup = pltpu.roll(h, BL - r, 0) * mup     # h[i+r] within sample, else 0
        hc = jnp.concatenate([hdn, h, hup], axis=-1)              # (B*L, 3H)
        h = jnp.maximum(
            jnp.dot(hc, W2[li], preferred_element_type=jnp.float32) + t3, 0.0)

        # conv_3 (1x1, H -> 2H) + residual; the residual never leaves registers.
        x = x + jnp.dot(h, W3[li], preferred_element_type=jnp.float32) + b3    # (B*L, 2H)

    # ---- ByteNetDecoder2: dense(L*2H -> 256) without any flatten staging ----
    # feat[b] @ dec_w1  ==  sum_l x[b*L+l] @ dec_w1_r[l]  (dec_w1_r = (L, 2H, 256)),
    # so no (L,2H)->(1,L*2H) relayout and no masked sub-lane VMEM stores.
    accs = [db1[...] for _ in range(B)]                           # each (1, 256)
    for l in range(L):
        w = dw1[l]                                                # (2H, 256)
        for b in range(B):
            row = b * L + l
            accs[b] = accs[b] + jnp.dot(x[row:row + 1, :], w,
                                        preferred_element_type=jnp.float32)
    z = jnp.concatenate(accs, axis=0) if B > 1 else accs[0]       # (B, 256)
    z = jnp.maximum(z, 0.0)
    mu = jnp.mean(z, axis=-1, keepdims=True)
    var = jnp.mean((z - mu) ** 2, axis=-1, keepdims=True)
    zn = (z - mu) * jax.lax.rsqrt(var + EPS)
    # LayerNorm affine folded into dw2/db2; dw2/db2 are lane-padded to 128 so
    # the kernel's only HBM store is a dense 128-lane row per sample.
    o_ref[...] = jnp.dot(zn, dw2[...], preferred_element_type=jnp.float32) + db2[...]


# ------------------------------ param packing --------------------------------

def pack_params(params):
    """Precompute inference-time constants once, outside the kernel:
      * fold BatchNorm eval statistics into per-channel (scale, shift),
      * fold conv biases into the following BN shift and BN scales into the
        preceding conv weight,
      * fold the two LayerNorm affines into the following linear layers,
      * concatenate all small per-layer vectors into one (n_layers, 8H) array,
      * reshape dec_w1 to (L, 2H, 256) for the per-row decoder accumulation,
      * lane-pad the final 256->1 decoder weight/bias to 128 output lanes.
    """
    blk = params['blocks']
    H = blk[0]['w1'].shape[1]
    L = params['dec_w1'].shape[0] // (2 * H)

    def bn_fold(p, tag):
        s = p[f'{tag}_g'][0] * jax.lax.rsqrt(p[f'{tag}_v'][0] + EPS)
        t = p[f'{tag}_b'][0] - p[f'{tag}_m'][0] * s
        return s, t

    W1, W2, W3, VEC = [], [], [], []
    for p in blk:
        s1, t1 = bn_fold(p, 'bn1')
        s2, t2 = bn_fold(p, 'bn2')
        s3, t3 = bn_fold(p, 'bn3')
        W1.append(p['w1'] * s2[None, :])                          # (2H, H), BN2 scale folded
        W2.append(p['w2'].reshape(3 * H, H) * s3[None, :])        # (3H, H), taps merged, BN3 scale folded
        W3.append(p['w3'])                                        # (H, 2H)
        VEC.append(jnp.concatenate([s1, t1,
                                    p['b1'][0] * s2 + t2,
                                    p['b2'][0] * s3 + t3,
                                    p['b3'][0]]))                 # (8H,) = (128,) at H=16

    up_w = params['ln_g'][0][:, None] * params['up_w']            # LN gamma folded
    up_b = (params['ln_b'][0] @ params['up_w'] + params['up_b'][0])[None, :]
    dw2 = params['dec_ln_g'][0][:, None] * params['dec_w2']       # (256, 1)
    db2 = (params['dec_ln_b'][0] @ params['dec_w2'] + params['dec_b2'][0])[None, :]

    return dict(
        aa_emb=params['aa_emb'], pos_emb=params['pos_emb'], pos_emb2=params['pos_emb2'],
        up_w=up_w, up_b=up_b,
        W1=jnp.stack(W1), W2=jnp.stack(W2), W3=jnp.stack(W3), VEC=jnp.stack(VEC),
        dw1=params['dec_w1'].reshape(L, 2 * H, 256),
        db1=params['dec_b1'],
        dw2=jnp.pad(dw2, ((0, 0), (0, 127))),                     # lane-dense output
        db2=jnp.pad(db2, ((0, 0), (0, 127))),
    )


# ------------------------------ full forward ---------------------------------

@functools.partial(jax.jit, static_argnames=('pad_token_id', 'r_list'))
def bytenet_forward(packed, tokens, lengths, *, pad_token_id, r_list):
    B, L = tokens.shape
    # Position ids + embedding gathers + the embedding sum stay in plain JAX
    # (fuses into the gathers), so the kernel takes a single activation input.
    mask = (tokens != pad_token_id).astype(jnp.int32)
    pid = jnp.cumsum(mask, axis=1) * mask
    pid2 = (lengths[:, None].astype(jnp.int32) - pid + 2) * mask
    x = packed['aa_emb'][tokens] + packed['pos_emb'][pid] + packed['pos_emb2'][pid2]
    E = x.shape[-1]
    H = packed['W1'].shape[-1]
    x = x.reshape(B * L, E)                                       # batch folded into sublanes

    weight_names = ('up_w', 'up_b', 'W1', 'W2', 'W3', 'VEC',
                    'dw1', 'db1', 'dw2', 'db2')
    weights = [packed[k] for k in weight_names]

    def full_spec(w):
        # Full-array block; the block index never changes so it is DMA'd once.
        zeros = (0,) * w.ndim
        return pl.BlockSpec(w.shape, lambda i, _z=zeros: _z)

    out = pl.pallas_call(
        functools.partial(fused_bytenet_kernel, tuple(r_list), B, L, H),
        out_shape=jax.ShapeDtypeStruct((B, 128), jnp.float32),
        grid_spec=pltpu.PrefetchScalarGridSpec(
            num_scalar_prefetch=0,
            grid=(1,),                                            # whole batch in one step
            in_specs=[full_spec(x)] + [full_spec(w) for w in weights],
            out_specs=pl.BlockSpec((B, 128), lambda i: (0, 0)),
        ),
        compiler_params=pltpu.CompilerParams(
            dimension_semantics=("arbitrary",)),
    )(x, *weights)
    # Only lane 0 of the padded decoder output is meaningful.
    return out[:, :1]                                             # (B, 1)


# Pure-JAX reference of the same (inference) math, for verification.
def reference_forward(params, tokens, lengths, pad_token_id, r_list):
    B, L = tokens.shape
    mask = (tokens != pad_token_id).astype(jnp.int32)
    pid = jnp.cumsum(mask, axis=1) * mask
    pid2 = (lengths[:, None].astype(jnp.int32) - pid + 2) * mask
    x = params['aa_emb'][tokens] + params['pos_emb'][pid] + params['pos_emb2'][pid2]
    mu = x.mean(-1, keepdims=True)
    var = ((x - mu) ** 2).mean(-1, keepdims=True)
    x = (x - mu) / jnp.sqrt(var + EPS) * params['ln_g'][0] + params['ln_b'][0]
    x = x @ params['up_w'] + params['up_b'][0]
    for r, p in zip(r_list, params['blocks']):
        y = x
        h = (x - p['bn1_m'][0]) / jnp.sqrt(p['bn1_v'][0] + EPS) * p['bn1_g'][0] + p['bn1_b'][0]
        h = jnp.maximum(h, 0.0)
        h = h @ p['w1'] + p['b1'][0]
        h = (h - p['bn2_m'][0]) / jnp.sqrt(p['bn2_v'][0] + EPS) * p['bn2_g'][0] + p['bn2_b'][0]
        h = jnp.maximum(h, 0.0)
        hp = jnp.pad(h, ((0, 0), (r, r), (0, 0)))
        h = sum(hp[:, k * r:k * r + L, :] @ p['w2'][k] for k in range(3)) + p['b2'][0]
        h = (h - p['bn3_m'][0]) / jnp.sqrt(p['bn3_v'][0] + EPS) * p['bn3_g'][0] + p['bn3_b'][0]
        h = jnp.maximum(h, 0.0)
        h = h @ p['w3'] + p['b3'][0]
        x = h + y
    f = x.reshape(B, -1)
    z = f @ params['dec_w1'] + params['dec_b1'][0]
    z = jnp.maximum(z, 0.0)
    mu = z.mean(-1, keepdims=True)
    var = ((z - mu) ** 2).mean(-1, keepdims=True)
    z = (z - mu) / jnp.sqrt(var + EPS) * params['dec_ln_g'][0] + params['dec_ln_b'][0]
    return z @ params['dec_w2'] + params['dec_b2'][0]


# ------------------------------ Parameters ----------------------------------

def init_params(key, *, num_tokens, pad_token_id, E, H, L, n_layers):
    keys = iter(jax.random.split(key, 256))

    def nrm(shape, s=0.1):
        return (s * jax.random.normal(next(keys), shape)).astype(jnp.float32)

    params = {}
    params['aa_emb'] = nrm((num_tokens + 1, E)).at[pad_token_id].set(0.0)
    params['pos_emb'] = nrm((L, E)).at[0].set(0.0)     # padding_idx=0
    params['pos_emb2'] = nrm((L, E)).at[0].set(0.0)    # padding_idx=0
    params['ln_g'] = 1.0 + nrm((1, E))
    params['ln_b'] = nrm((1, E))
    params['up_w'] = nrm((E, 2 * H))
    params['up_b'] = nrm((1, 2 * H))

    blocks = []
    for _ in range(n_layers):
        blocks.append({
            'bn1_g': 1.0 + nrm((1, 2 * H)), 'bn1_b': nrm((1, 2 * H)),
            'bn1_m': nrm((1, 2 * H)), 'bn1_v': 1.0 + jnp.abs(nrm((1, 2 * H))),
            'w1': nrm((2 * H, H)), 'b1': nrm((1, H)),
            'bn2_g': 1.0 + nrm((1, H)), 'bn2_b': nrm((1, H)),
            'bn2_m': nrm((1, H)), 'bn2_v': 1.0 + jnp.abs(nrm((1, H))),
            'w2': nrm((3, H, H)),  # [tap, c_in, c_out] == torch weight[:, :, k].T
            'b2': nrm((1, H)),
            'bn3_g': 1.0 + nrm((1, H)), 'bn3_b': nrm((1, H)),
            'bn3_m': nrm((1, H)), 'bn3_v': 1.0 + jnp.abs(nrm((1, H))),
            'w3': nrm((H, 2 * H)), 'b3': nrm((1, 2 * H)),
        })
    params['blocks'] = blocks

    D = 2 * H * L
    params['dec_w1'] = nrm((D, 256))
    params['dec_b1'] = nrm((1, 256))
    params['dec_ln_g'] = 1.0 + nrm((1, 256))
    params['dec_ln_b'] = nrm((1, 256))
    params['dec_w2'] = nrm((256, 1))
    params['dec_b2'] = nrm((1, 1))
    return params


if __name__ == "__main__":
    # args: num_tokens=20, pad_token_id=0, small_embedding=8, hidden_size=16,
    #       gen_max_len=16, n_layers=4, max_r=4, layer_norm_eps=1e-12,
    #       task_train='regression' (non-masked path).
    num_tokens, pad_token_id = 20, 0
    E, H, L = 8, 16, 16
    n_layers, max_r = 4, 4
    r_list = tuple(2 ** i if 2 ** i <= max_r else max_r for i in range(n_layers))  # (1,2,4,4)
    B = 2

    key = jax.random.PRNGKey(0)
    kp, kt = jax.random.split(key)
    params = init_params(kp, num_tokens=num_tokens, pad_token_id=pad_token_id,
                         E=E, H=H, L=L, n_layers=n_layers)
    packed = pack_params(params)

    lengths = jnp.array([12, 9], dtype=jnp.int32)
    tok = jax.random.randint(kt, (B, L), 1, num_tokens + 1, dtype=jnp.int32)
    pos = jnp.arange(L)[None, :]
    tokens = jnp.where(pos < lengths[:, None], tok, pad_token_id).astype(jnp.int32)

    out = bytenet_forward(packed, tokens, lengths,
                          pad_token_id=pad_token_id, r_list=r_list)
    out = jax.block_until_ready(out)

    ref = reference_forward(params, tokens, lengths, pad_token_id, r_list)
    assert out.shape == (B, 1)
    np.testing.assert_allclose(np.asarray(out), np.asarray(ref), rtol=1e-3, atol=1e-3)
    print("KERNEL_OK")
</pallas_src>

<mosaic_0001>
module attributes {stable_mosaic.version = 11 : i64} {
  func.func @fused_bytenet_kernel(%arg0: i32, %arg1: memref<32x8xf32, #tpu.memory_space<vmem>>, %arg2: memref<8x32xf32, #tpu.memory_space<vmem>>, %arg3: memref<1x32xf32, #tpu.memory_space<vmem>>, %arg4: memref<4x32x16xf32, #tpu.memory_space<vmem>>, %arg5: memref<4x48x16xf32, #tpu.memory_space<vmem>>, %arg6: memref<4x16x32xf32, #tpu.memory_space<vmem>>, %arg7: memref<4x128xf32, #tpu.memory_space<vmem>>, %arg8: memref<16x32x256xf32, #tpu.memory_space<vmem>>, %arg9: memref<1x256xf32, #tpu.memory_space<vmem>>, %arg10: memref<256x128xf32, #tpu.memory_space<vmem>>, %arg11: memref<1x128xf32, #tpu.memory_space<vmem>>, %arg12: memref<2x128xf32, #tpu.memory_space<vmem>>) attributes {dimension_semantics = [#tpu.dimension_semantics<arbitrary>], iteration_bounds = array<i64: 1>, scalar_prefetch = 0 : i64, scratch_operands = 0 : i64, tpu.core_type = #tpu.core_type<tc>, window_params = [{pipeline_mode = #tpu.pipeline_mode<synchronous>, transform_indices = @transform_0, window_bounds = array<i64: 32, 8>}, {pipeline_mode = #tpu.pipeline_mode<synchronous>, transform_indices = @transform_1, window_bounds = array<i64: 8, 32>}, {pipeline_mode = #tpu.pipeline_mode<synchronous>, transform_indices = @transform_2, window_bounds = array<i64: 1, 32>}, {pipeline_mode = #tpu.pipeline_mode<synchronous>, transform_indices = @transform_3, window_bounds = array<i64: 4, 32, 16>}, {pipeline_mode = #tpu.pipeline_mode<synchronous>, transform_indices = @transform_4, window_bounds = array<i64: 4, 48, 16>}, {pipeline_mode = #tpu.pipeline_mode<synchronous>, transform_indices = @transform_5, window_bounds = array<i64: 4, 16, 32>}, {pipeline_mode = #tpu.pipeline_mode<synchronous>, transform_indices = @transform_6, window_bounds = array<i64: 4, 128>}, {pipeline_mode = #tpu.pipeline_mode<synchronous>, transform_indices = @transform_7, window_bounds = array<i64: 16, 32, 256>}, {pipeline_mode = #tpu.pipeline_mode<synchronous>, transform_indices = @transform_8, window_bounds = array<i64: 1, 256>}, {pipeline_mode = #tpu.pipeline_mode<synchronous>, transform_indices = @transform_9, window_bounds = array<i64: 256, 128>}, {pipeline_mode = #tpu.pipeline_mode<synchronous>, transform_indices = @transform_10, window_bounds = array<i64: 1, 128>}, {pipeline_mode = #tpu.pipeline_mode<synchronous>, transform_indices = @transform_11, window_bounds = array<i64: 2, 128>}]} {
    %c0 = arith.constant 0 : index
    %c0_0 = arith.constant 0 : index
    %0 = vector.load %arg1[%c0, %c0_0] : memref<32x8xf32, #tpu.memory_space<vmem>>, vector<32x8xf32>
    %cst = arith.constant dense<0.000000e+00> : vector<32xf32>
    %1 = vector.multi_reduction <add>, %0, %cst [1] : vector<32x8xf32> to vector<32xf32>
    %2 = vector.shape_cast %1 : vector<32xf32> to vector<32x1xf32>
    %cst_1 = arith.constant 8.000000e+00 : f32
    %3 = vector.broadcast %cst_1 : f32 to vector<32x1xf32>
    %4 = arith.divf %2, %3 : vector<32x1xf32>
    %5 = vector.broadcast %4 : vector<32x1xf32> to vector<32x8xf32>
    %6 = arith.subf %0, %5 : vector<32x8xf32>
    %7 = arith.mulf %6, %6 : vector<32x8xf32>
    %cst_2 = arith.constant dense<0.000000e+00> : vector<32xf32>
    %8 = vector.multi_reduction <add>, %7, %cst_2 [1] : vector<32x8xf32> to vector<32xf32>
    %9 = vector.shape_cast %8 : vector<32xf32> to vector<32x1xf32>
    %cst_3 = arith.constant 8.000000e+00 : f32
    %10 = vector.broadcast %cst_3 : f32 to vector<32x1xf32>
    %11 = arith.divf %9, %10 : vector<32x1xf32>
    %12 = vector.broadcast %4 : vector<32x1xf32> to vector<32x8xf32>
    %13 = arith.subf %0, %12 : vector<32x8xf32>
    %cst_4 = arith.constant 9.99999996E-13 : f32
    %14 = vector.broadcast %cst_4 : f32 to vector<32x1xf32>
    %15 = arith.addf %11, %14 : vector<32x1xf32>
    %16 = math.rsqrt %15 : vector<32x1xf32>
    %17 = vector.broadcast %16 : vector<32x1xf32> to vector<32x8xf32>
    %18 = arith.mulf %13, %17 : vector<32x8xf32>
    %c0_5 = arith.constant 0 : index
    %c0_6 = arith.constant 0 : index
    %19 = vector.load %arg2[%c0_5, %c0_6] : memref<8x32xf32, #tpu.memory_space<vmem>>, vector<8x32xf32>
    %cst_7 = arith.constant dense<0.000000e+00> : vector<32x32xf32>
    %20 = tpu.matmul %18, %19, %cst_7 {dimension_numbers = #tpu.dot_dimension_numbers<[1], [0], [0], [1], [0, 0, 1, 1], [], []>} : vector<32x8xf32>, vector<8x32xf32>, vector<32x32xf32> -> vector<32x32xf32>
    %c0_8 = arith.constant 0 : index
    %c0_9 = arith.constant 0 : index
    %21 = vector.load %arg3[%c0_8, %c0_9] : memref<1x32xf32, #tpu.memory_space<vmem>>, vector<1x32xf32>
    %22 = vector.broadcast %21 : vector<1x32xf32> to vector<32x32xf32>
    %23 = arith.addf %20, %22 : vector<32x32xf32>
    %24 = tpu.iota {dimensions = array<i32: 0>} : vector<16x1xi32>
    %25 = tpu.concatenate %24, %24 in 0 : vector<16x1xi32>, vector<16x1xi32> -> vector<32x1xi32>
    %c0_10 = arith.constant 0 : index
    %c0_11 = arith.constant 0 : index
    %26 = vector.load %arg7[%c0_10, %c0_11] : memref<4x128xf32, #tpu.memory_space<vmem>>, vector<1x128xf32>
    %27 = vector.extract_strided_slice %26 {offsets = [0, 0], sizes = [1, 32], strides = [1, 1]} : vector<1x128xf32> to vector<1x32xf32>
    %28 = vector.extract_strided_slice %26 {offsets = [0, 32], sizes = [1, 32], strides = [1, 1]} : vector<1x128xf32> to vector<1x32xf32>
    %29 = vector.extract_strided_slice %26 {offsets = [0, 64], sizes = [1, 16], strides = [1, 1]} : vector<1x128xf32> to vector<1x16xf32>
    %30 = vector.extract_strided_slice %26 {offsets = [0, 80], sizes = [1, 16], strides = [1, 1]} : vector<1x128xf32> to vector<1x16xf32>
    %31 = vector.extract_strided_slice %26 {offsets = [0, 96], sizes = [1, 32], strides = [1, 1]} : vector<1x128xf32> to vector<1x32xf32>
    %32 = vector.broadcast %27 : vector<1x32xf32> to vector<32x32xf32>
    %33 = arith.mulf %23, %32 : vector<32x32xf32>
    %34 = vector.broadcast %28 : vector<1x32xf32> to vector<32x32xf32>
    %35 = arith.addf %33, %34 : vector<32x32xf32>
    %cst_12 = arith.constant 0.000000e+00 : f32
    %36 = vector.broadcast %cst_12 : f32 to vector<32x32xf32>
    %37 = arith.maximumf %35, %36 : vector<32x32xf32>
    %c0_13 = arith.constant 0 : index
    %c0_14 = arith.constant 0 : index
    %c0_15 = arith.constant 0 : index
    %38 = vector.load %arg4[%c0_13, %c0_14, %c0_15] : memref<4x32x16xf32, #tpu.memory_space<vmem>>, vector<1x32x16xf32>
    %39 = vector.shape_cast %38 : vector<1x32x16xf32> to vector<32x16xf32>
    %cst_16 = arith.constant dense<0.000000e+00> : vector<32x16xf32>
    %40 = tpu.matmul %37, %39, %cst_16 {dimension_numbers = #tpu.dot_dimension_numbers<[1], [0], [0], [1], [0, 0, 1, 1], [], []>} : vector<32x32xf32>, vector<32x16xf32>, vector<32x16xf32> -> vector<32x16xf32>
    %41 = vector.broadcast %29 : vector<1x16xf32> to vector<32x16xf32>
    %42 = arith.addf %40, %41 : vector<32x16xf32>
    %cst_17 = arith.constant 0.000000e+00 : f32
    %43 = vector.broadcast %cst_17 : f32 to vector<32x16xf32>
    %44 = arith.maximumf %42, %43 : vector<32x16xf32>
    %c1_i32 = arith.constant 1 : i32
    %45 = vector.broadcast %c1_i32 : i32 to vector<32x1xi32>
    %46 = arith.cmpi sge, %25, %45 : vector<32x1xi32>
    %47 = arith.extui %46 : vector<32x1xi1> to vector<32x1xi32>
    %48 = arith.sitofp %47 : vector<32x1xi32> to vector<32x1xf32>
    %c15_i32 = arith.constant 15 : i32
    %49 = vector.broadcast %c15_i32 : i32 to vector<32x1xi32>
    %50 = arith.cmpi slt, %25, %49 : vector<32x1xi32>
    %51 = arith.extui %50 : vector<32x1xi1> to vector<32x1xi32>
    %52 = arith.sitofp %51 : vector<32x1xi32> to vector<32x1xf32>
    %c1_i32_18 = arith.constant 1 : i32
    %53 = tpu.dynamic_rotate %44 by %c1_i32_18 dim 0 : vector<32x16xf32>, i32 -> vector<32x16xf32>
    %54 = vector.broadcast %48 : vector<32x1xf32> to vector<32x16xf32>
    %55 = arith.mulf %53, %54 : vector<32x16xf32>
    %c31_i32 = arith.constant 31 : i32
    %56 = tpu.dynamic_rotate %44 by %c31_i32 dim 0 : vector<32x16xf32>, i32 -> vector<32x16xf32>
    %57 = vector.broadcast %52 : vector<32x1xf32> to vector<32x16xf32>
    %58 = arith.mulf %56, %57 : vector<32x16xf32>
    %59 = tpu.concatenate %55, %44, %58 in 1 : vector<32x16xf32>, vector<32x16xf32>, vector<32x16xf32> -> vector<32x48xf32>
    %c0_19 = arith.constant 0 : index
    %c0_20 = arith.constant 0 : index
    %c0_21 = arith.constant 0 : index
    %60 = vector.load %arg5[%c0_19, %c0_20, %c0_21] : memref<4x48x16xf32, #tpu.memory_space<vmem>>, vector<1x48x16xf32>
    %61 = vector.shape_cast %60 : vector<1x48x16xf32> to vector<48x16xf32>
    %cst_22 = arith.constant dense<0.000000e+00> : vector<32x16xf32>
    %62 = tpu.matmul %59, %61, %cst_22 {dimension_numbers = #tpu.dot_dimension_numbers<[1], [0], [0], [1], [0, 0, 1, 1], [], []>} : vector<32x48xf32>, vector<48x16xf32>, vector<32x16xf32> -> vector<32x16xf32>
    %63 = vector.broadcast %30 : vector<1x16xf32> to vector<32x16xf32>
    %64 = arith.addf %62, %63 : vector<32x16xf32>
    %cst_23 = arith.constant 0.000000e+00 : f32
    %65 = vector.broadcast %cst_23 : f32 to vector<32x16xf32>
    %66 = arith.maximumf %64, %65 : vector<32x16xf32>
    %c0_24 = arith.constant 0 : index
    %c0_25 = arith.constant 0 : index
    %c0_26 = arith.constant 0 : index
    %67 = vector.load %arg6[%c0_24, %c0_25, %c0_26] : memref<4x16x32xf32, #tpu.memory_space<vmem>>, vector<1x16x32xf32>
    %68 = vector.shape_cast %67 : vector<1x16x32xf32> to vector<16x32xf32>
    %cst_27 = arith.constant dense<0.000000e+00> : vector<32x32xf32>
    %69 = tpu.matmul %66, %68, %cst_27 {dimension_numbers = #tpu.dot_dimension_numbers<[1], [0], [0], [1], [0, 0, 1, 1], [], []>} : vector<32x16xf32>, vector<16x32xf32>, vector<32x32xf32> -> vector<32x32xf32>
    %70 = arith.addf %23, %69 : vector<32x32xf32>
    %71 = vector.broadcast %31 : vector<1x32xf32> to vector<32x32xf32>
    %72 = arith.addf %70, %71 : vector<32x32xf32>
    %c1 = arith.constant 1 : index
    %c0_28 = arith.constant 0 : index
    %73 = vector.load %arg7[%c1, %c0_28] : memref<4x128xf32, #tpu.memory_space<vmem>>, vector<1x128xf32>
    %74 = vector.extract_strided_slice %73 {offsets = [0, 0], sizes = [1, 32], strides = [1, 1]} : vector<1x128xf32> to vector<1x32xf32>
    %75 = vector.extract_strided_slice %73 {offsets = [0, 32], sizes = [1, 32], strides = [1, 1]} : vector<1x128xf32> to vector<1x32xf32>
    %76 = vector.extract_strided_slice %73 {offsets = [0, 64], sizes = [1, 16], strides = [1, 1]} : vector<1x128xf32> to vector<1x16xf32>
    %77 = vector.extract_strided_slice %73 {offsets = [0, 80], sizes = [1, 16], strides = [1, 1]} : vector<1x128xf32> to vector<1x16xf32>
    %78 = vector.extract_strided_slice %73 {offsets = [0, 96], sizes = [1, 32], strides = [1, 1]} : vector<1x128xf32> to vector<1x32xf32>
    %79 = vector.broadcast %74 : vector<1x32xf32> to vector<32x32xf32>
    %80 = arith.mulf %72, %79 : vector<32x32xf32>
    %81 = vector.broadcast %75 : vector<1x32xf32> to vector<32x32xf32>
    %82 = arith.addf %80, %81 : vector<32x32xf32>
    %cst_29 = arith.constant 0.000000e+00 : f32
    %83 = vector.broadcast %cst_29 : f32 to vector<32x32xf32>
    %84 = arith.maximumf %82, %83 : vector<32x32xf32>
    %c1_30 = arith.constant 1 : index
    %c0_31 = arith.constant 0 : index
    %c0_32 = arith.constant 0 : index
    %85 = vector.load %arg4[%c1_30, %c0_31, %c0_32] : memref<4x32x16xf32, #tpu.memory_space<vmem>>, vector<1x32x16xf32>
    %86 = vector.shape_cast %85 : vector<1x32x16xf32> to vector<32x16xf32>
    %cst_33 = arith.constant dense<0.000000e+00> : vector<32x16xf32>
    %87 = tpu.matmul %84, %86, %cst_33 {dimension_numbers = #tpu.dot_dimension_numbers<[1], [0], [0], [1], [0, 0, 1, 1], [], []>} : vector<32x32xf32>, vector<32x16xf32>, vector<32x16xf32> -> vector<32x16xf32>
    %88 = vector.broadcast %76 : vector<1x16xf32> to vector<32x16xf32>
    %89 = arith.addf %87, %88 : vector<32x16xf32>
    %cst_34 = arith.constant 0.000000e+00 : f32
    %90 = vector.broadcast %cst_34 : f32 to vector<32x16xf32>
    %91 = arith.maximumf %89, %90 : vector<32x16xf32>
    %c2_i32 = arith.constant 2 : i32
    %92 = vector.broadcast %c2_i32 : i32 to vector<32x1xi32>
    %93 = arith.cmpi sge, %25, %92 : vector<32x1xi32>
    %94 = arith.extui %93 : vector<32x1xi1> to vector<32x1xi32>
    %95 = arith.sitofp %94 : vector<32x1xi32> to vector<32x1xf32>
    %c14_i32 = arith.constant 14 : i32
    %96 = vector.broadcast %c14_i32 : i32 to vector<32x1xi32>
    %97 = arith.cmpi slt, %25, %96 : vector<32x1xi32>
    %98 = arith.extui %97 : vector<32x1xi1> to vector<32x1xi32>
    %99 = arith.sitofp %98 : vector<32x1xi32> to vector<32x1xf32>
    %c2_i32_35 = arith.constant 2 : i32
    %100 = tpu.dynamic_rotate %91 by %c2_i32_35 dim 0 : vector<32x16xf32>, i32 -> vector<32x16xf32>
    %101 = vector.broadcast %95 : vector<32x1xf32> to vector<32x16xf32>
    %102 = arith.mulf %100, %101 : vector<32x16xf32>
    %c30_i32 = arith.constant 30 : i32
    %103 = tpu.dynamic_rotate %91 by %c30_i32 dim 0 : vector<32x16xf32>, i32 -> vector<32x16xf32>
    %104 = vector.broadcast %99 : vector<32x1xf32> to vector<32x16xf32>
    %105 = arith.mulf %103, %104 : vector<32x16xf32>
    %106 = tpu.concatenate %102, %91, %105 in 1 : vector<32x16xf32>, vector<32x16xf32>, vector<32x16xf32> -> vector<32x48xf32>
    %c1_36 = arith.constant 1 : index
    %c0_37 = arith.constant 0 : index
    %c0_38 = arith.constant 0 : index
    %107 = vector.load %arg5[%c1_36, %c0_37, %c0_38] : memref<4x48x16xf32, #tpu.memory_space<vmem>>, vector<1x48x16xf32>
    %108 = vector.shape_cast %107 : vector<1x48x16xf32> to vector<48x16xf32>
    %cst_39 = arith.constant dense<0.000000e+00> : vector<32x16xf32>
    %109 = tpu.matmul %106, %108, %cst_39 {dimension_numbers = #tpu.dot_dimension_numbers<[1], [0], [0], [1], [0, 0, 1, 1], [], []>} : vector<32x48xf32>, vector<48x16xf32>, vector<32x16xf32> -> vector<32x16xf32>
    %110 = vector.broadcast %77 : vector<1x16xf32> to vector<32x16xf32>
    %111 = arith.addf %109, %110 : vector<32x16xf32>
    %cst_40 = arith.constant 0.000000e+00 : f32
    %112 = vector.broadcast %cst_40 : f32 to vector<32x16xf32>
    %113 = arith.maximumf %111, %112 : vector<32x16xf32>
    %c1_41 = arith.constant 1 : index
    %c0_42 = arith.constant 0 : index
    %c0_43 = arith.constant 0 : index
    %114 = vector.load %arg6[%c1_41, %c0_42, %c0_43] : memref<4x16x32xf32, #tpu.memory_space<vmem>>, vector<1x16x32xf32>
    %115 = vector.shape_cast %114 : vector<1x16x32xf32> to vector<16x32xf32>
    %cst_44 = arith.constant dense<0.000000e+00> : vector<32x32xf32>
    %116 = tpu.matmul %113, %115, %cst_44 {dimension_numbers = #tpu.dot_dimension_numbers<[1], [0], [0], [1], [0, 0, 1, 1], [], []>} : vector<32x16xf32>, vector<16x32xf32>, vector<32x32xf32> -> vector<32x32xf32>
    %117 = arith.addf %72, %116 : vector<32x32xf32>
    %118 = vector.broadcast %78 : vector<1x32xf32> to vector<32x32xf32>
    %119 = arith.addf %117, %118 : vector<32x32xf32>
    %c2 = arith.constant 2 : index
    %c0_45 = arith.constant 0 : index
    %120 = vector.load %arg7[%c2, %c0_45] : memref<4x128xf32, #tpu.memory_space<vmem>>, vector<1x128xf32>
    %121 = vector.extract_strided_slice %120 {offsets = [0, 0], sizes = [1, 32], strides = [1, 1]} : vector<1x128xf32> to vector<1x32xf32>
    %122 = vector.extract_strided_slice %120 {offsets = [0, 32], sizes = [1, 32], strides = [1, 1]} : vector<1x128xf32> to vector<1x32xf32>
    %123 = vector.extract_strided_slice %120 {offsets = [0, 64], sizes = [1, 16], strides = [1, 1]} : vector<1x128xf32> to vector<1x16xf32>
    %124 = vector.extract_strided_slice %120 {offsets = [0, 80], sizes = [1, 16], strides = [1, 1]} : vector<1x128xf32> to vector<1x16xf32>
    %125 = vector.extract_strided_slice %120 {offsets = [0, 96], sizes = [1, 32], strides = [1, 1]} : vector<1x128xf32> to vector<1x32xf32>
    %126 = vector.broadcast %121 : vector<1x32xf32> to vector<32x32xf32>
    %127 = arith.mulf %119, %126 : vector<32x32xf32>
    %128 = vector.broadcast %122 : vector<1x32xf32> to vector<32x32xf32>
    %129 = arith.addf %127, %128 : vector<32x32xf32>
    %cst_46 = arith.constant 0.000000e+00 : f32
    %130 = vector.broadcast %cst_46 : f32 to vector<32x32xf32>
    %131 = arith.maximumf %129, %130 : vector<32x32xf32>
    %c2_47 = arith.constant 2 : index
    %c0_48 = arith.constant 0 : index
    %c0_49 = arith.constant 0 : index
    %132 = vector.load %arg4[%c2_47, %c0_48, %c0_49] : memref<4x32x16xf32, #tpu.memory_space<vmem>>, vector<1x32x16xf32>
    %133 = vector.shape_cast %132 : vector<1x32x16xf32> to vector<32x16xf32>
    %cst_50 = arith.constant dense<0.000000e+00> : vector<32x16xf32>
    %134 = tpu.matmul %131, %133, %cst_50 {dimension_numbers = #tpu.dot_dimension_numbers<[1], [0], [0], [1], [0, 0, 1, 1], [], []>} : vector<32x32xf32>, vector<32x16xf32>, vector<32x16xf32> -> vector<32x16xf32>
    %135 = vector.broadcast %123 : vector<1x16xf32> to vector<32x16xf32>
    %136 = arith.addf %134, %135 : vector<32x16xf32>
    %cst_51 = arith.constant 0.000000e+00 : f32
    %137 = vector.broadcast %cst_51 : f32 to vector<32x16xf32>
    %138 = arith.maximumf %136, %137 : vector<32x16xf32>
    %c4_i32 = arith.constant 4 : i32
    %139 = vector.broadcast %c4_i32 : i32 to vector<32x1xi32>
    %140 = arith.cmpi sge, %25, %139 : vector<32x1xi32>
    %141 = arith.extui %140 : vector<32x1xi1> to vector<32x1xi32>
    %142 = arith.sitofp %141 : vector<32x1xi32> to vector<32x1xf32>
    %c12_i32 = arith.constant 12 : i32
    %143 = vector.broadcast %c12_i32 : i32 to vector<32x1xi32>
    %144 = arith.cmpi slt, %25, %143 : vector<32x1xi32>
    %145 = arith.extui %144 : vector<32x1xi1> to vector<32x1xi32>
    %146 = arith.sitofp %145 : vector<32x1xi32> to vector<32x1xf32>
    %c4_i32_52 = arith.constant 4 : i32
    %147 = tpu.dynamic_rotate %138 by %c4_i32_52 dim 0 : vector<32x16xf32>, i32 -> vector<32x16xf32>
    %148 = vector.broadcast %142 : vector<32x1xf32> to vector<32x16xf32>
    %149 = arith.mulf %147, %148 : vector<32x16xf32>
    %c28_i32 = arith.constant 28 : i32
    %150 = tpu.dynamic_rotate %138 by %c28_i32 dim 0 : vector<32x16xf32>, i32 -> vector<32x16xf32>
    %151 = vector.broadcast %146 : vector<32x1xf32> to vector<32x16xf32>
    %152 = arith.mulf %150, %151 : vector<32x16xf32>
    %153 = tpu.concatenate %149, %138, %152 in 1 : vector<32x16xf32>, vector<32x16xf32>, vector<32x16xf32> -> vector<32x48xf32>
    %c2_53 = arith.constant 2 : index
    %c0_54 = arith.constant 0 : index
    %c0_55 = arith.constant 0 : index
    %154 = vector.load %arg5[%c2_53, %c0_54, %c0_55] : memref<4x48x16xf32, #tpu.memory_space<vmem>>, vector<1x48x16xf32>
    %155 = vector.shape_cast %154 : vector<1x48x16xf32> to vector<48x16xf32>
    %cst_56 = arith.constant dense<0.000000e+00> : vector<32x16xf32>
    %156 = tpu.matmul %153, %155, %cst_56 {dimension_numbers = #tpu.dot_dimension_numbers<[1], [0], [0], [1], [0, 0, 1, 1], [], []>} : vector<32x48xf32>, vector<48x16xf32>, vector<32x16xf32> -> vector<32x16xf32>
    %157 = vector.broadcast %124 : vector<1x16xf32> to vector<32x16xf32>
    %158 = arith.addf %156, %157 : vector<32x16xf32>
    %cst_57 = arith.constant 0.000000e+00 : f32
    %159 = vector.broadcast %cst_57 : f32 to vector<32x16xf32>
    %160 = arith.maximumf %158, %159 : vector<32x16xf32>
    %c2_58 = arith.constant 2 : index
    %c0_59 = arith.constant 0 : index
    %c0_60 = arith.constant 0 : index
    %161 = vector.load %arg6[%c2_58, %c0_59, %c0_60] : memref<4x16x32xf32, #tpu.memory_space<vmem>>, vector<1x16x32xf32>
    %162 = vector.shape_cast %161 : vector<1x16x32xf32> to vector<16x32xf32>
    %cst_61 = arith.constant dense<0.000000e+00> : vector<32x32xf32>
    %163 = tpu.matmul %160, %162, %cst_61 {dimension_numbers = #tpu.dot_dimension_numbers<[1], [0], [0], [1], [0, 0, 1, 1], [], []>} : vector<32x16xf32>, vector<16x32xf32>, vector<32x32xf32> -> vector<32x32xf32>
    %164 = arith.addf %119, %163 : vector<32x32xf32>
    %165 = vector.broadcast %125 : vector<1x32xf32> to vector<32x32xf32>
    %166 = arith.addf %164, %165 : vector<32x32xf32>
    %c3 = arith.constant 3 : index
    %c0_62 = arith.constant 0 : index
    %167 = vector.load %arg7[%c3, %c0_62] : memref<4x128xf32, #tpu.memory_space<vmem>>, vector<1x128xf32>
    %168 = vector.extract_strided_slice %167 {offsets = [0, 0], sizes = [1, 32], strides = [1, 1]} : vector<1x128xf32> to vector<1x32xf32>
    %169 = vector.extract_strided_slice %167 {offsets = [0, 32], sizes = [1, 32], strides = [1, 1]} : vector<1x128xf32> to vector<1x32xf32>
    %170 = vector.extract_strided_slice %167 {offsets = [0, 64], sizes = [1, 16], strides = [1, 1]} : vector<1x128xf32> to vector<1x16xf32>
    %171 = vector.extract_strided_slice %167 {offsets = [0, 80], sizes = [1, 16], strides = [1, 1]} : vector<1x128xf32> to vector<1x16xf32>
    %172 = vector.extract_strided_slice %167 {offsets = [0, 96], sizes = [1, 32], strides = [1, 1]} : vector<1x128xf32> to vector<1x32xf32>
    %173 = vector.broadcast %168 : vector<1x32xf32> to vector<32x32xf32>
    %174 = arith.mulf %166, %173 : vector<32x32xf32>
    %175 = vector.broadcast %169 : vector<1x32xf32> to vector<32x32xf32>
    %176 = arith.addf %174, %175 : vector<32x32xf32>
    %cst_63 = arith.constant 0.000000e+00 : f32
    %177 = vector.broadcast %cst_63 : f32 to vector<32x32xf32>
    %178 = arith.maximumf %176, %177 : vector<32x32xf32>
    %c3_64 = arith.constant 3 : index
    %c0_65 = arith.constant 0 : index
    %c0_66 = arith.constant 0 : index
    %179 = vector.load %arg4[%c3_64, %c0_65, %c0_66] : memref<4x32x16xf32, #tpu.memory_space<vmem>>, vector<1x32x16xf32>
    %180 = vector.shape_cast %179 : vector<1x32x16xf32> to vector<32x16xf32>
    %cst_67 = arith.constant dense<0.000000e+00> : vector<32x16xf32>
    %181 = tpu.matmul %178, %180, %cst_67 {dimension_numbers = #tpu.dot_dimension_numbers<[1], [0], [0], [1], [0, 0, 1, 1], [], []>} : vector<32x32xf32>, vector<32x16xf32>, vector<32x16xf32> -> vector<32x16xf32>
    %182 = vector.broadcast %170 : vector<1x16xf32> to vector<32x16xf32>
    %183 = arith.addf %181, %182 : vector<32x16xf32>
    %cst_68 = arith.constant 0.000000e+00 : f32
    %184 = vector.broadcast %cst_68 : f32 to vector<32x16xf32>
    %185 = arith.maximumf %183, %184 : vector<32x16xf32>
    %c4_i32_69 = arith.constant 4 : i32
    %186 = vector.broadcast %c4_i32_69 : i32 to vector<32x1xi32>
    %187 = arith.cmpi sge, %25, %186 : vector<32x1xi32>
    %188 = arith.extui %187 : vector<32x1xi1> to vector<32x1xi32>
    %189 = arith.sitofp %188 : vector<32x1xi32> to vector<32x1xf32>
    %c12_i32_70 = arith.constant 12 : i32
    %190 = vector.broadcast %c12_i32_70 : i32 to vector<32x1xi32>
    %191 = arith.cmpi slt, %25, %190 : vector<32x1xi32>
    %192 = arith.extui %191 : vector<32x1xi1> to vector<32x1xi32>
    %193 = arith.sitofp %192 : vector<32x1xi32> to vector<32x1xf32>
    %c4_i32_71 = arith.constant 4 : i32
    %194 = tpu.dynamic_rotate %185 by %c4_i32_71 dim 0 : vector<32x16xf32>, i32 -> vector<32x16xf32>
    %195 = vector.broadcast %189 : vector<32x1xf32> to vector<32x16xf32>
    %196 = arith.mulf %194, %195 : vector<32x16xf32>
    %c28_i32_72 = arith.constant 28 : i32
    %197 = tpu.dynamic_rotate %185 by %c28_i32_72 dim 0 : vector<32x16xf32>, i32 -> vector<32x16xf32>
    %198 = vector.broadcast %193 : vector<32x1xf32> to vector<32x16xf32>
    %199 = arith.mulf %197, %198 : vector<32x16xf32>
    %200 = tpu.concatenate %196, %185, %199 in 1 : vector<32x16xf32>, vector<32x16xf32>, vector<32x16xf32> -> vector<32x48xf32>
    %c3_73 = arith.constant 3 : index
    %c0_74 = arith.constant 0 : index
    %c0_75 = arith.constant 0 : index
    %201 = vector.load %arg5[%c3_73, %c0_74, %c0_75] : memref<4x48x16xf32, #tpu.memory_space<vmem>>, vector<1x48x16xf32>
    %202 = vector.shape_cast %201 : vector<1x48x16xf32> to vector<48x16xf32>
    %cst_76 = arith.constant dense<0.000000e+00> : vector<32x16xf32>
    %203 = tpu.matmul %200, %202, %cst_76 {dimension_numbers = #tpu.dot_dimension_numbers<[1], [0], [0], [1], [0, 0, 1, 1], [], []>} : vector<32x48xf32>, vector<48x16xf32>, vector<32x16xf32> -> vector<32x16xf32>
    %204 = vector.broadcast %171 : vector<1x16xf32> to vector<32x16xf32>
    %205 = arith.addf %203, %204 : vector<32x16xf32>
    %cst_77 = arith.constant 0.000000e+00 : f32
    %206 = vector.broadcast %cst_77 : f32 to vector<32x16xf32>
    %207 = arith.maximumf %205, %206 : vector<32x16xf32>
    %c3_78 = arith.constant 3 : index
    %c0_79 = arith.constant 0 : index
    %c0_80 = arith.constant 0 : index
    %208 = vector.load %arg6[%c3_78, %c0_79, %c0_80] : memref<4x16x32xf32, #tpu.memory_space<vmem>>, vector<1x16x32xf32>
    %209 = vector.shape_cast %208 : vector<1x16x32xf32> to vector<16x32xf32>
    %cst_81 = arith.constant dense<0.000000e+00> : vector<32x32xf32>
    %210 = tpu.matmul %207, %209, %cst_81 {dimension_numbers = #tpu.dot_dimension_numbers<[1], [0], [0], [1], [0, 0, 1, 1], [], []>} : vector<32x16xf32>, vector<16x32xf32>, vector<32x32xf32> -> vector<32x32xf32>
    %211 = arith.addf %166, %210 : vector<32x32xf32>
    %212 = vector.broadcast %172 : vector<1x32xf32> to vector<32x32xf32>
    %213 = arith.addf %211, %212 : vector<32x32xf32>
    %c0_82 = arith.constant 0 : index
    %c0_83 = arith.constant 0 : index
    %214 = vector.load %arg9[%c0_82, %c0_83] : memref<1x256xf32, #tpu.memory_space<vmem>>, vector<1x256xf32>
    %c0_84 = arith.constant 0 : index
    %c0_85 = arith.constant 0 : index
    %215 = vector.load %arg9[%c0_84, %c0_85] : memref<1x256xf32, #tpu.memory_space<vmem>>, vector<1x256xf32>
    %c0_86 = arith.constant 0 : index
    %c0_87 = arith.constant 0 : index
    %c0_88 = arith.constant 0 : index
    %216 = vector.load %arg8[%c0_86, %c0_87, %c0_88] : memref<16x32x256xf32, #tpu.memory_space<vmem>>, vector<1x32x256xf32>
    %217 = vector.shape_cast %216 : vector<1x32x256xf32> to vector<32x256xf32>
    %218 = vector.extract_strided_slice %213 {offsets = [0, 0], sizes = [1, 32], strides = [1, 1]} : vector<32x32xf32> to vector<1x32xf32>
    %cst_89 = arith.constant dense<0.000000e+00> : vector<1x256xf32>
    %219 = tpu.matmul %218, %217, %cst_89 {dimension_numbers = #tpu.dot_dimension_numbers<[1], [0], [0], [1], [0, 0, 1, 1], [], []>} : vector<1x32xf32>, vector<32x256xf32>, vector<1x256xf32> -> vector<1x256xf32>
    %220 = arith.addf %214, %219 : vector<1x256xf32>
    %221 = vector.extract_strided_slice %213 {offsets = [16, 0], sizes = [1, 32], strides = [1, 1]} : vector<32x32xf32> to vector<1x32xf32>
    %cst_90 = arith.constant dense<0.000000e+00> : vector<1x256xf32>
    %222 = tpu.matmul %221, %217, %cst_90 {dimension_numbers = #tpu.dot_dimension_numbers<[1], [0], [0], [1], [0, 0, 1, 1], [], []>} : vector<1x32xf32>, vector<32x256xf32>, vector<1x256xf32> -> vector<1x256xf32>
    %223 = arith.addf %215, %222 : vector<1x256xf32>
    %c1_91 = arith.constant 1 : index
    %c0_92 = arith.constant 0 : index
    %c0_93 = arith.constant 0 : index
    %224 = vector.load %arg8[%c1_91, %c0_92, %c0_93] : memref<16x32x256xf32, #tpu.memory_space<vmem>>, vector<1x32x256xf32>
    %225 = vector.shape_cast %224 : vector<1x32x256xf32> to vector<32x256xf32>
    %226 = vector.extract_strided_slice %213 {offsets = [1, 0], sizes = [1, 32], strides = [1, 1]} : vector<32x32xf32> to vector<1x32xf32>
    %cst_94 = arith.constant dense<0.000000e+00> : vector<1x256xf32>
    %227 = tpu.matmul %226, %225, %cst_94 {dimension_numbers = #tpu.dot_dimension_numbers<[1], [0], [0], [1], [0, 0, 1, 1], [], []>} : vector<1x32xf32>, vector<32x256xf32>, vector<1x256xf32> -> vector<1x256xf32>
    %228 = arith.addf %220, %227 : vector<1x256xf32>
    %229 = vector.extract_strided_slice %213 {offsets = [17, 0], sizes = [1, 32], strides = [1, 1]} : vector<32x32xf32> to vector<1x32xf32>
    %cst_95 = arith.constant dense<0.000000e+00> : vector<1x256xf32>
    %230 = tpu.matmul %229, %225, %cst_95 {dimension_numbers = #tpu.dot_dimension_numbers<[1], [0], [0], [1], [0, 0, 1, 1], [], []>} : vector<1x32xf32>, vector<32x256xf32>, vector<1x256xf32> -> vector<1x256xf32>
    %231 = arith.addf %223, %230 : vector<1x256xf32>
    %c2_96 = arith.constant 2 : index
    %c0_97 = arith.constant 0 : index
    %c0_98 = arith.constant 0 : index
    %232 = vector.load %arg8[%c2_96, %c0_97, %c0_98] : memref<16x32x256xf32, #tpu.memory_space<vmem>>, vector<1x32x256xf32>
    %233 = vector.shape_cast %232 : vector<1x32x256xf32> to vector<32x256xf32>
    %234 = vector.extract_strided_slice %213 {offsets = [2, 0], sizes = [1, 32], strides = [1, 1]} : vector<32x32xf32> to vector<1x32xf32>
    %cst_99 = arith.constant dense<0.000000e+00> : vector<1x256xf32>
    %235 = tpu.matmul %234, %233, %cst_99 {dimension_numbers = #tpu.dot_dimension_numbers<[1], [0], [0], [1], [0, 0, 1, 1], [], []>} : vector<1x32xf32>, vector<32x256xf32>, vector<1x256xf32> -> vector<1x256xf32>
    %236 = arith.addf %228, %235 : vector<1x256xf32>
    %237 = vector.extract_strided_slice %213 {offsets = [18, 0], sizes = [1, 32], strides = [1, 1]} : vector<32x32xf32> to vector<1x32xf32>
    %cst_100 = arith.constant dense<0.000000e+00> : vector<1x256xf32>
    %238 = tpu.matmul %237, %233, %cst_100 {dimension_numbers = #tpu.dot_dimension_numbers<[1], [0], [0], [1], [0, 0, 1, 1], [], []>} : vector<1x32xf32>, vector<32x256xf32>, vector<1x256xf32> -> vector<1x256xf32>
    %239 = arith.addf %231, %238 : vector<1x256xf32>
    %c3_101 = arith.constant 3 : index
    %c0_102 = arith.constant 0 : index
    %c0_103 = arith.constant 0 : index
    %240 = vector.load %arg8[%c3_101, %c0_102, %c0_103] : memref<16x32x256xf32, #tpu.memory_space<vmem>>, vector<1x32x256xf32>
    %241 = vector.shape_cast %240 : vector<1x32x256xf32> to vector<32x256xf32>
    %242 = vector.extract_strided_slice %213 {offsets = [3, 0], sizes = [1, 32], strides = [1, 1]} : vector<32x32xf32> to vector<1x32xf32>
    %cst_104 = arith.constant dense<0.000000e+00> : vector<1x256xf32>
    %243 = tpu.matmul %242, %241, %cst_104 {dimension_numbers = #tpu.dot_dimension_numbers<[1], [0], [0], [1], [0, 0, 1, 1], [], []>} : vector<1x32xf32>, vector<32x256xf32>, vector<1x256xf32> -> vector<1x256xf32>
    %244 = arith.addf %236, %243 : vector<1x256xf32>
    %245 = vector.extract_strided_slice %213 {offsets = [19, 0], sizes = [1, 32], strides = [1, 1]} : vector<32x32xf32> to vector<1x32xf32>
    %cst_105 = arith.constant dense<0.000000e+00> : vector<1x256xf32>
    %246 = tpu.matmul %245, %241, %cst_105 {dimension_numbers = #tpu.dot_dimension_numbers<[1], [0], [0], [1], [0, 0, 1, 1], [], []>} : vector<1x32xf32>, vector<32x256xf32>, vector<1x256xf32> -> vector<1x256xf32>
    %247 = arith.addf %239, %246 : vector<1x256xf32>
    %c4 = arith.constant 4 : index
    %c0_106 = arith.constant 0 : index
    %c0_107 = arith.constant 0 : index
    %248 = vector.load %arg8[%c4, %c0_106, %c0_107] : memref<16x32x256xf32, #tpu.memory_space<vmem>>, vector<1x32x256xf32>
    %249 = vector.shape_cast %248 : vector<1x32x256xf32> to vector<32x256xf32>
    %250 = vector.extract_strided_slice %213 {offsets = [4, 0], sizes = [1, 32], strides = [1, 1]} : vector<32x32xf32> to vector<1x32xf32>
    %cst_108 = arith.constant dense<0.000000e+00> : vector<1x256xf32>
    %251 = tpu.matmul %250, %249, %cst_108 {dimension_numbers = #tpu.dot_dimension_numbers<[1], [0], [0], [1], [0, 0, 1, 1], [], []>} : vector<1x32xf32>, vector<32x256xf32>, vector<1x256xf32> -> vector<1x256xf32>
    %252 = arith.addf %244, %251 : vector<1x256xf32>
    %253 = vector.extract_strided_slice %213 {offsets = [20, 0], sizes = [1, 32], strides = [1, 1]} : vector<32x32xf32> to vector<1x32xf32>
    %cst_109 = arith.constant dense<0.000000e+00> : vector<1x256xf32>
    %254 = tpu.matmul %253, %249, %cst_109 {dimension_numbers = #tpu.dot_dimension_numbers<[1], [0], [0], [1], [0, 0, 1, 1], [], []>} : vector<1x32xf32>, vector<32x256xf32>, vector<1x256xf32> -> vector<1x256xf32>
    %255 = arith.addf %247, %254 : vector<1x256xf32>
    %c5 = arith.constant 5 : index
    %c0_110 = arith.constant 0 : index
    %c0_111 = arith.constant 0 : index
    %256 = vector.load %arg8[%c5, %c0_110, %c0_111] : memref<16x32x256xf32, #tpu.memory_space<vmem>>, vector<1x32x256xf32>
    %257 = vector.shape_cast %256 : vector<1x32x256xf32> to vector<32x256xf32>
    %258 = vector.extract_strided_slice %213 {offsets = [5, 0], sizes = [1, 32], strides = [1, 1]} : vector<32x32xf32> to vector<1x32xf32>
    %cst_112 = arith.constant dense<0.000000e+00> : vector<1x256xf32>
    %259 = tpu.matmul %258, %257, %cst_112 {dimension_numbers = #tpu.dot_dimension_numbers<[1], [0], [0], [1], [0, 0, 1, 1], [], []>} : vector<1x32xf32>, vector<32x256xf32>, vector<1x256xf32> -> vector<1x256xf32>
    %260 = arith.addf %252, %259 : vector<1x256xf32>
    %261 = vector.extract_strided_slice %213 {offsets = [21, 0], sizes = [1, 32], strides = [1, 1]} : vector<32x32xf32> to vector<1x32xf32>
    %cst_113 = arith.constant dense<0.000000e+00> : vector<1x256xf32>
    %262 = tpu.matmul %261, %257, %cst_113 {dimension_numbers = #tpu.dot_dimension_numbers<[1], [0], [0], [1], [0, 0, 1, 1], [], []>} : vector<1x32xf32>, vector<32x256xf32>, vector<1x256xf32> -> vector<1x256xf32>
    %263 = arith.addf %255, %262 : vector<1x256xf32>
    %c6 = arith.constant 6 : index
    %c0_114 = arith.constant 0 : index
    %c0_115 = arith.constant 0 : index
    %264 = vector.load %arg8[%c6, %c0_114, %c0_115] : memref<16x32x256xf32, #tpu.memory_space<vmem>>, vector<1x32x256xf32>
    %265 = vector.shape_cast %264 : vector<1x32x256xf32> to vector<32x256xf32>
    %266 = vector.extract_strided_slice %213 {offsets = [6, 0], sizes = [1, 32], strides = [1, 1]} : vector<32x32xf32> to vector<1x32xf32>
    %cst_116 = arith.constant dense<0.000000e+00> : vector<1x256xf32>
    %267 = tpu.matmul %266, %265, %cst_116 {dimension_numbers = #tpu.dot_dimension_numbers<[1], [0], [0], [1], [0, 0, 1, 1], [], []>} : vector<1x32xf32>, vector<32x256xf32>, vector<1x256xf32> -> vector<1x256xf32>
    %268 = arith.addf %260, %267 : vector<1x256xf32>
    %269 = vector.extract_strided_slice %213 {offsets = [22, 0], sizes = [1, 32], strides = [1, 1]} : vector<32x32xf32> to vector<1x32xf32>
    %cst_117 = arith.constant dense<0.000000e+00> : vector<1x256xf32>
    %270 = tpu.matmul %269, %265, %cst_117 {dimension_numbers = #tpu.dot_dimension_numbers<[1], [0], [0], [1], [0, 0, 1, 1], [], []>} : vector<1x32xf32>, vector<32x256xf32>, vector<1x256xf32> -> vector<1x256xf32>
    %271 = arith.addf %263, %270 : vector<1x256xf32>
    %c7 = arith.constant 7 : index
    %c0_118 = arith.constant 0 : index
    %c0_119 = arith.constant 0 : index
    %272 = vector.load %arg8[%c7, %c0_118, %c0_119] : memref<16x32x256xf32, #tpu.memory_space<vmem>>, vector<1x32x256xf32>
    %273 = vector.shape_cast %272 : vector<1x32x256xf32> to vector<32x256xf32>
    %274 = vector.extract_strided_slice %213 {offsets = [7, 0], sizes = [1, 32], strides = [1, 1]} : vector<32x32xf32> to vector<1x32xf32>
    %cst_120 = arith.constant dense<0.000000e+00> : vector<1x256xf32>
    %275 = tpu.matmul %274, %273, %cst_120 {dimension_numbers = #tpu.dot_dimension_numbers<[1], [0], [0], [1], [0, 0, 1, 1], [], []>} : vector<1x32xf32>, vector<32x256xf32>, vector<1x256xf32> -> vector<1x256xf32>
    %276 = arith.addf %268, %275 : vector<1x256xf32>
    %277 = vector.extract_strided_slice %213 {offsets = [23, 0], sizes = [1, 32], strides = [1, 1]} : vector<32x32xf32> to vector<1x32xf32>
    %cst_121 = arith.constant dense<0.000000e+00> : vector<1x256xf32>
    %278 = tpu.matmul %277, %273, %cst_121 {dimension_numbers = #tpu.dot_dimension_numbers<[1], [0], [0], [1], [0, 0, 1, 1], [], []>} : vector<1x32xf32>, vector<32x256xf32>, vector<1x256xf32> -> vector<1x256xf32>
    %279 = arith.addf %271, %278 : vector<1x256xf32>
    %c8 = arith.constant 8 : index
    %c0_122 = arith.constant 0 : index
    %c0_123 = arith.constant 0 : index
    %280 = vector.load %arg8[%c8, %c0_122, %c0_123] : memref<16x32x256xf32, #tpu.memory_space<vmem>>, vector<1x32x256xf32>
    %281 = vector.shape_cast %280 : vector<1x32x256xf32> to vector<32x256xf32>
    %282 = vector.extract_strided_slice %213 {offsets = [8, 0], sizes = [1, 32], strides = [1, 1]} : vector<32x32xf32> to vector<1x32xf32>
    %cst_124 = arith.constant dense<0.000000e+00> : vector<1x256xf32>
    %283 = tpu.matmul %282, %281, %cst_124 {dimension_numbers = #tpu.dot_dimension_numbers<[1], [0], [0], [1], [0, 0, 1, 1], [], []>} : vector<1x32xf32>, vector<32x256xf32>, vector<1x256xf32> -> vector<1x256xf32>
    %284 = arith.addf %276, %283 : vector<1x256xf32>
    %285 = vector.extract_strided_slice %213 {offsets = [24, 0], sizes = [1, 32], strides = [1, 1]} : vector<32x32xf32> to vector<1x32xf32>
    %cst_125 = arith.constant dense<0.000000e+00> : vector<1x256xf32>
    %286 = tpu.matmul %285, %281, %cst_125 {dimension_numbers = #tpu.dot_dimension_numbers<[1], [0], [0], [1], [0, 0, 1, 1], [], []>} : vector<1x32xf32>, vector<32x256xf32>, vector<1x256xf32> -> vector<1x256xf32>
    %287 = arith.addf %279, %286 : vector<1x256xf32>
    %c9 = arith.constant 9 : index
    %c0_126 = arith.constant 0 : index
    %c0_127 = arith.constant 0 : index
    %288 = vector.load %arg8[%c9, %c0_126, %c0_127] : memref<16x32x256xf32, #tpu.memory_space<vmem>>, vector<1x32x256xf32>
    %289 = vector.shape_cast %288 : vector<1x32x256xf32> to vector<32x256xf32>
    %290 = vector.extract_strided_slice %213 {offsets = [9, 0], sizes = [1, 32], strides = [1, 1]} : vector<32x32xf32> to vector<1x32xf32>
    %cst_128 = arith.constant dense<0.000000e+00> : vector<1x256xf32>
    %291 = tpu.matmul %290, %289, %cst_128 {dimension_numbers = #tpu.dot_dimension_numbers<[1], [0], [0], [1], [0, 0, 1, 1], [], []>} : vector<1x32xf32>, vector<32x256xf32>, vector<1x256xf32> -> vector<1x256xf32>
    %292 = arith.addf %284, %291 : vector<1x256xf32>
    %293 = vector.extract_strided_slice %213 {offsets = [25, 0], sizes = [1, 32], strides = [1, 1]} : vector<32x32xf32> to vector<1x32xf32>
    %cst_129 = arith.constant dense<0.000000e+00> : vector<1x256xf32>
    %294 = tpu.matmul %293, %289, %cst_129 {dimension_numbers = #tpu.dot_dimension_numbers<[1], [0], [0], [1], [0, 0, 1, 1], [], []>} : vector<1x32xf32>, vector<32x256xf32>, vector<1x256xf32> -> vector<1x256xf32>
    %295 = arith.addf %287, %294 : vector<1x256xf32>
    %c10 = arith.constant 10 : index
    %c0_130 = arith.constant 0 : index
    %c0_131 = arith.constant 0 : index
    %296 = vector.load %arg8[%c10, %c0_130, %c0_131] : memref<16x32x256xf32, #tpu.memory_space<vmem>>, vector<1x32x256xf32>
    %297 = vector.shape_cast %296 : vector<1x32x256xf32> to vector<32x256xf32>
    %298 = vector.extract_strided_slice %213 {offsets = [10, 0], sizes = [1, 32], strides = [1, 1]} : vector<32x32xf32> to vector<1x32xf32>
    %cst_132 = arith.constant dense<0.000000e+00> : vector<1x256xf32>
    %299 = tpu.matmul %298, %297, %cst_132 {dimension_numbers = #tpu.dot_dimension_numbers<[1], [0], [0], [1], [0, 0, 1, 1], [], []>} : vector<1x32xf32>, vector<32x256xf32>, vector<1x256xf32> -> vector<1x256xf32>
    %300 = arith.addf %292, %299 : vector<1x256xf32>
    %301 = vector.extract_strided_slice %213 {offsets = [26, 0], sizes = [1, 32], strides = [1, 1]} : vector<32x32xf32> to vector<1x32xf32>
    %cst_133 = arith.constant dense<0.000000e+00> : vector<1x256xf32>
    %302 = tpu.matmul %301, %297, %cst_133 {dimension_numbers = #tpu.dot_dimension_numbers<[1], [0], [0], [1], [0, 0, 1, 1], [], []>} : vector<1x32xf32>, vector<32x256xf32>, vector<1x256xf32> -> vector<1x256xf32>
    %303 = arith.addf %295, %302 : vector<1x256xf32>
    %c11 = arith.constant 11 : index
    %c0_134 = arith.constant 0 : index
    %c0_135 = arith.constant 0 : index
    %304 = vector.load %arg8[%c11, %c0_134, %c0_135] : memref<16x32x256xf32, #tpu.memory_space<vmem>>, vector<1x32x256xf32>
    %305 = vector.shape_cast %304 : vector<1x32x256xf32> to vector<32x256xf32>
    %306 = vector.extract_strided_slice %213 {offsets = [11, 0], sizes = [1, 32], strides = [1, 1]} : vector<32x32xf32> to vector<1x32xf32>
    %cst_136 = arith.constant dense<0.000000e+00> : vector<1x256xf32>
    %307 = tpu.matmul %306, %305, %cst_136 {dimension_numbers = #tpu.dot_dimension_numbers<[1], [0], [0], [1], [0, 0, 1, 1], [], []>} : vector<1x32xf32>, vector<32x256xf32>, vector<1x256xf32> -> vector<1x256xf32>
    %308 = arith.addf %300, %307 : vector<1x256xf32>
    %309 = vector.extract_strided_slice %213 {offsets = [27, 0], sizes = [1, 32], strides = [1, 1]} : vector<32x32xf32> to vector<1x32xf32>
    %cst_137 = arith.constant dense<0.000000e+00> : vector<1x256xf32>
    %310 = tpu.matmul %309, %305, %cst_137 {dimension_numbers = #tpu.dot_dimension_numbers<[1], [0], [0], [1], [0, 0, 1, 1], [], []>} : vector<1x32xf32>, vector<32x256xf32>, vector<1x256xf32> -> vector<1x256xf32>
    %311 = arith.addf %303, %310 : vector<1x256xf32>
    %c12 = arith.constant 12 : index
    %c0_138 = arith.constant 0 : index
    %c0_139 = arith.constant 0 : index
    %312 = vector.load %arg8[%c12, %c0_138, %c0_139] : memref<16x32x256xf32, #tpu.memory_space<vmem>>, vector<1x32x256xf32>
    %313 = vector.shape_cast %312 : vector<1x32x256xf32> to vector<32x256xf32>
    %314 = vector.extract_strided_slice %213 {offsets = [12, 0], sizes = [1, 32], strides = [1, 1]} : vector<32x32xf32> to vector<1x32xf32>
    %cst_140 = arith.constant dense<0.000000e+00> : vector<1x256xf32>
    %315 = tpu.matmul %314, %313, %cst_140 {dimension_numbers = #tpu.dot_dimension_numbers<[1], [0], [0], [1], [0, 0, 1, 1], [], []>} : vector<1x32xf32>, vector<32x256xf32>, vector<1x256xf32> -> vector<1x256xf32>
    %316 = arith.addf %308, %315 : vector<1x256xf32>
    %317 = vector.extract_strided_slice %213 {offsets = [28, 0], sizes = [1, 32], strides = [1, 1]} : vector<32x32xf32> to vector<1x32xf32>
    %cst_141 = arith.constant dense<0.000000e+00> : vector<1x256xf32>
    %318 = tpu.matmul %317, %313, %cst_141 {dimension_numbers = #tpu.dot_dimension_numbers<[1], [0], [0], [1], [0, 0, 1, 1], [], []>} : vector<1x32xf32>, vector<32x256xf32>, vector<1x256xf32> -> vector<1x256xf32>
    %319 = arith.addf %311, %318 : vector<1x256xf32>
    %c13 = arith.constant 13 : index
    %c0_142 = arith.constant 0 : index
    %c0_143 = arith.constant 0 : index
    %320 = vector.load %arg8[%c13, %c0_142, %c0_143] : memref<16x32x256xf32, #tpu.memory_space<vmem>>, vector<1x32x256xf32>
    %321 = vector.shape_cast %320 : vector<1x32x256xf32> to vector<32x256xf32>
    %322 = vector.extract_strided_slice %213 {offsets = [13, 0], sizes = [1, 32], strides = [1, 1]} : vector<32x32xf32> to vector<1x32xf32>
    %cst_144 = arith.constant dense<0.000000e+00> : vector<1x256xf32>
    %323 = tpu.matmul %322, %321, %cst_144 {dimension_numbers = #tpu.dot_dimension_numbers<[1], [0], [0], [1], [0, 0, 1, 1], [], []>} : vector<1x32xf32>, vector<32x256xf32>, vector<1x256xf32> -> vector<1x256xf32>
    %324 = arith.addf %316, %323 : vector<1x256xf32>
    %325 = vector.extract_strided_slice %213 {offsets = [29, 0], sizes = [1, 32], strides = [1, 1]} : vector<32x32xf32> to vector<1x32xf32>
    %cst_145 = arith.constant dense<0.000000e+00> : vector<1x256xf32>
    %326 = tpu.matmul %325, %321, %cst_145 {dimension_numbers = #tpu.dot_dimension_numbers<[1], [0], [0], [1], [0, 0, 1, 1], [], []>} : vector<1x32xf32>, vector<32x256xf32>, vector<1x256xf32> -> vector<1x256xf32>
    %327 = arith.addf %319, %326 : vector<1x256xf32>
    %c14 = arith.constant 14 : index
    %c0_146 = arith.constant 0 : index
    %c0_147 = arith.constant 0 : index
    %328 = vector.load %arg8[%c14, %c0_146, %c0_147] : memref<16x32x256xf32, #tpu.memory_space<vmem>>, vector<1x32x256xf32>
    %329 = vector.shape_cast %328 : vector<1x32x256xf32> to vector<32x256xf32>
    %330 = vector.extract_strided_slice %213 {offsets = [14, 0], sizes = [1, 32], strides = [1, 1]} : vector<32x32xf32> to vector<1x32xf32>
    %cst_148 = arith.constant dense<0.000000e+00> : vector<1x256xf32>
    %331 = tpu.matmul %330, %329, %cst_148 {dimension_numbers = #tpu.dot_dimension_numbers<[1], [0], [0], [1], [0, 0, 1, 1], [], []>} : vector<1x32xf32>, vector<32x256xf32>, vector<1x256xf32> -> vector<1x256xf32>
    %332 = arith.addf %324, %331 : vector<1x256xf32>
    %333 = vector.extract_strided_slice %213 {offsets = [30, 0], sizes = [1, 32], strides = [1, 1]} : vector<32x32xf32> to vector<1x32xf32>
    %cst_149 = arith.constant dense<0.000000e+00> : vector<1x256xf32>
    %334 = tpu.matmul %333, %329, %cst_149 {dimension_numbers = #tpu.dot_dimension_numbers<[1], [0], [0], [1], [0, 0, 1, 1], [], []>} : vector<1x32xf32>, vector<32x256xf32>, vector<1x256xf32> -> vector<1x256xf32>
    %335 = arith.addf %327, %334 : vector<1x256xf32>
    %c15 = arith.constant 15 : index
    %c0_150 = arith.constant 0 : index
    %c0_151 = arith.constant 0 : index
    %336 = vector.load %arg8[%c15, %c0_150, %c0_151] : memref<16x32x256xf32, #tpu.memory_space<vmem>>, vector<1x32x256xf32>
    %337 = vector.shape_cast %336 : vector<1x32x256xf32> to vector<32x256xf32>
    %338 = vector.extract_strided_slice %213 {offsets = [15, 0], sizes = [1, 32], strides = [1, 1]} : vector<32x32xf32> to vector<1x32xf32>
    %cst_152 = arith.constant dense<0.000000e+00> : vector<1x256xf32>
    %339 = tpu.matmul %338, %337, %cst_152 {dimension_numbers = #tpu.dot_dimension_numbers<[1], [0], [0], [1], [0, 0, 1, 1], [], []>} : vector<1x32xf32>, vector<32x256xf32>, vector<1x256xf32> -> vector<1x256xf32>
    %340 = arith.addf %332, %339 : vector<1x256xf32>
    %341 = vector.extract_strided_slice %213 {offsets = [31, 0], sizes = [1, 32], strides = [1, 1]} : vector<32x32xf32> to vector<1x32xf32>
    %cst_153 = arith.constant dense<0.000000e+00> : vector<1x256xf32>
    %342 = tpu.matmul %341, %337, %cst_153 {dimension_numbers = #tpu.dot_dimension_numbers<[1], [0], [0], [1], [0, 0, 1, 1], [], []>} : vector<1x32xf32>, vector<32x256xf32>, vector<1x256xf32> -> vector<1x256xf32>
    %343 = arith.addf %335, %342 : vector<1x256xf32>
    %344 = tpu.concatenate %340, %343 in 0 : vector<1x256xf32>, vector<1x256xf32> -> vector<2x256xf32>
    %cst_154 = arith.constant 0.000000e+00 : f32
    %345 = vector.broadcast %cst_154 : f32 to vector<2x256xf32>
    %346 = arith.maximumf %344, %345 : vector<2x256xf32>
    %cst_155 = arith.constant dense<0.000000e+00> : vector<2xf32>
    %347 = vector.multi_reduction <add>, %346, %cst_155 [1] : vector<2x256xf32> to vector<2xf32>
    %348 = vector.shape_cast %347 : vector<2xf32> to vector<2x1xf32>
    %cst_156 = arith.constant 2.560000e+02 : f32
    %349 = vector.broadcast %cst_156 : f32 to vector<2x1xf32>
    %350 = arith.divf %348, %349 : vector<2x1xf32>
    %351 = vector.broadcast %350 : vector<2x1xf32> to vector<2x256xf32>
    %352 = arith.subf %346, %351 : vector<2x256xf32>
    %353 = arith.mulf %352, %352 : vector<2x256xf32>
    %cst_157 = arith.constant dense<0.000000e+00> : vector<2xf32>
    %354 = vector.multi_reduction <add>, %353, %cst_157 [1] : vector<2x256xf32> to vector<2xf32>
    %355 = vector.shape_cast %354 : vector<2xf32> to vector<2x1xf32>
    %cst_158 = arith.constant 2.560000e+02 : f32
    %356 = vector.broadcast %cst_158 : f32 to vector<2x1xf32>
    %357 = arith.divf %355, %356 : vector<2x1xf32>
    %358 = vector.broadcast %350 : vector<2x1xf32> to vector<2x256xf32>
    %359 = arith.subf %346, %358 : vector<2x256xf32>
    %cst_159 = arith.constant 9.99999996E-13 : f32
    %360 = vector.broadcast %cst_159 : f32 to vector<2x1xf32>
    %361 = arith.addf %357, %360 : vector<2x1xf32>
    %362 = math.rsqrt %361 : vector<2x1xf32>
    %363 = vector.broadcast %362 : vector<2x1xf32> to vector<2x256xf32>
    %364 = arith.mulf %359, %363 : vector<2x256xf32>
    %c0_160 = arith.constant 0 : index
    %c0_161 = arith.constant 0 : index
    %365 = vector.load %arg10[%c0_160, %c0_161] : memref<256x128xf32, #tpu.memory_space<vmem>>, vector<256x128xf32>
    %cst_162 = arith.constant dense<0.000000e+00> : vector<2x128xf32>
    %366 = tpu.matmul %364, %365, %cst_162 {dimension_numbers = #tpu.dot_dimension_numbers<[1], [0], [0], [1], [0, 0, 1, 1], [], []>} : vector<2x256xf32>, vector<256x128xf32>, vector<2x128xf32> -> vector<2x128xf32>
    %c0_163 = arith.constant 0 : index
    %c0_164 = arith.constant 0 : index
    %367 = vector.load %arg11[%c0_163, %c0_164] : memref<1x128xf32, #tpu.memory_space<vmem>>, vector<1x128xf32>
    %368 = vector.broadcast %367 : vector<1x128xf32> to vector<2x128xf32>
    %369 = arith.addf %366, %368 : vector<2x128xf32>
    %c0_165 = arith.constant 0 : index
    %c0_166 = arith.constant 0 : index
    %370 = vector.load %arg12[%c0_165, %c0_166] : memref<2x128xf32, #tpu.memory_space<vmem>>, vector<2x128xf32>
    tpu.vector_store %arg12[%c0_165, %c0_166], %369 {strides = array<i32>} : memref<2x128xf32, #tpu.memory_space<vmem>>, vector<2x128xf32>,
    return
  }
  func.func @transform_0(%arg0: i32) -> (i32, i32) {
    %c0_i32 = arith.constant 0 : i32
    %c0_i32_0 = arith.constant 0 : i32
    %c0_i32_1 = arith.constant 0 : i32
    return %c0_i32, %c0_i32_0 : i32, i32
  }
  func.func @transform_1(%arg0: i32) -> (i32, i32) {
    %c0_i32 = arith.constant 0 : i32
    %c0_i32_0 = arith.constant 0 : i32
    %c0_i32_1 = arith.constant 0 : i32
    return %c0_i32, %c0_i32_0 : i32, i32
  }
  func.func @transform_2(%arg0: i32) -> (i32, i32) {
    %c0_i32 = arith.constant 0 : i32
    %c0_i32_0 = arith.constant 0 : i32
    %c0_i32_1 = arith.constant 0 : i32
    return %c0_i32, %c0_i32_0 : i32, i32
  }
  func.func @transform_3(%arg0: i32) -> (i32, i32, i32) {
    %c0_i32 = arith.constant 0 : i32
    %c0_i32_0 = arith.constant 0 : i32
    %c0_i32_1 = arith.constant 0 : i32
    %c0_i32_2 = arith.constant 0 : i32
    return %c0_i32, %c0_i32_0, %c0_i32_1 : i32, i32, i32
  }
  func.func @transform_4(%arg0: i32) -> (i32, i32, i32) {
    %c0_i32 = arith.constant 0 : i32
    %c0_i32_0 = arith.constant 0 : i32
    %c0_i32_1 = arith.constant 0 : i32
    %c0_i32_2 = arith.constant 0 : i32
    return %c0_i32, %c0_i32_0, %c0_i32_1 : i32, i32, i32
  }
  func.func @transform_5(%arg0: i32) -> (i32, i32, i32) {
    %c0_i32 = arith.constant 0 : i32
    %c0_i32_0 = arith.constant 0 : i32
    %c0_i32_1 = arith.constant 0 : i32
    %c0_i32_2 = arith.constant 0 : i32
    return %c0_i32, %c0_i32_0, %c0_i32_1 : i32, i32, i32
  }
  func.func @transform_6(%arg0: i32) -> (i32, i32) {
    %c0_i32 = arith.constant 0 : i32
    %c0_i32_0 = arith.constant 0 : i32
    %c0_i32_1 = arith.constant 0 : i32
    return %c0_i32, %c0_i32_0 : i32, i32
  }
  func.func @transform_7(%arg0: i32) -> (i32, i32, i32) {
    %c0_i32 = arith.constant 0 : i32
    %c0_i32_0 = arith.constant 0 : i32
    %c0_i32_1 = arith.constant 0 : i32
    %c0_i32_2 = arith.constant 0 : i32
    return %c0_i32, %c0_i32_0, %c0_i32_1 : i32, i32, i32
  }
  func.func @transform_8(%arg0: i32) -> (i32, i32) {
    %c0_i32 = arith.constant 0 : i32
    %c0_i32_0 = arith.constant 0 : i32
    %c0_i32_1 = arith.constant 0 : i32
    return %c0_i32, %c0_i32_0 : i32, i32
  }
  func.func @transform_9(%arg0: i32) -> (i32, i32) {
    %c0_i32 = arith.constant 0 : i32
    %c0_i32_0 = arith.constant 0 : i32
    %c0_i32_1 = arith.constant 0 : i32
    return %c0_i32, %c0_i32_0 : i32, i32
  }
  func.func @transform_10(%arg0: i32) -> (i32, i32) {
    %c0_i32 = arith.constant 0 : i32
    %c0_i32_0 = arith.constant 0 : i32
    %c0_i32_1 = arith.constant 0 : i32
    return %c0_i32, %c0_i32_0 : i32, i32
  }
  func.func @transform_11(%arg0: i32) -> (i32, i32) {
    %c0_i32 = arith.constant 0 : i32
    %c0_i32_0 = arith.constant 0 : i32
    %c0_i32_1 = arith.constant 0 : i32
    return %c0_i32, %c0_i32_0 : i32, i32
  }
}

</mosaic_0001>

<llo_original>
// kernel: bytenet_forward.1
$region0: #{bytenet_forward.1}
  #allocation0 [shape = 'u32[]', space=smem, size = 0x4, offset = 0x4, fixed_abs, tag = 'smem constant byte address 0x4 - core index']
  #allocation1 [shape = 'u32[144,128]{1,0:T(1,128)}', space=vmem, size = 0x12000, scoped, tag = 'internal scratch']
  %s0 = inlined_call_operand.vmem [shape: f32[32,8], index: 0, kind: input, shape index: {}]
  %s1 = inlined_call_operand.vmem [shape: f32[8,32], index: 1, kind: input, shape index: {}]
  %s2 = inlined_call_operand.vmem [shape: f32[1,32], index: 2, kind: input, shape index: {}]
  %s3 = inlined_call_operand.vmem [shape: f32[4,32,16], index: 3, kind: input, shape index: {}]
  %s4 = inlined_call_operand.vmem [shape: f32[4,48,16], index: 4, kind: input, shape index: {}]
  %s5 = inlined_call_operand.vmem [shape: f32[4,16,32], index: 5, kind: input, shape index: {}]
  %s6 = inlined_call_operand.vmem [shape: f32[4,128], index: 6, kind: input, shape index: {}]
  %s7 = inlined_call_operand.vmem [shape: f32[16,32,256], index: 7, kind: input, shape index: {}]
  %s8 = inlined_call_operand.vmem [shape: f32[1,256], index: 8, kind: input, shape index: {}]
  %s9 = inlined_call_operand.vmem [shape: f32[256,128], index: 9, kind: input, shape index: {}]
  %s10 = inlined_call_operand.vmem [shape: f32[1,128], index: 10, kind: input, shape index: {}]
  %s11 = inlined_call_operand.vmem [shape: f32[2,128], index: 11, kind: output, shape index: {}]
  %s12 = sld [smem:[#allocation0]]
  $region54: #{bytenet_forward.1} parent=0
    _
  %s14 = ssub.s32 1, %s12
  %s15 = scalar_select 0, %s14, %s12
  // Predicated region
  $region2: #{bytenet_forward.1} parent=0 // pred_check
    _
  $region3: #{bytenet_forward.1} parent=0 // pred_check_branch
    %17 = sbr.rel (0) target = $region5
  $region4: #{bytenet_forward.1} parent=0 // pred_region
    _
  $region5: #{bytenet_forward.1} parent=0 // pred_fallthru
    _
  // Predicated region
  $region6: #{bytenet_forward.1} parent=0 // pred_check
    _
  $region7: #{bytenet_forward.1} parent=0 // pred_check_branch
    %19 = sbr.rel (0) target = $region9
  $region8: #{bytenet_forward.1} parent=0 // pred_region
    _
  $region9: #{bytenet_forward.1} parent=0 // pred_fallthru
    _
  // Predicated region
  $region10: #{bytenet_forward.1} parent=0 // pred_check
    _
  $region11: #{bytenet_forward.1} parent=0 // pred_check_branch
    %21 = sbr.rel (0) target = $region13
  $region12: #{bytenet_forward.1} parent=0 // pred_region
    _
  $region13: #{bytenet_forward.1} parent=0 // pred_fallthru
    _
  // Predicated region
  $region14: #{bytenet_forward.1} parent=0 // pred_check
    _
  $region15: #{bytenet_forward.1} parent=0 // pred_check_branch
    %23 = sbr.rel (0) target = $region17
  $region16: #{bytenet_forward.1} parent=0 // pred_region
    _
  $region17: #{bytenet_forward.1} parent=0 // pred_fallthru
    _
  // Predicated region
  $region18: #{bytenet_forward.1} parent=0 // pred_check
    _
  $region19: #{bytenet_forward.1} parent=0 // pred_check_branch
    %25 = sbr.rel (0) target = $region21
  $region20: #{bytenet_forward.1} parent=0 // pred_region
    _
  $region21: #{bytenet_forward.1} parent=0 // pred_fallthru
    _
  // Predicated region
  $region22: #{bytenet_forward.1} parent=0 // pred_check
    _
  $region23: #{bytenet_forward.1} parent=0 // pred_check_branch
    %27 = sbr.rel (0) target = $region25
  $region24: #{bytenet_forward.1} parent=0 // pred_region
    _
  $region25: #{bytenet_forward.1} parent=0 // pred_fallthru
    _
  // Predicated region
  $region26: #{bytenet_forward.1} parent=0 // pred_check
    _
  $region27: #{bytenet_forward.1} parent=0 // pred_check_branch
    %29 = sbr.rel (0) target = $region29
  $region28: #{bytenet_forward.1} parent=0 // pred_region
    _
  $region29: #{bytenet_forward.1} parent=0 // pred_fallthru
    _
  // Predicated region
  $region30: #{bytenet_forward.1} parent=0 // pred_check
    _
  $region31: #{bytenet_forward.1} parent=0 // pred_check_branch
    %31 = sbr.rel (0) target = $region33
  $region32: #{bytenet_forward.1} parent=0 // pred_region
    _
  $region33: #{bytenet_forward.1} parent=0 // pred_fallthru
    _
  // Predicated region
  $region34: #{bytenet_forward.1} parent=0 // pred_check
    _
  $region35: #{bytenet_forward.1} parent=0 // pred_check_branch
    %33 = sbr.rel (0) target = $region37
  $region36: #{bytenet_forward.1} parent=0 // pred_region
    _
  $region37: #{bytenet_forward.1} parent=0 // pred_fallthru
    _
  // Predicated region
  $region38: #{bytenet_forward.1} parent=0 // pred_check
    _
  $region39: #{bytenet_forward.1} parent=0 // pred_check_branch
    %35 = sbr.rel (0) target = $region41
  $region40: #{bytenet_forward.1} parent=0 // pred_region
    _
  $region41: #{bytenet_forward.1} parent=0 // pred_fallthru
    _
  // Predicated region
  $region42: #{bytenet_forward.1} parent=0 // pred_check
    _
  $region43: #{bytenet_forward.1} parent=0 // pred_check_branch
    %37 = sbr.rel (0) target = $region45
  $region44: #{bytenet_forward.1} parent=0 // pred_region
    _
  $region45: #{bytenet_forward.1} parent=0 // pred_fallthru
    _
  %v38 = vld [vmem:[%s0] sm:$0xff]
  %v39 = vld [vmem:[%s0 + $0x8] sm:$0xff]
  %v40 = vld [vmem:[%s0 + $0x10] sm:$0xff]
  %v41 = vld [vmem:[%s0 + $0x18] sm:$0xff]
  %vm42 = vcmask 64512
  %v43 = vsel %vm42, %v38, 0.0
  %44 = vadd.xlane.f32.xlu0 %v43
  %v45 = vpop.xlane.xlu0 %44
  %v46 = vsel %vm42, %v39, 0.0
  %47 = vadd.xlane.f32.xlu0 %v46
  %v48 = vpop.xlane.xlu0 %47
  %v49 = vsel %vm42, %v40, 0.0
  %50 = vadd.xlane.f32.xlu0 %v49
  %v51 = vpop.xlane.xlu0 %50
  %v52 = vsel %vm42, %v41, 0.0
  %53 = vadd.xlane.f32.xlu0 %v52
  %v54 = vpop.xlane.xlu0 %53
  %v55 = vrcp.pop 8.0
  %v56 = vmul.f32 %v45, %v55
  %v57 = vmul.f32 %v48, %v55
  %v58 = vmul.f32 %v51, %v55
  %v59 = vmul.f32 %v54, %v55
  %v60 = vsub.f32 %v38, %v56
  %v61 = vsub.f32 %v39, %v57
  %v62 = vsub.f32 %v40, %v58
  %v63 = vsub.f32 %v41, %v59
  %v64 = vmul.f32 %v60, %v60
  %v65 = vmul.f32 %v61, %v61
  %v66 = vmul.f32 %v62, %v62
  %v67 = vmul.f32 %v63, %v63
  %v68 = vsel %vm42, %v64, 0.0
  %69 = vadd.xlane.f32.xlu0 %v68
  %v70 = vpop.xlane.xlu0 %69
  %v71 = vsel %vm42, %v65, 0.0
  %72 = vadd.xlane.f32.xlu0 %v71
  %v73 = vpop.xlane.xlu0 %72
  %v74 = vsel %vm42, %v66, 0.0
  %75 = vadd.xlane.f32.xlu0 %v74
  %v76 = vpop.xlane.xlu0 %75
  %v77 = vsel %vm42, %v67, 0.0
  %78 = vadd.xlane.f32.xlu0 %v77
  %v79 = vpop.xlane.xlu0 %78
  %v80 = vmul.f32 %v70, %v55
  %v81 = vmul.f32 %v73, %v55
  %v82 = vmul.f32 %v76, %v55
  %v83 = vmul.f32 %v79, %v55
  %v84 = vadd.f32 %v80, 1e-12
  %v85 = vadd.f32 %v81, 1e-12
  %v86 = vadd.f32 %v82, 1e-12
  %v87 = vadd.f32 %v83, 1e-12
  %v88 = vrsqrt.pop %v84
  %v89 = vrsqrt.pop %v85
  %v90 = vrsqrt.pop %v86
  %v91 = vrsqrt.pop %v87
  %v92 = vmul.f32 %v60, %v88
  %v93 = vmul.f32 %v61, %v89
  %v94 = vmul.f32 %v62, %v90
  %v95 = vmul.f32 %v63, %v91
  %v96 = vld [vmem:[%s1] sm:$0xff]
  %v97 = vld [vmem:[%s2] sm:$0x1]
  %v99 = vlaneseq
  %v100 = vshrl.u32 %v99, 7
  %v101 = vsub.s32 0, %v100
  %v102 = vrot.slane %v97, %v101
  %v105 = vsel %vm42, %v92, 0
  %v108 = vsel %vm42, %v93, 0
  %v111 = vsel %vm42, %v94, 0
  %v114 = vsel %vm42, %v95, 0
  %116 = vmatprep.subr.mxu0 0.0
  %117 = vmatpush1.msra.mxu0 %v96
  %118 = vmatprep.subr.mxu0 0.0
  %119 = vmatpush1.msra.mxu0 0.0
  %120 = vmatprep.subr.mxu0 0.0
  %121 = vmatpush1.msra.mxu0 0.0
  %122 = vmatprep.subr.mxu0 0.0
  %123 = vmatpush1.msra.mxu0 0.0
  %124 = vmatprep.subr.mxu0 0.0
  %125 = vmatpush1.msra.mxu0 0.0
  %126 = vmatprep.subr.mxu0 0.0
  %127 = vmatpush1.msra.mxu0 0.0
  %128 = vmatprep.subr.mxu0 0.0
  %129 = vmatpush1.msra.mxu0 0.0
  %130 = vmatprep.subr.mxu0 0.0
  %131 = vmatpush1.msra.mxu0 0.0
  %132 = vmatprep.subr.mxu0 0.0
  %133 = vmatpush1.msra.mxu0 0.0
  %134 = vmatprep.subr.mxu0 0.0
  %135 = vmatpush1.msra.mxu0 0.0
  %136 = vmatprep.subr.mxu0 0.0
  %137 = vmatpush1.msra.mxu0 0.0
  %138 = vmatprep.subr.mxu0 0.0
  %139 = vmatpush1.msra.mxu0 0.0
  %140 = vmatprep.subr.mxu0 0.0
  %141 = vmatpush1.msra.mxu0 0.0
  %142 = vmatprep.subr.mxu0 0.0
  %143 = vmatpush1.msra.mxu0 0.0
  %144 = vmatprep.subr.mxu0 0.0
  %145 = vmatpush1.msra.mxu0 0.0
  %146 = vmatprep.subr.mxu0 0.0
  %147 = vmatpush1.msra.mxu0 0.0
  %148 = vmatprep.subr.mxu0 0.0
  %149 = vmatpush1.msra.mxu0 0.0
  %150 = vmatprep.subr.mxu0 0.0
  %151 = vmatpush1.msra.mxu0 0.0
  %152 = vmatprep.subr.mxu0 0.0
  %153 = vmatpush1.msra.mxu0 0.0
  %154 = vmatprep.subr.mxu0 0.0
  %155 = vmatpush1.msra.mxu0 0.0
  %156 = vmatprep.subr.mxu0 0.0
  %157 = vmatpush1.msra.mxu0 0.0
  %158 = vmatprep.subr.mxu0 0.0
  %159 = vmatpush1.msra.mxu0 0.0
  %160 = vmatprep.subr.mxu0 0.0
  %161 = vmatpush1.msra.mxu0 0.0
  %162 = vmatprep.subr.mxu0 0.0
  %163 = vmatpush1.msra.mxu0 0.0
  %164 = vmatprep.subr.mxu0 0.0
  %165 = vmatpush1.msra.mxu0 0.0
  %166 = vmatprep.subr.mxu0 0.0
  %167 = vmatpush1.msra.mxu0 0.0
  %168 = vmatprep.subr.mxu0 0.0
  %169 = vmatpush1.msra.mxu0 0.0
  %170 = vmatprep.subr.mxu0 0.0
  %171 = vmatpush1.msra.mxu0 0.0
  %172 = vmatprep.subr.mxu0 0.0
  %173 = vmatpush1.msra.mxu0 0.0
  %174 = vmatprep.subr.mxu0 0.0
  %175 = vmatpush1.msra.mxu0 0.0
  %176 = vmatprep.subr.mxu0 0.0
  %177 = vmatpush1.msra.mxu0 0.0
  %178 = vmatprep.subr.mxu0 0.0
  %179 = vmatpush1.msra.mxu0 0.0
  %180 = vmatprep.mubr.f32.mxu0 0.0
  %181 = vmatmul.mubr.f32.gmra.mrb[0].mxu0 %v105
  %v182 = vpop.f32.mrb[0].mxu0
  %v183 = vadd.f32 %v102, %v182
  %v184 = vpop.f32.mrb[0].mxu0
  %185 = vmatprep.mubr.f32.mxu0 0.0
  %186 = vmatmul.mubr.f32.gmra.mrb[0].mxu0 %v108
  %v187 = vpop.f32.mrb[0].mxu0
  %v188 = vadd.f32 %v102, %v187
  %v189 = vpop.f32.mrb[0].mxu0
  %190 = vmatprep.mubr.f32.mxu0 0.0
  %191 = vmatmul.mubr.f32.gmra.mrb[0].mxu0 %v111
  %v192 = vpop.f32.mrb[0].mxu0
  %v193 = vadd.f32 %v102, %v192
  %v194 = vpop.f32.mrb[0].mxu0
  %195 = vmatprep.mubr.f32.mxu0 0.0
  %196 = vmatmul.mubr.f32.gmra.mrb[0].mxu0 %v114
  %v197 = vpop.f32.mrb[0].mxu0
  %v198 = vadd.f32 %v102, %v197
  %v199 = vpop.f32.mrb[0].mxu0
  %200 = vdwg.mxu0
  %v201 = vlaneseq
  %v202 = vshrl.u32 %v201, 7
  %v203 = vadd.s32 %v202, 8
  %v204 = vld [vmem:[%s6] sm:$0x1]
  %v205 = vlaneseq
  %v206 = vshrl.u32 %v205, 7
  %v207 = vsub.s32 0, %v206
  %v208 = vrot.slane %v204, %v207
  %v209 = vmul.f32 %v183, %v208
  %v210 = vmul.f32 %v188, %v208
  %v211 = vmul.f32 %v193, %v208
  %v212 = vmul.f32 %v198, %v208
  %214 = vrot.lane.b32.xlu0 %v208, 96
  %v215 = vpop.permute.xlu0 %214
  %v217 = vadd.f32 %v209, %v215
  %v218 = vadd.f32 %v210, %v215
  %v219 = vadd.f32 %v211, %v215
  %v220 = vadd.f32 %v212, %v215
  %v221 = vmax.f32 %v217, 0.0
  %v222 = vmax.f32 %v218, 0.0
  %v223 = vmax.f32 %v219, 0.0
  %v224 = vmax.f32 %v220, 0.0
  %v225 = vld [vmem:[%s3] sm:$0xff]
  %v226 = vld [vmem:[%s3 + $0x8] sm:$0xff]
  %v227 = vld [vmem:[%s3 + $0x10] sm:$0xff]
  %v228 = vld [vmem:[%s3 + $0x18] sm:$0xff]
  %229 = vrot.lane.b32.xlu0 %v208, 64
  %v230 = vpop.permute.xlu0 %229
  %vm232 = vcmask 261120
  %v234 = vsel %vm232, %v221, 0
  %v237 = vsel %vm232, %v222, 0
  %v240 = vsel %vm232, %v223, 0
  %v243 = vsel %vm232, %v224, 0
  %245 = vmatprep.subr.mxu0 0.0
  %246 = vmatpush1.msra.mxu0 %v225
  %247 = vmatprep.subr.mxu0 0.0
  %248 = vmatpush1.msra.mxu0 %v226
  %249 = vmatprep.subr.mxu0 0.0
  %250 = vmatpush1.msra.mxu0 %v227
  %251 = vmatprep.subr.mxu0 0.0
  %252 = vmatpush1.msra.mxu0 %v228
  %253 = vmatprep.subr.mxu0 0.0
  %254 = vmatpush1.msra.mxu0 0.0
  %255 = vmatprep.subr.mxu0 0.0
  %256 = vmatpush1.msra.mxu0 0.0
  %257 = vmatprep.subr.mxu0 0.0
  %258 = vmatpush1.msra.mxu0 0.0
  %259 = vmatprep.subr.mxu0 0.0
  %260 = vmatpush1.msra.mxu0 0.0
  %261 = vmatprep.subr.mxu0 0.0
  %262 = vmatpush1.msra.mxu0 0.0
  %263 = vmatprep.subr.mxu0 0.0
  %264 = vmatpush1.msra.mxu0 0.0
  %265 = vmatprep.subr.mxu0 0.0
  %266 = vmatpush1.msra.mxu0 0.0
  %267 = vmatprep.subr.mxu0 0.0
  %268 = vmatpush1.msra.mxu0 0.0
  %269 = vmatprep.subr.mxu0 0.0
  %270 = vmatpush1.msra.mxu0 0.0
  %271 = vmatprep.subr.mxu0 0.0
  %272 = vmatpush1.msra.mxu0 0.0
  %273 = vmatprep.subr.mxu0 0.0
  %274 = vmatpush1.msra.mxu0 0.0
  %275 = vmatprep.subr.mxu0 0.0
  %276 = vmatpush1.msra.mxu0 0.0
  %277 = vmatprep.subr.mxu0 0.0
  %278 = vmatpush1.msra.mxu0 0.0
  %279 = vmatprep.subr.mxu0 0.0
  %280 = vmatpush1.msra.mxu0 0.0
  %281 = vmatprep.subr.mxu0 0.0
  %282 = vmatpush1.msra.mxu0 0.0
  %283 = vmatprep.subr.mxu0 0.0
  %284 = vmatpush1.msra.mxu0 0.0
  %285 = vmatprep.subr.mxu0 0.0
  %286 = vmatpush1.msra.mxu0 0.0
  %287 = vmatprep.subr.mxu0 0.0
  %288 = vmatpush1.msra.mxu0 0.0
  %289 = vmatprep.subr.mxu0 0.0
  %290 = vmatpush1.msra.mxu0 0.0
  %291 = vmatprep.subr.mxu0 0.0
  %292 = vmatpush1.msra.mxu0 0.0
  %293 = vmatprep.subr.mxu0 0.0
  %294 = vmatpush1.msra.mxu0 0.0
  %295 = vmatprep.subr.mxu0 0.0
  %296 = vmatpush1.msra.mxu0 0.0
  %297 = vmatprep.subr.mxu0 0.0
  %298 = vmatpush1.msra.mxu0 0.0
  %299 = vmatprep.subr.mxu0 0.0
  %300 = vmatpush1.msra.mxu0 0.0
  %301 = vmatprep.subr.mxu0 0.0
  %302 = vmatpush1.msra.mxu0 0.0
  %303 = vmatprep.subr.mxu0 0.0
  %304 = vmatpush1.msra.mxu0 0.0
  %305 = vmatprep.subr.mxu0 0.0
  %306 = vmatpush1.msra.mxu0 0.0
  %307 = vmatprep.subr.mxu0 0.0
  %308 = vmatpush1.msra.mxu0 0.0
  %309 = vmatprep.mubr.f32.mxu0 0.0
  %310 = vmatmul.mubr.f32.gmra.mrb[0].mxu0 %v234
  %v311 = vpop.f32.mrb[0].mxu0
  %v312 = vadd.f32 %v230, %v311
  %v313 = vpop.f32.mrb[0].mxu0
  %314 = vmatprep.mubr.f32.mxu0 0.0
  %315 = vmatmul.mubr.f32.gmra.mrb[0].mxu0 %v237
  %v316 = vpop.f32.mrb[0].mxu0
  %v317 = vadd.f32 %v230, %v316
  %v318 = vpop.f32.mrb[0].mxu0
  %319 = vmatprep.mubr.f32.mxu0 0.0
  %320 = vmatmul.mubr.f32.gmra.mrb[0].mxu0 %v240
  %v321 = vpop.f32.mrb[0].mxu0
  %v322 = vadd.f32 %v230, %v321
  %v323 = vpop.f32.mrb[0].mxu0
  %324 = vmatprep.mubr.f32.mxu0 0.0
  %325 = vmatmul.mubr.f32.gmra.mrb[0].mxu0 %v243
  %v326 = vpop.f32.mrb[0].mxu0
  %v327 = vadd.f32 %v230, %v326
  %v328 = vpop.f32.mrb[0].mxu0
  %329 = vdwg.mxu0
  %v330 = vmax.f32 %v312, 0.0
  %v331 = vmax.f32 %v317, 0.0
  %v332 = vmax.f32 %v322, 0.0
  %v333 = vmax.f32 %v327, 0.0
  %vm334 = vcmp.ge.s32.totalorder %v202, 1
  %vm335 = vcmp.ge.s32.totalorder %v203, 1
  %v336 = vsel %vm334, 1, 0
  %v337 = vsel %vm335, 1, 0
  %v338 = vcvt.s32.f32 %v336
  %v339 = vcvt.s32.f32 %v337
  %vm340 = vcmp.lt.s32.totalorder %v202, 15
  %vm341 = vcmp.lt.s32.totalorder %v203, 15
  %v342 = vsel %vm340, 1, 0
  %v343 = vsel %vm341, 1, 0
  %v344 = vcvt.s32.f32 %v342
  %v345 = vcvt.s32.f32 %v343
  %v346 = vrot.slane %v330, 7
  %v347 = vrot.slane %v331, 7
  %v348 = vrot.slane %v332, 7
  %v349 = vrot.slane %v333, 7
  %vm350 = vcmp.lt.s32.totalorder %v202, 1
  %v351 = vsel %vm350, %v348, %v349
  %v352 = vsel %vm350, %v347, %v348
  %v353 = vsel %vm350, %v346, %v347
  %v354 = vsel %vm350, %v349, %v346
  %356 = vset.pattern.permute.xlu0 0
  %357 = vperm.xlu0 %356, %v338
  %v358 = vpop.permute.xlu0 %357
  %361 = vset.pattern.permute.xlu0 0
  %362 = vperm.xlu0 %361, %v339
  %v363 = vpop.permute.xlu0 %362
  %v365 = vmul.f32 %v354, %v358
  %v366 = vmul.f32 %v353, %v363
  %v367 = vmul.f32 %v352, %v358
  %v368 = vmul.f32 %v351, %v363
  %v369 = vrot.slane %v330, 1
  %v370 = vrot.slane %v331, 1
  %v371 = vrot.slane %v332, 1
  %v372 = vrot.slane %v333, 1
  %vm373 = vcmp.lt.s32.totalorder %v202, 7
  %v374 = vsel %vm373, %v371, %v372
  %v375 = vsel %vm373, %v370, %v371
  %v376 = vsel %vm373, %v369, %v370
  %v377 = vsel %vm373, %v372, %v369
  %379 = vset.pattern.permute.xlu0 0
  %380 = vperm.xlu0 %379, %v344
  %v381 = vpop.permute.xlu0 %380
  %384 = vset.pattern.permute.xlu0 0
  %385 = vperm.xlu0 %384, %v345
  %v386 = vpop.permute.xlu0 %385
  %v388 = vmul.f32 %v376, %v381
  %v389 = vmul.f32 %v375, %v386
  %v390 = vmul.f32 %v374, %v381
  %v391 = vmul.f32 %v377, %v386
  %396 = vrot.lane.b32.xlu0 %v330, 16
  %v397 = vpop.permute.xlu0 %396
  %398 = vrot.lane.b32.xlu0 %v331, 16
  %v399 = vpop.permute.xlu0 %398
  %400 = vrot.lane.b32.xlu0 %v332, 16
  %v401 = vpop.permute.xlu0 %400
  %402 = vrot.lane.b32.xlu0 %v333, 16
  %v403 = vpop.permute.xlu0 %402
  %412 = vrot.lane.b32.xlu0 %v388, 32
  %v413 = vpop.permute.xlu0 %412
  %414 = vrot.lane.b32.xlu0 %v389, 32
  %v415 = vpop.permute.xlu0 %414
  %416 = vrot.lane.b32.xlu0 %v390, 32
  %v417 = vpop.permute.xlu0 %416
  %418 = vrot.lane.b32.xlu0 %v391, 32
  %v419 = vpop.permute.xlu0 %418
  %vm424 = vcmask 130048
  %v425 = vsel %vm424, %v365, %v397
  %v426 = vsel %vm424, %v366, %v399
  %v427 = vsel %vm424, %v367, %v401
  %v428 = vsel %vm424, %v368, %v403
  %v429 = vsel %vm232, %v425, %v413
  %v430 = vsel %vm232, %v426, %v415
  %v431 = vsel %vm232, %v427, %v417
  %v432 = vsel %vm232, %v428, %v419
  %v433 = vld [vmem:[%s4] sm:$0xff]
  %v434 = vld [vmem:[%s4 + $0x8] sm:$0xff]
  %v435 = vld [vmem:[%s4 + $0x10] sm:$0xff]
  %v436 = vld [vmem:[%s4 + $0x18] sm:$0xff]
  %v437 = vld [vmem:[%s4 + $0x20] sm:$0xff]
  %v438 = vld [vmem:[%s4 + $0x28] sm:$0xff]
  %439 = vrot.lane.b32.xlu0 %v208, 48
  %v440 = vpop.permute.xlu0 %439
  %vm442 = vcmask 392192
  %v444 = vsel %vm442, %v429, 0
  %v447 = vsel %vm442, %v430, 0
  %v450 = vsel %vm442, %v431, 0
  %v453 = vsel %vm442, %v432, 0
  %455 = vmatprep.subr.mxu0 0.0
  %456 = vmatpush1.msra.mxu0 %v433
  %457 = vmatprep.subr.mxu0 0.0
  %458 = vmatpush1.msra.mxu0 %v434
  %459 = vmatprep.subr.mxu0 0.0
  %460 = vmatpush1.msra.mxu0 %v435
  %461 = vmatprep.subr.mxu0 0.0
  %462 = vmatpush1.msra.mxu0 %v436
  %463 = vmatprep.subr.mxu0 0.0
  %464 = vmatpush1.msra.mxu0 %v437
  %465 = vmatprep.subr.mxu0 0.0
  %466 = vmatpush1.msra.mxu0 %v438
  %467 = vmatprep.subr.mxu0 0.0
  %468 = vmatpush1.msra.mxu0 0.0
  %469 = vmatprep.subr.mxu0 0.0
  %470 = vmatpush1.msra.mxu0 0.0
  %471 = vmatprep.subr.mxu0 0.0
  %472 = vmatpush1.msra.mxu0 0.0
  %473 = vmatprep.subr.mxu0 0.0
  %474 = vmatpush1.msra.mxu0 0.0
  %475 = vmatprep.subr.mxu0 0.0
  %476 = vmatpush1.msra.mxu0 0.0
  %477 = vmatprep.subr.mxu0 0.0
  %478 = vmatpush1.msra.mxu0 0.0
  %479 = vmatprep.subr.mxu0 0.0
  %480 = vmatpush1.msra.mxu0 0.0
  %481 = vmatprep.subr.mxu0 0.0
  %482 = vmatpush1.msra.mxu0 0.0
  %483 = vmatprep.subr.mxu0 0.0
  %484 = vmatpush1.msra.mxu0 0.0
  %485 = vmatprep.subr.mxu0 0.0
  %486 = vmatpush1.msra.mxu0 0.0
  %487 = vmatprep.subr.mxu0 0.0
  %488 = vmatpush1.msra.mxu0 0.0
  %489 = vmatprep.subr.mxu0 0.0
  %490 = vmatpush1.msra.mxu0 0.0
  %491 = vmatprep.subr.mxu0 0.0
  %492 = vmatpush1.msra.mxu0 0.0
  %493 = vmatprep.subr.mxu0 0.0
  %494 = vmatpush1.msra.mxu0 0.0
  %495 = vmatprep.subr.mxu0 0.0
  %496 = vmatpush1.msra.mxu0 0.0
  %497 = vmatprep.subr.mxu0 0.0
  %498 = vmatpush1.msra.mxu0 0.0
  %499 = vmatprep.subr.mxu0 0.0
  %500 = vmatpush1.msra.mxu0 0.0
  %501 = vmatprep.subr.mxu0 0.0
  %502 = vmatpush1.msra.mxu0 0.0
  %503 = vmatprep.subr.mxu0 0.0
  %504 = vmatpush1.msra.mxu0 0.0
  %505 = vmatprep.subr.mxu0 0.0
  %506 = vmatpush1.msra.mxu0 0.0
  %507 = vmatprep.subr.mxu0 0.0
  %508 = vmatpush1.msra.mxu0 0.0
  %509 = vmatprep.subr.mxu0 0.0
  %510 = vmatpush1.msra.mxu0 0.0
  %511 = vmatprep.subr.mxu0 0.0
  %512 = vmatpush1.msra.mxu0 0.0
  %513 = vmatprep.subr.mxu0 0.0
  %514 = vmatpush1.msra.mxu0 0.0
  %515 = vmatprep.subr.mxu0 0.0
  %516 = vmatpush1.msra.mxu0 0.0
  %517 = vmatprep.subr.mxu0 0.0
  %518 = vmatpush1.msra.mxu0 0.0
  %519 = vmatprep.mubr.f32.mxu0 0.0
  %520 = vmatmul.mubr.f32.gmra.mrb[0].mxu0 %v444
  %v521 = vpop.f32.mrb[0].mxu0
  %v522 = vadd.f32 %v440, %v521
  %v523 = vpop.f32.mrb[0].mxu0
  %524 = vmatprep.mubr.f32.mxu0 0.0
  %525 = vmatmul.mubr.f32.gmra.mrb[0].mxu0 %v447
  %v526 = vpop.f32.mrb[0].mxu0
  %v527 = vadd.f32 %v440, %v526
  %v528 = vpop.f32.mrb[0].mxu0
  %529 = vmatprep.mubr.f32.mxu0 0.0
  %530 = vmatmul.mubr.f32.gmra.mrb[0].mxu0 %v450
  %v531 = vpop.f32.mrb[0].mxu0
  %v532 = vadd.f32 %v440, %v531
  %v533 = vpop.f32.mrb[0].mxu0
  %534 = vmatprep.mubr.f32.mxu0 0.0
  %535 = vmatmul.mubr.f32.gmra.mrb[0].mxu0 %v453
  %v536 = vpop.f32.mrb[0].mxu0
  %v537 = vadd.f32 %v440, %v536
  %v538 = vpop.f32.mrb[0].mxu0
  %539 = vdwg.mxu0
  %v540 = vmax.f32 %v522, 0.0
  %v541 = vmax.f32 %v527, 0.0
  %v542 = vmax.f32 %v532, 0.0
  %v543 = vmax.f32 %v537, 0.0
  %v544 = vld [vmem:[%s5] sm:$0xff]
  %v545 = vld [vmem:[%s5 + $0x8] sm:$0xff]
  %v547 = vsel %vm424, %v540, 0
  %v550 = vsel %vm424, %v541, 0
  %v553 = vsel %vm424, %v542, 0
  %v556 = vsel %vm424, %v543, 0
  %558 = vmatprep.subr.mxu0 0.0
  %559 = vmatpush1.msra.mxu0 %v544
  %560 = vmatprep.subr.mxu0 0.0
  %561 = vmatpush1.msra.mxu0 %v545
  %562 = vmatprep.subr.mxu0 0.0
  %563 = vmatpush1.msra.mxu0 0.0
  %564 = vmatprep.subr.mxu0 0.0
  %565 = vmatpush1.msra.mxu0 0.0
  %566 = vmatprep.subr.mxu0 0.0
  %567 = vmatpush1.msra.mxu0 0.0
  %568 = vmatprep.subr.mxu0 0.0
  %569 = vmatpush1.msra.mxu0 0.0
  %570 = vmatprep.subr.mxu0 0.0
  %571 = vmatpush1.msra.mxu0 0.0
  %572 = vmatprep.subr.mxu0 0.0
  %573 = vmatpush1.msra.mxu0 0.0
  %574 = vmatprep.subr.mxu0 0.0
  %575 = vmatpush1.msra.mxu0 0.0
  %576 = vmatprep.subr.mxu0 0.0
  %577 = vmatpush1.msra.mxu0 0.0
  %578 = vmatprep.subr.mxu0 0.0
  %579 = vmatpush1.msra.mxu0 0.0
  %580 = vmatprep.subr.mxu0 0.0
  %581 = vmatpush1.msra.mxu0 0.0
  %582 = vmatprep.subr.mxu0 0.0
  %583 = vmatpush1.msra.mxu0 0.0
  %584 = vmatprep.subr.mxu0 0.0
  %585 = vmatpush1.msra.mxu0 0.0
  %586 = vmatprep.subr.mxu0 0.0
  %587 = vmatpush1.msra.mxu0 0.0
  %588 = vmatprep.subr.mxu0 0.0
  %589 = vmatpush1.msra.mxu0 0.0
  %590 = vmatprep.subr.mxu0 0.0
  %591 = vmatpush1.msra.mxu0 0.0
  %592 = vmatprep.subr.mxu0 0.0
  %593 = vmatpush1.msra.mxu0 0.0
  %594 = vmatprep.subr.mxu0 0.0
  %595 = vmatpush1.msra.mxu0 0.0
  %596 = vmatprep.subr.mxu0 0.0
  %597 = vmatpush1.msra.mxu0 0.0
  %598 = vmatprep.subr.mxu0 0.0
  %599 = vmatpush1.msra.mxu0 0.0
  %600 = vmatprep.subr.mxu0 0.0
  %601 = vmatpush1.msra.mxu0 0.0
  %602 = vmatprep.subr.mxu0 0.0
  %603 = vmatpush1.msra.mxu0 0.0
  %604 = vmatprep.subr.mxu0 0.0
  %605 = vmatpush1.msra.mxu0 0.0
  %606 = vmatprep.subr.mxu0 0.0
  %607 = vmatpush1.msra.mxu0 0.0
  %608 = vmatprep.subr.mxu0 0.0
  %609 = vmatpush1.msra.mxu0 0.0
  %610 = vmatprep.subr.mxu0 0.0
  %611 = vmatpush1.msra.mxu0 0.0
  %612 = vmatprep.subr.mxu0 0.0
  %613 = vmatpush1.msra.mxu0 0.0
  %614 = vmatprep.subr.mxu0 0.0
  %615 = vmatpush1.msra.mxu0 0.0
  %616 = vmatprep.subr.mxu0 0.0
  %617 = vmatpush1.msra.mxu0 0.0
  %618 = vmatprep.subr.mxu0 0.0
  %619 = vmatpush1.msra.mxu0 0.0
  %620 = vmatprep.subr.mxu0 0.0
  %621 = vmatpush1.msra.mxu0 0.0
  %622 = vmatprep.mubr.f32.mxu0 0.0
  %623 = vmatmul.mubr.f32.gmra.mrb[0].mxu0 %v547
  %v624 = vpop.f32.mrb[0].mxu0
  %v625 = vadd.f32 0.0, %v624
  %v626 = vpop.f32.mrb[0].mxu0
  %627 = vmatprep.mubr.f32.mxu0 0.0
  %628 = vmatmul.mubr.f32.gmra.mrb[0].mxu0 %v550
  %v629 = vpop.f32.mrb[0].mxu0
  %v630 = vadd.f32 0.0, %v629
  %v631 = vpop.f32.mrb[0].mxu0
  %632 = vmatprep.mubr.f32.mxu0 0.0
  %633 = vmatmul.mubr.f32.gmra.mrb[0].mxu0 %v553
  %v634 = vpop.f32.mrb[0].mxu0
  %v635 = vadd.f32 0.0, %v634
  %v636 = vpop.f32.mrb[0].mxu0
  %637 = vmatprep.mubr.f32.mxu0 0.0
  %638 = vmatmul.mubr.f32.gmra.mrb[0].mxu0 %v556
  %v639 = vpop.f32.mrb[0].mxu0
  %v640 = vadd.f32 0.0, %v639
  %v641 = vpop.f32.mrb[0].mxu0
  %642 = vdwg.mxu0
  %v643 = vadd.f32 %v183, %v625
  %v644 = vadd.f32 %v188, %v630
  %v645 = vadd.f32 %v193, %v635
  %v646 = vadd.f32 %v198, %v640
  %647 = vrot.lane.b32.xlu0 %v208, 32
  %v648 = vpop.permute.xlu0 %647
  %v650 = vadd.f32 %v643, %v648
  %v651 = vadd.f32 %v644, %v648
  %v652 = vadd.f32 %v645, %v648
  %v653 = vadd.f32 %v646, %v648
  %v654 = vld [vmem:[%s6 + $0x1] sm:$0x1]
  %v655 = vlaneseq
  %v656 = vshrl.u32 %v655, 7
  %v657 = vsub.s32 0, %v656
  %v658 = vrot.slane %v654, %v657
  %v659 = vmul.f32 %v650, %v658
  %v660 = vmul.f32 %v651, %v658
  %v661 = vmul.f32 %v652, %v658
  %v662 = vmul.f32 %v653, %v658
  %664 = vrot.lane.b32.xlu0 %v658, 96
  %v665 = vpop.permute.xlu0 %664
  %v667 = vadd.f32 %v659, %v665
  %v668 = vadd.f32 %v660, %v665
  %v669 = vadd.f32 %v661, %v665
  %v670 = vadd.f32 %v662, %v665
  %v671 = vmax.f32 %v667, 0.0
  %v672 = vmax.f32 %v668, 0.0
  %v673 = vmax.f32 %v669, 0.0
  %v674 = vmax.f32 %v670, 0.0
  %s675 = scalar_lea.vmem %s3, 32
  %v676 = vld [vmem:[%s675] sm:$0xff]
  %v677 = vld [vmem:[%s675 + $0x8] sm:$0xff]
  %v678 = vld [vmem:[%s675 + $0x10] sm:$0xff]
  %v679 = vld [vmem:[%s675 + $0x18] sm:$0xff]
  %680 = vrot.lane.b32.xlu0 %v658, 64
  %v681 = vpop.permute.xlu0 %680
  %v684 = vsel %vm232, %v671, 0
  %v687 = vsel %vm232, %v672, 0
  %v690 = vsel %vm232, %v673, 0
  %v693 = vsel %vm232, %v674, 0
  %695 = vmatprep.subr.mxu0 0.0
  %696 = vmatpush1.msra.mxu0 %v676
  %697 = vmatprep.subr.mxu0 0.0
  %698 = vmatpush1.msra.mxu0 %v677
  %699 = vmatprep.subr.mxu0 0.0
  %700 = vmatpush1.msra.mxu0 %v678
  %701 = vmatprep.subr.mxu0 0.0
  %702 = vmatpush1.msra.mxu0 %v679
  %703 = vmatprep.subr.mxu0 0.0
  %704 = vmatpush1.msra.mxu0 0.0
  %705 = vmatprep.subr.mxu0 0.0
  %706 = vmatpush1.msra.mxu0 0.0
  %707 = vmatprep.subr.mxu0 0.0
  %708 = vmatpush1.msra.mxu0 0.0
  %709 = vmatprep.subr.mxu0 0.0
  %710 = vmatpush1.msra.mxu0 0.0
  %711 = vmatprep.subr.mxu0 0.0
  %712 = vmatpush1.msra.mxu0 0.0
  %713 = vmatprep.subr.mxu0 0.0
  %714 = vmatpush1.msra.mxu0 0.0
  %715 = vmatprep.subr.mxu0 0.0
  %716 = vmatpush1.msra.mxu0 0.0
  %717 = vmatprep.subr.mxu0 0.0
  %718 = vmatpush1.msra.mxu0 0.0
  %719 = vmatprep.subr.mxu0 0.0
  %720 = vmatpush1.msra.mxu0 0.0
  %721 = vmatprep.subr.mxu0 0.0
  %722 = vmatpush1.msra.mxu0 0.0
  %723 = vmatprep.subr.mxu0 0.0
  %724 = vmatpush1.msra.mxu0 0.0
  %725 = vmatprep.subr.mxu0 0.0
  %726 = vmatpush1.msra.mxu0 0.0
  %727 = vmatprep.subr.mxu0 0.0
  %728 = vmatpush1.msra.mxu0 0.0
  %729 = vmatprep.subr.mxu0 0.0
  %730 = vmatpush1.msra.mxu0 0.0
  %731 = vmatprep.subr.mxu0 0.0
  %732 = vmatpush1.msra.mxu0 0.0
  %733 = vmatprep.subr.mxu0 0.0
  %734 = vmatpush1.msra.mxu0 0.0
  %735 = vmatprep.subr.mxu0 0.0
  %736 = vmatpush1.msra.mxu0 0.0
  %737 = vmatprep.subr.mxu0 0.0
  %738 = vmatpush1.msra.mxu0 0.0
  %739 = vmatprep.subr.mxu0 0.0
  %740 = vmatpush1.msra.mxu0 0.0
  %741 = vmatprep.subr.mxu0 0.0
  %742 = vmatpush1.msra.mxu0 0.0
  %743 = vmatprep.subr.mxu0 0.0
  %744 = vmatpush1.msra.mxu0 0.0
  %745 = vmatprep.subr.mxu0 0.0
  %746 = vmatpush1.msra.mxu0 0.0
  %747 = vmatprep.subr.mxu0 0.0
  %748 = vmatpush1.msra.mxu0 0.0
  %749 = vmatprep.subr.mxu0 0.0
  %750 = vmatpush1.msra.mxu0 0.0
  %751 = vmatprep.subr.mxu0 0.0
  %752 = vmatpush1.msra.mxu0 0.0
  %753 = vmatprep.subr.mxu0 0.0
  %754 = vmatpush1.msra.mxu0 0.0
  %755 = vmatprep.subr.mxu0 0.0
  %756 = vmatpush1.msra.mxu0 0.0
  %757 = vmatprep.subr.mxu0 0.0
  %758 = vmatpush1.msra.mxu0 0.0
  %759 = vmatprep.mubr.f32.mxu0 0.0
  %760 = vmatmul.mubr.f32.gmra.mrb[0].mxu0 %v684
  %v761 = vpop.f32.mrb[0].mxu0
  %v762 = vadd.f32 %v681, %v761
  %v763 = vpop.f32.mrb[0].mxu0
  %764 = vmatprep.mubr.f32.mxu0 0.0
  %765 = vmatmul.mubr.f32.gmra.mrb[0].mxu0 %v687
  %v766 = vpop.f32.mrb[0].mxu0
  %v767 = vadd.f32 %v681, %v766
  %v768 = vpop.f32.mrb[0].mxu0
  %769 = vmatprep.mubr.f32.mxu0 0.0
  %770 = vmatmul.mubr.f32.gmra.mrb[0].mxu0 %v690
  %v771 = vpop.f32.mrb[0].mxu0
  %v772 = vadd.f32 %v681, %v771
  %v773 = vpop.f32.mrb[0].mxu0
  %774 = vmatprep.mubr.f32.mxu0 0.0
  %775 = vmatmul.mubr.f32.gmra.mrb[0].mxu0 %v693
  %v776 = vpop.f32.mrb[0].mxu0
  %v777 = vadd.f32 %v681, %v776
  %v778 = vpop.f32.mrb[0].mxu0
  %779 = vdwg.mxu0
  %v780 = vmax.f32 %v762, 0.0
  %v781 = vmax.f32 %v767, 0.0
  %v782 = vmax.f32 %v772, 0.0
  %v783 = vmax.f32 %v777, 0.0
  %vm784 = vcmp.ge.s32.totalorder %v202, 2
  %vm785 = vcmp.ge.s32.totalorder %v203, 2
  %v786 = vsel %vm784, 1, 0
  %v787 = vsel %vm785, 1, 0
  %v788 = vcvt.s32.f32 %v786
  %v789 = vcvt.s32.f32 %v787
  %vm790 = vcmp.lt.s32.totalorder %v202, 14
  %vm791 = vcmp.lt.s32.totalorder %v203, 14
  %v792 = vsel %vm790, 1, 0
  %v793 = vsel %vm791, 1, 0
  %v794 = vcvt.s32.f32 %v792
  %v795 = vcvt.s32.f32 %v793
  %v796 = vrot.slane %v780, 6
  %v797 = vrot.slane %v781, 6
  %v798 = vrot.slane %v782, 6
  %v799 = vrot.slane %v783, 6
  %vm800 = vcmp.lt.s32.totalorder %v202, 2
  %v801 = vsel %vm800, %v798, %v799
  %v802 = vsel %vm800, %v797, %v798
  %v803 = vsel %vm800, %v796, %v797
  %v804 = vsel %vm800, %v799, %v796
  %806 = vset.pattern.permute.xlu0 0
  %807 = vperm.xlu0 %806, %v788
  %v808 = vpop.permute.xlu0 %807
  %811 = vset.pattern.permute.xlu0 0
  %812 = vperm.xlu0 %811, %v789
  %v813 = vpop.permute.xlu0 %812
  %v815 = vmul.f32 %v804, %v808
  %v816 = vmul.f32 %v803, %v813
  %v817 = vmul.f32 %v802, %v808
  %v818 = vmul.f32 %v801, %v813
  %v819 = vrot.slane %v780, 2
  %v820 = vrot.slane %v781, 2
  %v821 = vrot.slane %v782, 2
  %v822 = vrot.slane %v783, 2
  %vm823 = vcmp.lt.s32.totalorder %v202, 6
  %v824 = vsel %vm823, %v821, %v822
  %v825 = vsel %vm823, %v820, %v821
  %v826 = vsel %vm823, %v819, %v820
  %v827 = vsel %vm823, %v822, %v819
  %829 = vset.pattern.permute.xlu0 0
  %830 = vperm.xlu0 %829, %v794
  %v831 = vpop.permute.xlu0 %830
  %834 = vset.pattern.permute.xlu0 0
  %835 = vperm.xlu0 %834, %v795
  %v836 = vpop.permute.xlu0 %835
  %v838 = vmul.f32 %v826, %v831
  %v839 = vmul.f32 %v825, %v836
  %v840 = vmul.f32 %v824, %v831
  %v841 = vmul.f32 %v827, %v836
  %846 = vrot.lane.b32.xlu0 %v780, 16
  %v847 = vpop.permute.xlu0 %846
  %848 = vrot.lane.b32.xlu0 %v781, 16
  %v849 = vpop.permute.xlu0 %848
  %850 = vrot.lane.b32.xlu0 %v782, 16
  %v851 = vpop.permute.xlu0 %850
  %852 = vrot.lane.b32.xlu0 %v783, 16
  %v853 = vpop.permute.xlu0 %852
  %862 = vrot.lane.b32.xlu0 %v838, 32
  %v863 = vpop.permute.xlu0 %862
  %864 = vrot.lane.b32.xlu0 %v839, 32
  %v865 = vpop.permute.xlu0 %864
  %866 = vrot.lane.b32.xlu0 %v840, 32
  %v867 = vpop.permute.xlu0 %866
  %868 = vrot.lane.b32.xlu0 %v841, 32
  %v869 = vpop.permute.xlu0 %868
  %v874 = vsel %vm424, %v815, %v847
  %v875 = vsel %vm424, %v816, %v849
  %v876 = vsel %vm424, %v817, %v851
  %v877 = vsel %vm424, %v818, %v853
  %v878 = vsel %vm232, %v874, %v863
  %v879 = vsel %vm232, %v875, %v865
  %v880 = vsel %vm232, %v876, %v867
  %v881 = vsel %vm232, %v877, %v869
  %s882 = scalar_lea.vmem %s4, 48
  %v883 = vld [vmem:[%s882] sm:$0xff]
  %v884 = vld [vmem:[%s882 + $0x8] sm:$0xff]
  %v885 = vld [vmem:[%s882 + $0x10] sm:$0xff]
  %v886 = vld [vmem:[%s882 + $0x18] sm:$0xff]
  %v887 = vld [vmem:[%s882 + $0x20] sm:$0xff]
  %v888 = vld [vmem:[%s882 + $0x28] sm:$0xff]
  %889 = vrot.lane.b32.xlu0 %v658, 48
  %v890 = vpop.permute.xlu0 %889
  %v893 = vsel %vm442, %v878, 0
  %v896 = vsel %vm442, %v879, 0
  %v899 = vsel %vm442, %v880, 0
  %v902 = vsel %vm442, %v881, 0
  %904 = vmatprep.subr.mxu0 0.0
  %905 = vmatpush1.msra.mxu0 %v883
  %906 = vmatprep.subr.mxu0 0.0
  %907 = vmatpush1.msra.mxu0 %v884
  %908 = vmatprep.subr.mxu0 0.0
  %909 = vmatpush1.msra.mxu0 %v885
  %910 = vmatprep.subr.mxu0 0.0
  %911 = vmatpush1.msra.mxu0 %v886
  %912 = vmatprep.subr.mxu0 0.0
  %913 = vmatpush1.msra.mxu0 %v887
  %914 = vmatprep.subr.mxu0 0.0
  %915 = vmatpush1.msra.mxu0 %v888
  %916 = vmatprep.subr.mxu0 0.0
  %917 = vmatpush1.msra.mxu0 0.0
  %918 = vmatprep.subr.mxu0 0.0
  %919 = vmatpush1.msra.mxu0 0.0
  %920 = vmatprep.subr.mxu0 0.0
  %921 = vmatpush1.msra.mxu0 0.0
  %922 = vmatprep.subr.mxu0 0.0
  %923 = vmatpush1.msra.mxu0 0.0
  %924 = vmatprep.subr.mxu0 0.0
  %925 = vmatpush1.msra.mxu0 0.0
  %926 = vmatprep.subr.mxu0 0.0
  %927 = vmatpush1.msra.mxu0 0.0
  %928 = vmatprep.subr.mxu0 0.0
  %929 = vmatpush1.msra.mxu0 0.0
  %930 = vmatprep.subr.mxu0 0.0
  %931 = vmatpush1.msra.mxu0 0.0
  %932 = vmatprep.subr.mxu0 0.0
  %933 = vmatpush1.msra.mxu0 0.0
  %934 = vmatprep.subr.mxu0 0.0
  %935 = vmatpush1.msra.mxu0 0.0
  %936 = vmatprep.subr.mxu0 0.0
  %937 = vmatpush1.msra.mxu0 0.0
  %938 = vmatprep.subr.mxu0 0.0
  %939 = vmatpush1.msra.mxu0 0.0
  %940 = vmatprep.subr.mxu0 0.0
  %941 = vmatpush1.msra.mxu0 0.0
  %942 = vmatprep.subr.mxu0 0.0
  %943 = vmatpush1.msra.mxu0 0.0
  %944 = vmatprep.subr.mxu0 0.0
  %945 = vmatpush1.msra.mxu0 0.0
  %946 = vmatprep.subr.mxu0 0.0
  %947 = vmatpush1.msra.mxu0 0.0
  %948 = vmatprep.subr.mxu0 0.0
  %949 = vmatpush1.msra.mxu0 0.0
  %950 = vmatprep.subr.mxu0 0.0
  %951 = vmatpush1.msra.mxu0 0.0
  %952 = vmatprep.subr.mxu0 0.0
  %953 = vmatpush1.msra.mxu0 0.0
  %954 = vmatprep.subr.mxu0 0.0
  %955 = vmatpush1.msra.mxu0 0.0
  %956 = vmatprep.subr.mxu0 0.0
  %957 = vmatpush1.msra.mxu0 0.0
  %958 = vmatprep.subr.mxu0 0.0
  %959 = vmatpush1.msra.mxu0 0.0
  %960 = vmatprep.subr.mxu0 0.0
  %961 = vmatpush1.msra.mxu0 0.0
  %962 = vmatprep.subr.mxu0 0.0
  %963 = vmatpush1.msra.mxu0 0.0
  %964 = vmatprep.subr.mxu0 0.0
  %965 = vmatpush1.msra.mxu0 0.0
  %966 = vmatprep.subr.mxu0 0.0
  %967 = vmatpush1.msra.mxu0 0.0
  %968 = vmatprep.mubr.f32.mxu0 0.0
  %969 = vmatmul.mubr.f32.gmra.mrb[0].mxu0 %v893
  %v970 = vpop.f32.mrb[0].mxu0
  %v971 = vadd.f32 %v890, %v970
  %v972 = vpop.f32.mrb[0].mxu0
  %973 = vmatprep.mubr.f32.mxu0 0.0
  %974 = vmatmul.mubr.f32.gmra.mrb[0].mxu0 %v896
  %v975 = vpop.f32.mrb[0].mxu0
  %v976 = vadd.f32 %v890, %v975
  %v977 = vpop.f32.mrb[0].mxu0
  %978 = vmatprep.mubr.f32.mxu0 0.0
  %979 = vmatmul.mubr.f32.gmra.mrb[0].mxu0 %v899
  %v980 = vpop.f32.mrb[0].mxu0
  %v981 = vadd.f32 %v890, %v980
  %v982 = vpop.f32.mrb[0].mxu0
  %983 = vmatprep.mubr.f32.mxu0 0.0
  %984 = vmatmul.mubr.f32.gmra.mrb[0].mxu0 %v902
  %v985 = vpop.f32.mrb[0].mxu0
  %v986 = vadd.f32 %v890, %v985
  %v987 = vpop.f32.mrb[0].mxu0
  %988 = vdwg.mxu0
  %v989 = vmax.f32 %v971, 0.0
  %v990 = vmax.f32 %v976, 0.0
  %v991 = vmax.f32 %v981, 0.0
  %v992 = vmax.f32 %v986, 0.0
  %s993 = scalar_lea.vmem %s5, 16
  %v994 = vld [vmem:[%s993] sm:$0xff]
  %v995 = vld [vmem:[%s993 + $0x8] sm:$0xff]
  %v997 = vsel %vm424, %v989, 0
  %v1000 = vsel %vm424, %v990, 0
  %v1003 = vsel %vm424, %v991, 0
  %v1006 = vsel %vm424, %v992, 0
  %1008 = vmatprep.subr.mxu0 0.0
  %1009 = vmatpush1.msra.mxu0 %v994
  %1010 = vmatprep.subr.mxu0 0.0
  %1011 = vmatpush1.msra.mxu0 %v995
  %1012 = vmatprep.subr.mxu0 0.0
  %1013 = vmatpush1.msra.mxu0 0.0
  %1014 = vmatprep.subr.mxu0 0.0
  %1015 = vmatpush1.msra.mxu0 0.0
  %1016 = vmatprep.subr.mxu0 0.0
  %1017 = vmatpush1.msra.mxu0 0.0
  %1018 = vmatprep.subr.mxu0 0.0
  %1019 = vmatpush1.msra.mxu0 0.0
  %1020 = vmatprep.subr.mxu0 0.0
  %1021 = vmatpush1.msra.mxu0 0.0
  %1022 = vmatprep.subr.mxu0 0.0
  %1023 = vmatpush1.msra.mxu0 0.0
  %1024 = vmatprep.subr.mxu0 0.0
  %1025 = vmatpush1.msra.mxu0 0.0
  %1026 = vmatprep.subr.mxu0 0.0
  %1027 = vmatpush1.msra.mxu0 0.0
  %1028 = vmatprep.subr.mxu0 0.0
  %1029 = vmatpush1.msra.mxu0 0.0
  %1030 = vmatprep.subr.mxu0 0.0
  %1031 = vmatpush1.msra.mxu0 0.0
  %1032 = vmatprep.subr.mxu0 0.0
  %1033 = vmatpush1.msra.mxu0 0.0
  %1034 = vmatprep.subr.mxu0 0.0
  %1035 = vmatpush1.msra.mxu0 0.0
  %1036 = vmatprep.subr.mxu0 0.0
  %1037 = vmatpush1.msra.mxu0 0.0
  %1038 = vmatprep.subr.mxu0 0.0
  %1039 = vmatpush1.msra.mxu0 0.0
  %1040 = vmatprep.subr.mxu0 0.0
  %1041 = vmatpush1.msra.mxu0 0.0
  %1042 = vmatprep.subr.mxu0 0.0
  %1043 = vmatpush1.msra.mxu0 0.0
  %1044 = vmatprep.subr.mxu0 0.0
  %1045 = vmatpush1.msra.mxu0 0.0
  %1046 = vmatprep.subr.mxu0 0.0
  %1047 = vmatpush1.msra.mxu0 0.0
  %1048 = vmatprep.subr.mxu0 0.0
  %1049 = vmatpush1.msra.mxu0 0.0
  %1050 = vmatprep.subr.mxu0 0.0
  %1051 = vmatpush1.msra.mxu0 0.0
  %1052 = vmatprep.subr.mxu0 0.0
  %1053 = vmatpush1.msra.mxu0 0.0
  %1054 = vmatprep.subr.mxu0 0.0
  %1055 = vmatpush1.msra.mxu0 0.0
  %1056 = vmatprep.subr.mxu0 0.0
  %1057 = vmatpush1.msra.mxu0 0.0
  %1058 = vmatprep.subr.mxu0 0.0
  %1059 = vmatpush1.msra.mxu0 0.0
  %1060 = vmatprep.subr.mxu0 0.0
  %1061 = vmatpush1.msra.mxu0 0.0
  %1062 = vmatprep.subr.mxu0 0.0
  %1063 = vmatpush1.msra.mxu0 0.0
  %1064 = vmatprep.subr.mxu0 0.0
  %1065 = vmatpush1.msra.mxu0 0.0
  %1066 = vmatprep.subr.mxu0 0.0
  %1067 = vmatpush1.msra.mxu0 0.0
  %1068 = vmatprep.subr.mxu0 0.0
  %1069 = vmatpush1.msra.mxu0 0.0
  %1070 = vmatprep.subr.mxu0 0.0
  %1071 = vmatpush1.msra.mxu0 0.0
  %1072 = vmatprep.mubr.f32.mxu0 0.0
  %1073 = vmatmul.mubr.f32.gmra.mrb[0].mxu0 %v997
  %v1074 = vpop.f32.mrb[0].mxu0
  %v1075 = vadd.f32 0.0, %v1074
  %v1076 = vpop.f32.mrb[0].mxu0
  %1077 = vmatprep.mubr.f32.mxu0 0.0
  %1078 = vmatmul.mubr.f32.gmra.mrb[0].mxu0 %v1000
  %v1079 = vpop.f32.mrb[0].mxu0
  %v1080 = vadd.f32 0.0, %v1079
  %v1081 = vpop.f32.mrb[0].mxu0
  %1082 = vmatprep.mubr.f32.mxu0 0.0
  %1083 = vmatmul.mubr.f32.gmra.mrb[0].mxu0 %v1003
  %v1084 = vpop.f32.mrb[0].mxu0
  %v1085 = vadd.f32 0.0, %v1084
  %v1086 = vpop.f32.mrb[0].mxu0
  %1087 = vmatprep.mubr.f32.mxu0 0.0
  %1088 = vmatmul.mubr.f32.gmra.mrb[0].mxu0 %v1006
  %v1089 = vpop.f32.mrb[0].mxu0
  %v1090 = vadd.f32 0.0, %v1089
  %v1091 = vpop.f32.mrb[0].mxu0
  %1092 = vdwg.mxu0
  %v1093 = vadd.f32 %v650, %v1075
  %v1094 = vadd.f32 %v651, %v1080
  %v1095 = vadd.f32 %v652, %v1085
  %v1096 = vadd.f32 %v653, %v1090
  %1097 = vrot.lane.b32.xlu0 %v658, 32
  %v1098 = vpop.permute.xlu0 %1097
  %v1100 = vadd.f32 %v1093, %v1098
  %v1101 = vadd.f32 %v1094, %v1098
  %v1102 = vadd.f32 %v1095, %v1098
  %v1103 = vadd.f32 %v1096, %v1098
  %v1104 = vld [vmem:[%s6 + $0x2] sm:$0x1]
  %v1105 = vlaneseq
  %v1106 = vshrl.u32 %v1105, 7
  %v1107 = vsub.s32 0, %v1106
  %v1108 = vrot.slane %v1104, %v1107
  %v1109 = vmul.f32 %v1100, %v1108
  %v1110 = vmul.f32 %v1101, %v1108
  %v1111 = vmul.f32 %v1102, %v1108
  %v1112 = vmul.f32 %v1103, %v1108
  %1114 = vrot.lane.b32.xlu0 %v1108, 96
  %v1115 = vpop.permute.xlu0 %1114
  %v1117 = vadd.f32 %v1109, %v1115
  %v1118 = vadd.f32 %v1110, %v1115
  %v1119 = vadd.f32 %v1111, %v1115
  %v1120 = vadd.f32 %v1112, %v1115
  %v1121 = vmax.f32 %v1117, 0.0
  %v1122 = vmax.f32 %v1118, 0.0
  %v1123 = vmax.f32 %v1119, 0.0
  %v1124 = vmax.f32 %v1120, 0.0
  %s1125 = scalar_lea.vmem %s3, 64
  %v1126 = vld [vmem:[%s1125] sm:$0xff]
  %v1127 = vld [vmem:[%s1125 + $0x8] sm:$0xff]
  %v1128 = vld [vmem:[%s1125 + $0x10] sm:$0xff]
  %v1129 = vld [vmem:[%s1125 + $0x18] sm:$0xff]
  %1130 = vrot.lane.b32.xlu0 %v1108, 64
  %v1131 = vpop.permute.xlu0 %1130
  %v1134 = vsel %vm232, %v1121, 0
  %v1137 = vsel %vm232, %v1122, 0
  %v1140 = vsel %vm232, %v1123, 0
  %v1143 = vsel %vm232, %v1124, 0
  %1145 = vmatprep.subr.mxu0 0.0
  %1146 = vmatpush1.msra.mxu0 %v1126
  %1147 = vmatprep.subr.mxu0 0.0
  %1148 = vmatpush1.msra.mxu0 %v1127
  %1149 = vmatprep.subr.mxu0 0.0
  %1150 = vmatpush1.msra.mxu0 %v1128
  %1151 = vmatprep.subr.mxu0 0.0
  %1152 = vmatpush1.msra.mxu0 %v1129
  %1153 = vmatprep.subr.mxu0 0.0
  %1154 = vmatpush1.msra.mxu0 0.0
  %1155 = vmatprep.subr.mxu0 0.0
  %1156 = vmatpush1.msra.mxu0 0.0
  %1157 = vmatprep.subr.mxu0 0.0
  %1158 = vmatpush1.msra.mxu0 0.0
  %1159 = vmatprep.subr.mxu0 0.0
  %1160 = vmatpush1.msra.mxu0 0.0
  %1161 = vmatprep.subr.mxu0 0.0
  %1162 = vmatpush1.msra.mxu0 0.0
  %1163 = vmatprep.subr.mxu0 0.0
  %1164 = vmatpush1.msra.mxu0 0.0
  %1165 = vmatprep.subr.mxu0 0.0
  %1166 = vmatpush1.msra.mxu0 0.0
  %1167 = vmatprep.subr.mxu0 0.0
  %1168 = vmatpush1.msra.mxu0 0.0
  %1169 = vmatprep.subr.mxu0 0.0
  %1170 = vmatpush1.msra.mxu0 0.0
  %1171 = vmatprep.subr.mxu0 0.0
  %1172 = vmatpush1.msra.mxu0 0.0
  %1173 = vmatprep.subr.mxu0 0.0
  %1174 = vmatpush1.msra.mxu0 0.0
  %1175 = vmatprep.subr.mxu0 0.0
  %1176 = vmatpush1.msra.mxu0 0.0
  %1177 = vmatprep.subr.mxu0 0.0
  %1178 = vmatpush1.msra.mxu0 0.0
  %1179 = vmatprep.subr.mxu0 0.0
  %1180 = vmatpush1.msra.mxu0 0.0
  %1181 = vmatprep.subr.mxu0 0.0
  %1182 = vmatpush1.msra.mxu0 0.0
  %1183 = vmatprep.subr.mxu0 0.0
  %1184 = vmatpush1.msra.mxu0 0.0
  %1185 = vmatprep.subr.mxu0 0.0
  %1186 = vmatpush1.msra.mxu0 0.0
  %1187 = vmatprep.subr.mxu0 0.0
  %1188 = vmatpush1.msra.mxu0 0.0
  %1189 = vmatprep.subr.mxu0 0.0
  %1190 = vmatpush1.msra.mxu0 0.0
  %1191 = vmatprep.subr.mxu0 0.0
  %1192 = vmatpush1.msra.mxu0 0.0
  %1193 = vmatprep.subr.mxu0 0.0
  %1194 = vmatpush1.msra.mxu0 0.0
  %1195 = vmatprep.subr.mxu0 0.0
  %1196 = vmatpush1.msra.mxu0 0.0
  %1197 = vmatprep.subr.mxu0 0.0
  %1198 = vmatpush1.msra.mxu0 0.0
  %1199 = vmatprep.subr.mxu0 0.0
  %1200 = vmatpush1.msra.mxu0 0.0
  %1201 = vmatprep.subr.mxu0 0.0
  %1202 = vmatpush1.msra.mxu0 0.0
  %1203 = vmatprep.subr.mxu0 0.0
  %1204 = vmatpush1.msra.mxu0 0.0
  %1205 = vmatprep.subr.mxu0 0.0
  %1206 = vmatpush1.msra.mxu0 0.0
  %1207 = vmatprep.subr.mxu0 0.0
  %1208 = vmatpush1.msra.mxu0 0.0
  %1209 = vmatprep.mubr.f32.mxu0 0.0
  %1210 = vmatmul.mubr.f32.gmra.mrb[0].mxu0 %v1134
  %v1211 = vpop.f32.mrb[0].mxu0
  %v1212 = vadd.f32 %v1131, %v1211
  %v1213 = vpop.f32.mrb[0].mxu0
  %1214 = vmatprep.mubr.f32.mxu0 0.0
  %1215 = vmatmul.mubr.f32.gmra.mrb[0].mxu0 %v1137
  %v1216 = vpop.f32.mrb[0].mxu0
  %v1217 = vadd.f32 %v1131, %v1216
  %v1218 = vpop.f32.mrb[0].mxu0
  %1219 = vmatprep.mubr.f32.mxu0 0.0
  %1220 = vmatmul.mubr.f32.gmra.mrb[0].mxu0 %v1140
  %v1221 = vpop.f32.mrb[0].mxu0
  %v1222 = vadd.f32 %v1131, %v1221
  %v1223 = vpop.f32.mrb[0].mxu0
  %1224 = vmatprep.mubr.f32.mxu0 0.0
  %1225 = vmatmul.mubr.f32.gmra.mrb[0].mxu0 %v1143
  %v1226 = vpop.f32.mrb[0].mxu0
  %v1227 = vadd.f32 %v1131, %v1226
  %v1228 = vpop.f32.mrb[0].mxu0
  %1229 = vdwg.mxu0
  %v1230 = vmax.f32 %v1212, 0.0
  %v1231 = vmax.f32 %v1217, 0.0
  %v1232 = vmax.f32 %v1222, 0.0
  %v1233 = vmax.f32 %v1227, 0.0
  %vm1234 = vcmp.ge.s32.totalorder %v202, 4
  %vm1235 = vcmp.ge.s32.totalorder %v203, 4
  %v1236 = vsel %vm1234, 1, 0
  %v1237 = vsel %vm1235, 1, 0
  %v1238 = vcvt.s32.f32 %v1236
  %v1239 = vcvt.s32.f32 %v1237
  %vm1240 = vcmp.lt.s32.totalorder %v202, 12
  %vm1241 = vcmp.lt.s32.totalorder %v203, 12
  %v1242 = vsel %vm1240, 1, 0
  %v1243 = vsel %vm1241, 1, 0
  %v1244 = vcvt.s32.f32 %v1242
  %v1245 = vcvt.s32.f32 %v1243
  %v1246 = vrot.slane %v1230, 4
  %v1247 = vrot.slane %v1231, 4
  %v1248 = vrot.slane %v1232, 4
  %v1249 = vrot.slane %v1233, 4
  %vm1250 = vcmp.lt.s32.totalorder %v202, 4
  %v1251 = vsel %vm1250, %v1248, %v1249
  %v1252 = vsel %vm1250, %v1247, %v1248
  %v1253 = vsel %vm1250, %v1246, %v1247
  %v1254 = vsel %vm1250, %v1249, %v1246
  %1256 = vset.pattern.permute.xlu0 0
  %1257 = vperm.xlu0 %1256, %v1238
  %v1258 = vpop.permute.xlu0 %1257
  %1261 = vset.pattern.permute.xlu0 0
  %1262 = vperm.xlu0 %1261, %v1239
  %v1263 = vpop.permute.xlu0 %1262
  %v1265 = vmul.f32 %v1254, %v1258
  %v1266 = vmul.f32 %v1253, %v1263
  %v1267 = vmul.f32 %v1252, %v1258
  %v1268 = vmul.f32 %v1251, %v1263
  %1270 = vset.pattern.permute.xlu0 0
  %1271 = vperm.xlu0 %1270, %v1244
  %v1272 = vpop.permute.xlu0 %1271
  %1275 = vset.pattern.permute.xlu0 0
  %1276 = vperm.xlu0 %1275, %v1245
  %v1277 = vpop.permute.xlu0 %1276
  %v1279 = vmul.f32 %v1253, %v1272
  %v1280 = vmul.f32 %v1252, %v1277
  %v1281 = vmul.f32 %v1251, %v1272
  %v1282 = vmul.f32 %v1254, %v1277
  %1287 = vrot.lane.b32.xlu0 %v1230, 16
  %v1288 = vpop.permute.xlu0 %1287
  %1289 = vrot.lane.b32.xlu0 %v1231, 16
  %v1290 = vpop.permute.xlu0 %1289
  %1291 = vrot.lane.b32.xlu0 %v1232, 16
  %v1292 = vpop.permute.xlu0 %1291
  %1293 = vrot.lane.b32.xlu0 %v1233, 16
  %v1294 = vpop.permute.xlu0 %1293
  %1303 = vrot.lane.b32.xlu0 %v1279, 32
  %v1304 = vpop.permute.xlu0 %1303
  %1305 = vrot.lane.b32.xlu0 %v1280, 32
  %v1306 = vpop.permute.xlu0 %1305
  %1307 = vrot.lane.b32.xlu0 %v1281, 32
  %v1308 = vpop.permute.xlu0 %1307
  %1309 = vrot.lane.b32.xlu0 %v1282, 32
  %v1310 = vpop.permute.xlu0 %1309
  %v1315 = vsel %vm424, %v1265, %v1288
  %v1316 = vsel %vm424, %v1266, %v1290
  %v1317 = vsel %vm424, %v1267, %v1292
  %v1318 = vsel %vm424, %v1268, %v1294
  %v1319 = vsel %vm232, %v1315, %v1304
  %v1320 = vsel %vm232, %v1316, %v1306
  %v1321 = vsel %vm232, %v1317, %v1308
  %v1322 = vsel %vm232, %v1318, %v1310
  %s1323 = scalar_lea.vmem %s4, 96
  %v1324 = vld [vmem:[%s1323] sm:$0xff]
  %v1325 = vld [vmem:[%s1323 + $0x8] sm:$0xff]
  %v1326 = vld [vmem:[%s1323 + $0x10] sm:$0xff]
  %v1327 = vld [vmem:[%s1323 + $0x18] sm:$0xff]
  %v1328 = vld [vmem:[%s1323 + $0x20] sm:$0xff]
  %v1329 = vld [vmem:[%s1323 + $0x28] sm:$0xff]
  %1330 = vrot.lane.b32.xlu0 %v1108, 48
  %v1331 = vpop.permute.xlu0 %1330
  %v1334 = vsel %vm442, %v1319, 0
  %v1337 = vsel %vm442, %v1320, 0
  %v1340 = vsel %vm442, %v1321, 0
  %v1343 = vsel %vm442, %v1322, 0
  %1345 = vmatprep.subr.mxu0 0.0
  %1346 = vmatpush1.msra.mxu0 %v1324
  %1347 = vmatprep.subr.mxu0 0.0
  %1348 = vmatpush1.msra.mxu0 %v1325
  %1349 = vmatprep.subr.mxu0 0.0
  %1350 = vmatpush1.msra.mxu0 %v1326
  %1351 = vmatprep.subr.mxu0 0.0
  %1352 = vmatpush1.msra.mxu0 %v1327
  %1353 = vmatprep.subr.mxu0 0.0
  %1354 = vmatpush1.msra.mxu0 %v1328
  %1355 = vmatprep.subr.mxu0 0.0
  %1356 = vmatpush1.msra.mxu0 %v1329
  %1357 = vmatprep.subr.mxu0 0.0
  %1358 = vmatpush1.msra.mxu0 0.0
  %1359 = vmatprep.subr.mxu0 0.0
  %1360 = vmatpush1.msra.mxu0 0.0
  %1361 = vmatprep.subr.mxu0 0.0
  %1362 = vmatpush1.msra.mxu0 0.0
  %1363 = vmatprep.subr.mxu0 0.0
  %1364 = vmatpush1.msra.mxu0 0.0
  %1365 = vmatprep.subr.mxu0 0.0
  %1366 = vmatpush1.msra.mxu0 0.0
  %1367 = vmatprep.subr.mxu0 0.0
  %1368 = vmatpush1.msra.mxu0 0.0
  %1369 = vmatprep.subr.mxu0 0.0
  %1370 = vmatpush1.msra.mxu0 0.0
  %1371 = vmatprep.subr.mxu0 0.0
  %1372 = vmatpush1.msra.mxu0 0.0
  %1373 = vmatprep.subr.mxu0 0.0
  %1374 = vmatpush1.msra.mxu0 0.0
  %1375 = vmatprep.subr.mxu0 0.0
  %1376 = vmatpush1.msra.mxu0 0.0
  %1377 = vmatprep.subr.mxu0 0.0
  %1378 = vmatpush1.msra.mxu0 0.0
  %1379 = vmatprep.subr.mxu0 0.0
  %1380 = vmatpush1.msra.mxu0 0.0
  %1381 = vmatprep.subr.mxu0 0.0
  %1382 = vmatpush1.msra.mxu0 0.0
  %1383 = vmatprep.subr.mxu0 0.0
  %1384 = vmatpush1.msra.mxu0 0.0
  %1385 = vmatprep.subr.mxu0 0.0
  %1386 = vmatpush1.msra.mxu0 0.0
  %1387 = vmatprep.subr.mxu0 0.0
  %1388 = vmatpush1.msra.mxu0 0.0
  %1389 = vmatprep.subr.mxu0 0.0
  %1390 = vmatpush1.msra.mxu0 0.0
  %1391 = vmatprep.subr.mxu0 0.0
  %1392 = vmatpush1.msra.mxu0 0.0
  %1393 = vmatprep.subr.mxu0 0.0
  %1394 = vmatpush1.msra.mxu0 0.0
  %1395 = vmatprep.subr.mxu0 0.0
  %1396 = vmatpush1.msra.mxu0 0.0
  %1397 = vmatprep.subr.mxu0 0.0
  %1398 = vmatpush1.msra.mxu0 0.0
  %1399 = vmatprep.subr.mxu0 0.0
  %1400 = vmatpush1.msra.mxu0 0.0
  %1401 = vmatprep.subr.mxu0 0.0
  %1402 = vmatpush1.msra.mxu0 0.0
  %1403 = vmatprep.subr.mxu0 0.0
  %1404 = vmatpush1.msra.mxu0 0.0
  %1405 = vmatprep.subr.mxu0 0.0
  %1406 = vmatpush1.msra.mxu0 0.0
  %1407 = vmatprep.subr.mxu0 0.0
  %1408 = vmatpush1.msra.mxu0 0.0
  %1409 = vmatprep.mubr.f32.mxu0 0.0
  %1410 = vmatmul.mubr.f32.gmra.mrb[0].mxu0 %v1334
  %v1411 = vpop.f32.mrb[0].mxu0
  %v1412 = vadd.f32 %v1331, %v1411
  %v1413 = vpop.f32.mrb[0].mxu0
  %1414 = vmatprep.mubr.f32.mxu0 0.0
  %1415 = vmatmul.mubr.f32.gmra.mrb[0].mxu0 %v1337
  %v1416 = vpop.f32.mrb[0].mxu0
  %v1417 = vadd.f32 %v1331, %v1416
  %v1418 = vpop.f32.mrb[0].mxu0
  %1419 = vmatprep.mubr.f32.mxu0 0.0
  %1420 = vmatmul.mubr.f32.gmra.mrb[0].mxu0 %v1340
  %v1421 = vpop.f32.mrb[0].mxu0
  %v1422 = vadd.f32 %v1331, %v1421
  %v1423 = vpop.f32.mrb[0].mxu0
  %1424 = vmatprep.mubr.f32.mxu0 0.0
  %1425 = vmatmul.mubr.f32.gmra.mrb[0].mxu0 %v1343
  %v1426 = vpop.f32.mrb[0].mxu0
  %v1427 = vadd.f32 %v1331, %v1426
  %v1428 = vpop.f32.mrb[0].mxu0
  %1429 = vdwg.mxu0
  %v1430 = vmax.f32 %v1412, 0.0
  %v1431 = vmax.f32 %v1417, 0.0
  %v1432 = vmax.f32 %v1422, 0.0
  %v1433 = vmax.f32 %v1427, 0.0
  %s1434 = scalar_lea.vmem %s5, 32
  %v1435 = vld [vmem:[%s1434] sm:$0xff]
  %v1436 = vld [vmem:[%s1434 + $0x8] sm:$0xff]
  %v1438 = vsel %vm424, %v1430, 0
  %v1441 = vsel %vm424, %v1431, 0
  %v1444 = vsel %vm424, %v1432, 0
  %v1447 = vsel %vm424, %v1433, 0
  %1449 = vmatprep.subr.mxu0 0.0
  %1450 = vmatpush1.msra.mxu0 %v1435
  %1451 = vmatprep.subr.mxu0 0.0
  %1452 = vmatpush1.msra.mxu0 %v1436
  %1453 = vmatprep.subr.mxu0 0.0
  %1454 = vmatpush1.msra.mxu0 0.0
  %1455 = vmatprep.subr.mxu0 0.0
  %1456 = vmatpush1.msra.mxu0 0.0
  %1457 = vmatprep.subr.mxu0 0.0
  %1458 = vmatpush1.msra.mxu0 0.0
  %1459 = vmatprep.subr.mxu0 0.0
  %1460 = vmatpush1.msra.mxu0 0.0
  %1461 = vmatprep.subr.mxu0 0.0
  %1462 = vmatpush1.msra.mxu0 0.0
  %1463 = vmatprep.subr.mxu0 0.0
  %1464 = vmatpush1.msra.mxu0 0.0
  %1465 = vmatprep.subr.mxu0 0.0
  %1466 = vmatpush1.msra.mxu0 0.0
  %1467 = vmatprep.subr.mxu0 0.0
  %1468 = vmatpush1.msra.mxu0 0.0
  %1469 = vmatprep.subr.mxu0 0.0
  %1470 = vmatpush1.msra.mxu0 0.0
  %1471 = vmatprep.subr.mxu0 0.0
  %1472 = vmatpush1.msra.mxu0 0.0
  %1473 = vmatprep.subr.mxu0 0.0
  %1474 = vmatpush1.msra.mxu0 0.0
  %1475 = vmatprep.subr.mxu0 0.0
  %1476 = vmatpush1.msra.mxu0 0.0
  %1477 = vmatprep.subr.mxu0 0.0
  %1478 = vmatpush1.msra.mxu0 0.0
  %1479 = vmatprep.subr.mxu0 0.0
  %1480 = vmatpush1.msra.mxu0 0.0
  %1481 = vmatprep.subr.mxu0 0.0
  %1482 = vmatpush1.msra.mxu0 0.0
  %1483 = vmatprep.subr.mxu0 0.0
  %1484 = vmatpush1.msra.mxu0 0.0
  %1485 = vmatprep.subr.mxu0 0.0
  %1486 = vmatpush1.msra.mxu0 0.0
  %1487 = vmatprep.subr.mxu0 0.0
  %1488 = vmatpush1.msra.mxu0 0.0
  %1489 = vmatprep.subr.mxu0 0.0
  %1490 = vmatpush1.msra.mxu0 0.0
  %1491 = vmatprep.subr.mxu0 0.0
  %1492 = vmatpush1.msra.mxu0 0.0
  %1493 = vmatprep.subr.mxu0 0.0
  %1494 = vmatpush1.msra.mxu0 0.0
  %1495 = vmatprep.subr.mxu0 0.0
  %1496 = vmatpush1.msra.mxu0 0.0
  %1497 = vmatprep.subr.mxu0 0.0
  %1498 = vmatpush1.msra.mxu0 0.0
  %1499 = vmatprep.subr.mxu0 0.0
  %1500 = vmatpush1.msra.mxu0 0.0
  %1501 = vmatprep.subr.mxu0 0.0
  %1502 = vmatpush1.msra.mxu0 0.0
  %1503 = vmatprep.subr.mxu0 0.0
  %1504 = vmatpush1.msra.mxu0 0.0
  %1505 = vmatprep.subr.mxu0 0.0
  %1506 = vmatpush1.msra.mxu0 0.0
  %1507 = vmatprep.subr.mxu0 0.0
  %1508 = vmatpush1.msra.mxu0 0.0
  %1509 = vmatprep.subr.mxu0 0.0
  %1510 = vmatpush1.msra.mxu0 0.0
  %1511 = vmatprep.subr.mxu0 0.0
  %1512 = vmatpush1.msra.mxu0 0.0
  %1513 = vmatprep.mubr.f32.mxu0 0.0
  %1514 = vmatmul.mubr.f32.gmra.mrb[0].mxu0 %v1438
  %v1515 = vpop.f32.mrb[0].mxu0
  %v1516 = vadd.f32 0.0, %v1515
  %v1517 = vpop.f32.mrb[0].mxu0
  %1518 = vmatprep.mubr.f32.mxu0 0.0
  %1519 = vmatmul.mubr.f32.gmra.mrb[0].mxu0 %v1441
  %v1520 = vpop.f32.mrb[0].mxu0
  %v1521 = vadd.f32 0.0, %v1520
  %v1522 = vpop.f32.mrb[0].mxu0
  %1523 = vmatprep.mubr.f32.mxu0 0.0
  %1524 = vmatmul.mubr.f32.gmra.mrb[0].mxu0 %v1444
  %v1525 = vpop.f32.mrb[0].mxu0
  %v1526 = vadd.f32 0.0, %v1525
  %v1527 = vpop.f32.mrb[0].mxu0
  %1528 = vmatprep.mubr.f32.mxu0 0.0
  %1529 = vmatmul.mubr.f32.gmra.mrb[0].mxu0 %v1447
  %v1530 = vpop.f32.mrb[0].mxu0
  %v1531 = vadd.f32 0.0, %v1530
  %v1532 = vpop.f32.mrb[0].mxu0
  %1533 = vdwg.mxu0
  %v1534 = vadd.f32 %v1100, %v1516
  %v1535 = vadd.f32 %v1101, %v1521
  %v1536 = vadd.f32 %v1102, %v1526
  %v1537 = vadd.f32 %v1103, %v1531
  %1538 = vrot.lane.b32.xlu0 %v1108, 32
  %v1539 = vpop.permute.xlu0 %1538
  %v1541 = vadd.f32 %v1534, %v1539
  %v1542 = vadd.f32 %v1535, %v1539
  %v1543 = vadd.f32 %v1536, %v1539
  %v1544 = vadd.f32 %v1537, %v1539
  %v1545 = vld [vmem:[%s6 + $0x3] sm:$0x1]
  %v1546 = vlaneseq
  %v1547 = vshrl.u32 %v1546, 7
  %v1548 = vsub.s32 0, %v1547
  %v1549 = vrot.slane %v1545, %v1548
  %v1550 = vmul.f32 %v1541, %v1549
  %v1551 = vmul.f32 %v1542, %v1549
  %v1552 = vmul.f32 %v1543, %v1549
  %v1553 = vmul.f32 %v1544, %v1549
  %1555 = vrot.lane.b32.xlu0 %v1549, 96
  %v1556 = vpop.permute.xlu0 %1555
  %v1558 = vadd.f32 %v1550, %v1556
  %v1559 = vadd.f32 %v1551, %v1556
  %v1560 = vadd.f32 %v1552, %v1556
  %v1561 = vadd.f32 %v1553, %v1556
  %v1562 = vmax.f32 %v1558, 0.0
  %v1563 = vmax.f32 %v1559, 0.0
  %v1564 = vmax.f32 %v1560, 0.0
  %v1565 = vmax.f32 %v1561, 0.0
  %s1566 = scalar_lea.vmem %s3, 96
  %v1567 = vld [vmem:[%s1566] sm:$0xff]
  %v1568 = vld [vmem:[%s1566 + $0x8] sm:$0xff]
  %v1569 = vld [vmem:[%s1566 + $0x10] sm:$0xff]
  %v1570 = vld [vmem:[%s1566 + $0x18] sm:$0xff]
  %1571 = vrot.lane.b32.xlu0 %v1549, 64
  %v1572 = vpop.permute.xlu0 %1571
  %v1575 = vsel %vm232, %v1562, 0
  %v1578 = vsel %vm232, %v1563, 0
  %v1581 = vsel %vm232, %v1564, 0
  %v1584 = vsel %vm232, %v1565, 0
  %1586 = vmatprep.subr.mxu0 0.0
  %1587 = vmatpush1.msra.mxu0 %v1567
  %1588 = vmatprep.subr.mxu0 0.0
  %1589 = vmatpush1.msra.mxu0 %v1568
  %1590 = vmatprep.subr.mxu0 0.0
  %1591 = vmatpush1.msra.mxu0 %v1569
  %1592 = vmatprep.subr.mxu0 0.0
  %1593 = vmatpush1.msra.mxu0 %v1570
  %1594 = vmatprep.subr.mxu0 0.0
  %1595 = vmatpush1.msra.mxu0 0.0
  %1596 = vmatprep.subr.mxu0 0.0
  %1597 = vmatpush1.msra.mxu0 0.0
  %1598 = vmatprep.subr.mxu0 0.0
  %1599 = vmatpush1.msra.mxu0 0.0
  %1600 = vmatprep.subr.mxu0 0.0
  %1601 = vmatpush1.msra.mxu0 0.0
  %1602 = vmatprep.subr.mxu0 0.0
  %1603 = vmatpush1.msra.mxu0 0.0
  %1604 = vmatprep.subr.mxu0 0.0
  %1605 = vmatpush1.msra.mxu0 0.0
  %1606 = vmatprep.subr.mxu0 0.0
  %1607 = vmatpush1.msra.mxu0 0.0
  %1608 = vmatprep.subr.mxu0 0.0
  %1609 = vmatpush1.msra.mxu0 0.0
  %1610 = vmatprep.subr.mxu0 0.0
  %1611 = vmatpush1.msra.mxu0 0.0
  %1612 = vmatprep.subr.mxu0 0.0
  %1613 = vmatpush1.msra.mxu0 0.0
  %1614 = vmatprep.subr.mxu0 0.0
  %1615 = vmatpush1.msra.mxu0 0.0
  %1616 = vmatprep.subr.mxu0 0.0
  %1617 = vmatpush1.msra.mxu0 0.0
  %1618 = vmatprep.subr.mxu0 0.0
  %1619 = vmatpush1.msra.mxu0 0.0
  %1620 = vmatprep.subr.mxu0 0.0
  %1621 = vmatpush1.msra.mxu0 0.0
  %1622 = vmatprep.subr.mxu0 0.0
  %1623 = vmatpush1.msra.mxu0 0.0
  %1624 = vmatprep.subr.mxu0 0.0
  %1625 = vmatpush1.msra.mxu0 0.0
  %1626 = vmatprep.subr.mxu0 0.0
  %1627 = vmatpush1.msra.mxu0 0.0
  %1628 = vmatprep.subr.mxu0 0.0
  %1629 = vmatpush1.msra.mxu0 0.0
  %1630 = vmatprep.subr.mxu0 0.0
  %1631 = vmatpush1.msra.mxu0 0.0
  %1632 = vmatprep.subr.mxu0 0.0
  %1633 = vmatpush1.msra.mxu0 0.0
  %1634 = vmatprep.subr.mxu0 0.0
  %1635 = vmatpush1.msra.mxu0 0.0
  %1636 = vmatprep.subr.mxu0 0.0
  %1637 = vmatpush1.msra.mxu0 0.0
  %1638 = vmatprep.subr.mxu0 0.0
  %1639 = vmatpush1.msra.mxu0 0.0
  %1640 = vmatprep.subr.mxu0 0.0
  %1641 = vmatpush1.msra.mxu0 0.0
  %1642 = vmatprep.subr.mxu0 0.0
  %1643 = vmatpush1.msra.mxu0 0.0
  %1644 = vmatprep.subr.mxu0 0.0
  %1645 = vmatpush1.msra.mxu0 0.0
  %1646 = vmatprep.subr.mxu0 0.0
  %1647 = vmatpush1.msra.mxu0 0.0
  %1648 = vmatprep.subr.mxu0 0.0
  %1649 = vmatpush1.msra.mxu0 0.0
  %1650 = vmatprep.mubr.f32.mxu0 0.0
  %1651 = vmatmul.mubr.f32.gmra.mrb[0].mxu0 %v1575
  %v1652 = vpop.f32.mrb[0].mxu0
  %v1653 = vadd.f32 %v1572, %v1652
  %v1654 = vpop.f32.mrb[0].mxu0
  %1655 = vmatprep.mubr.f32.mxu0 0.0
  %1656 = vmatmul.mubr.f32.gmra.mrb[0].mxu0 %v1578
  %v1657 = vpop.f32.mrb[0].mxu0
  %v1658 = vadd.f32 %v1572, %v1657
  %v1659 = vpop.f32.mrb[0].mxu0
  %1660 = vmatprep.mubr.f32.mxu0 0.0
  %1661 = vmatmul.mubr.f32.gmra.mrb[0].mxu0 %v1581
  %v1662 = vpop.f32.mrb[0].mxu0
  %v1663 = vadd.f32 %v1572, %v1662
  %v1664 = vpop.f32.mrb[0].mxu0
  %1665 = vmatprep.mubr.f32.mxu0 0.0
  %1666 = vmatmul.mubr.f32.gmra.mrb[0].mxu0 %v1584
  %v1667 = vpop.f32.mrb[0].mxu0
  %v1668 = vadd.f32 %v1572, %v1667
  %v1669 = vpop.f32.mrb[0].mxu0
  %1670 = vdwg.mxu0
  %v1671 = vmax.f32 %v1653, 0.0
  %v1672 = vmax.f32 %v1658, 0.0
  %v1673 = vmax.f32 %v1663, 0.0
  %v1674 = vmax.f32 %v1668, 0.0
  %v1675 = vrot.slane %v1671, 4
  %v1676 = vrot.slane %v1672, 4
  %v1677 = vrot.slane %v1673, 4
  %v1678 = vrot.slane %v1674, 4
  %v1679 = vsel %vm1250, %v1677, %v1678
  %v1680 = vsel %vm1250, %v1676, %v1677
  %v1681 = vsel %vm1250, %v1675, %v1676
  %v1682 = vsel %vm1250, %v1678, %v1675
  %v1683 = vmul.f32 %v1682, %v1258
  %v1684 = vmul.f32 %v1681, %v1263
  %v1685 = vmul.f32 %v1680, %v1258
  %v1686 = vmul.f32 %v1679, %v1263
  %v1687 = vmul.f32 %v1681, %v1272
  %v1688 = vmul.f32 %v1680, %v1277
  %v1689 = vmul.f32 %v1679, %v1272
  %v1690 = vmul.f32 %v1682, %v1277
  %1695 = vrot.lane.b32.xlu0 %v1671, 16
  %v1696 = vpop.permute.xlu0 %1695
  %1697 = vrot.lane.b32.xlu0 %v1672, 16
  %v1698 = vpop.permute.xlu0 %1697
  %1699 = vrot.lane.b32.xlu0 %v1673, 16
  %v1700 = vpop.permute.xlu0 %1699
  %1701 = vrot.lane.b32.xlu0 %v1674, 16
  %v1702 = vpop.permute.xlu0 %1701
  %1711 = vrot.lane.b32.xlu0 %v1687, 32
  %v1712 = vpop.permute.xlu0 %1711
  %1713 = vrot.lane.b32.xlu0 %v1688, 32
  %v1714 = vpop.permute.xlu0 %1713
  %1715 = vrot.lane.b32.xlu0 %v1689, 32
  %v1716 = vpop.permute.xlu0 %1715
  %1717 = vrot.lane.b32.xlu0 %v1690, 32
  %v1718 = vpop.permute.xlu0 %1717
  %v1723 = vsel %vm424, %v1683, %v1696
  %v1724 = vsel %vm424, %v1684, %v1698
  %v1725 = vsel %vm424, %v1685, %v1700
  %v1726 = vsel %vm424, %v1686, %v1702
  %v1727 = vsel %vm232, %v1723, %v1712
  %v1728 = vsel %vm232, %v1724, %v1714
  %v1729 = vsel %vm232, %v1725, %v1716
  %v1730 = vsel %vm232, %v1726, %v1718
  %s1731 = scalar_lea.vmem %s4, 144
  %v1732 = vld [vmem:[%s1731] sm:$0xff]
  %v1733 = vld [vmem:[%s1731 + $0x8] sm:$0xff]
  %v1734 = vld [vmem:[%s1731 + $0x10] sm:$0xff]
  %v1735 = vld [vmem:[%s1731 + $0x18] sm:$0xff]
  %v1736 = vld [vmem:[%s1731 + $0x20] sm:$0xff]
  %v1737 = vld [vmem:[%s1731 + $0x28] sm:$0xff]
  %1738 = vrot.lane.b32.xlu0 %v1549, 48
  %v1739 = vpop.permute.xlu0 %1738
  %v1742 = vsel %vm442, %v1727, 0
  %v1745 = vsel %vm442, %v1728, 0
  %v1748 = vsel %vm442, %v1729, 0
  %v1751 = vsel %vm442, %v1730, 0
  %1753 = vmatprep.subr.mxu0 0.0
  %1754 = vmatpush1.msra.mxu0 %v1732
  %1755 = vmatprep.subr.mxu0 0.0
  %1756 = vmatpush1.msra.mxu0 %v1733
  %1757 = vmatprep.subr.mxu0 0.0
  %1758 = vmatpush1.msra.mxu0 %v1734
  %1759 = vmatprep.subr.mxu0 0.0
  %1760 = vmatpush1.msra.mxu0 %v1735
  %1761 = vmatprep.subr.mxu0 0.0
  %1762 = vmatpush1.msra.mxu0 %v1736
  %1763 = vmatprep.subr.mxu0 0.0
  %1764 = vmatpush1.msra.mxu0 %v1737
  %1765 = vmatprep.subr.mxu0 0.0
  %1766 = vmatpush1.msra.mxu0 0.0
  %1767 = vmatprep.subr.mxu0 0.0
  %1768 = vmatpush1.msra.mxu0 0.0
  %1769 = vmatprep.subr.mxu0 0.0
  %1770 = vmatpush1.msra.mxu0 0.0
  %1771 = vmatprep.subr.mxu0 0.0
  %1772 = vmatpush1.msra.mxu0 0.0
  %1773 = vmatprep.subr.mxu0 0.0
  %1774 = vmatpush1.msra.mxu0 0.0
  %1775 = vmatprep.subr.mxu0 0.0
  %1776 = vmatpush1.msra.mxu0 0.0
  %1777 = vmatprep.subr.mxu0 0.0
  %1778 = vmatpush1.msra.mxu0 0.0
  %1779 = vmatprep.subr.mxu0 0.0
  %1780 = vmatpush1.msra.mxu0 0.0
  %1781 = vmatprep.subr.mxu0 0.0
  %1782 = vmatpush1.msra.mxu0 0.0
  %1783 = vmatprep.subr.mxu0 0.0
  %1784 = vmatpush1.msra.mxu0 0.0
  %1785 = vmatprep.subr.mxu0 0.0
  %1786 = vmatpush1.msra.mxu0 0.0
  %1787 = vmatprep.subr.mxu0 0.0
  %1788 = vmatpush1.msra.mxu0 0.0
  %1789 = vmatprep.subr.mxu0 0.0
  %1790 = vmatpush1.msra.mxu0 0.0
  %1791 = vmatprep.subr.mxu0 0.0
  %1792 = vmatpush1.msra.mxu0 0.0
  %1793 = vmatprep.subr.mxu0 0.0
  %1794 = vmatpush1.msra.mxu0 0.0
  %1795 = vmatprep.subr.mxu0 0.0
  %1796 = vmatpush1.msra.mxu0 0.0
  %1797 = vmatprep.subr.mxu0 0.0
  %1798 = vmatpush1.msra.mxu0 0.0
  %1799 = vmatprep.subr.mxu0 0.0
  %1800 = vmatpush1.msra.mxu0 0.0
  %1801 = vmatprep.subr.mxu0 0.0
  %1802 = vmatpush1.msra.mxu0 0.0
  %1803 = vmatprep.subr.mxu0 0.0
  %1804 = vmatpush1.msra.mxu0 0.0
  %1805 = vmatprep.subr.mxu0 0.0
  %1806 = vmatpush1.msra.mxu0 0.0
  %1807 = vmatprep.subr.mxu0 0.0
  %1808 = vmatpush1.msra.mxu0 0.0
  %1809 = vmatprep.subr.mxu0 0.0
  %1810 = vmatpush1.msra.mxu0 0.0
  %1811 = vmatprep.subr.mxu0 0.0
  %1812 = vmatpush1.msra.mxu0 0.0
  %1813 = vmatprep.subr.mxu0 0.0
  %1814 = vmatpush1.msra.mxu0 0.0
  %1815 = vmatprep.subr.mxu0 0.0
  %1816 = vmatpush1.msra.mxu0 0.0
  %1817 = vmatprep.mubr.f32.mxu0 0.0
  %1818 = vmatmul.mubr.f32.gmra.mrb[0].mxu0 %v1742
  %v1819 = vpop.f32.mrb[0].mxu0
  %v1820 = vadd.f32 %v1739, %v1819
  %v1821 = vpop.f32.mrb[0].mxu0
  %1822 = vmatprep.mubr.f32.mxu0 0.0
  %1823 = vmatmul.mubr.f32.gmra.mrb[0].mxu0 %v1745
  %v1824 = vpop.f32.mrb[0].mxu0
  %v1825 = vadd.f32 %v1739, %v1824
  %v1826 = vpop.f32.mrb[0].mxu0
  %1827 = vmatprep.mubr.f32.mxu0 0.0
  %1828 = vmatmul.mubr.f32.gmra.mrb[0].mxu0 %v1748
  %v1829 = vpop.f32.mrb[0].mxu0
  %v1830 = vadd.f32 %v1739, %v1829
  %v1831 = vpop.f32.mrb[0].mxu0
  %1832 = vmatprep.mubr.f32.mxu0 0.0
  %1833 = vmatmul.mubr.f32.gmra.mrb[0].mxu0 %v1751
  %v1834 = vpop.f32.mrb[0].mxu0
  %v1835 = vadd.f32 %v1739, %v1834
  %v1836 = vpop.f32.mrb[0].mxu0
  %1837 = vdwg.mxu0
  %v1838 = vmax.f32 %v1820, 0.0
  %v1839 = vmax.f32 %v1825, 0.0
  %v1840 = vmax.f32 %v1830, 0.0
  %v1841 = vmax.f32 %v1835, 0.0
  %s1842 = scalar_lea.vmem %s5, 48
  %v1843 = vld [vmem:[%s1842] sm:$0xff]
  %v1844 = vld [vmem:[%s1842 + $0x8] sm:$0xff]
  %v1846 = vsel %vm424, %v1838, 0
  %v1849 = vsel %vm424, %v1839, 0
  %v1852 = vsel %vm424, %v1840, 0
  %v1855 = vsel %vm424, %v1841, 0
  %1857 = vmatprep.subr.mxu0 0.0
  %1858 = vmatpush1.msra.mxu0 %v1843
  %1859 = vmatprep.subr.mxu0 0.0
  %1860 = vmatpush1.msra.mxu0 %v1844
  %1861 = vmatprep.subr.mxu0 0.0
  %1862 = vmatpush1.msra.mxu0 0.0
  %1863 = vmatprep.subr.mxu0 0.0
  %1864 = vmatpush1.msra.mxu0 0.0
  %1865 = vmatprep.subr.mxu0 0.0
  %1866 = vmatpush1.msra.mxu0 0.0
  %1867 = vmatprep.subr.mxu0 0.0
  %1868 = vmatpush1.msra.mxu0 0.0
  %1869 = vmatprep.subr.mxu0 0.0
  %1870 = vmatpush1.msra.mxu0 0.0
  %1871 = vmatprep.subr.mxu0 0.0
  %1872 = vmatpush1.msra.mxu0 0.0
  %1873 = vmatprep.subr.mxu0 0.0
  %1874 = vmatpush1.msra.mxu0 0.0
  %1875 = vmatprep.subr.mxu0 0.0
  %1876 = vmatpush1.msra.mxu0 0.0
  %1877 = vmatprep.subr.mxu0 0.0
  %1878 = vmatpush1.msra.mxu0 0.0
  %1879 = vmatprep.subr.mxu0 0.0
  %1880 = vmatpush1.msra.mxu0 0.0
  %1881 = vmatprep.subr.mxu0 0.0
  %1882 = vmatpush1.msra.mxu0 0.0
  %1883 = vmatprep.subr.mxu0 0.0
  %1884 = vmatpush1.msra.mxu0 0.0
  %1885 = vmatprep.subr.mxu0 0.0
  %1886 = vmatpush1.msra.mxu0 0.0
  %1887 = vmatprep.subr.mxu0 0.0
  %1888 = vmatpush1.msra.mxu0 0.0
  %1889 = vmatprep.subr.mxu0 0.0
  %1890 = vmatpush1.msra.mxu0 0.0
  %1891 = vmatprep.subr.mxu0 0.0
  %1892 = vmatpush1.msra.mxu0 0.0
  %1893 = vmatprep.subr.mxu0 0.0
  %1894 = vmatpush1.msra.mxu0 0.0
  %1895 = vmatprep.subr.mxu0 0.0
  %1896 = vmatpush1.msra.mxu0 0.0
  %1897 = vmatprep.subr.mxu0 0.0
  %1898 = vmatpush1.msra.mxu0 0.0
  %1899 = vmatprep.subr.mxu0 0.0
  %1900 = vmatpush1.msra.mxu0 0.0
  %1901 = vmatprep.subr.mxu0 0.0
  %1902 = vmatpush1.msra.mxu0 0.0
  %1903 = vmatprep.subr.mxu0 0.0
  %1904 = vmatpush1.msra.mxu0 0.0
  %1905 = vmatprep.subr.mxu0 0.0
  %1906 = vmatpush1.msra.mxu0 0.0
  %1907 = vmatprep.subr.mxu0 0.0
  %1908 = vmatpush1.msra.mxu0 0.0
  %1909 = vmatprep.subr.mxu0 0.0
  %1910 = vmatpush1.msra.mxu0 0.0
  %1911 = vmatprep.subr.mxu0 0.0
  %1912 = vmatpush1.msra.mxu0 0.0
  %1913 = vmatprep.subr.mxu0 0.0
  %1914 = vmatpush1.msra.mxu0 0.0
  %1915 = vmatprep.subr.mxu0 0.0
  %1916 = vmatpush1.msra.mxu0 0.0
  %1917 = vmatprep.subr.mxu0 0.0
  %1918 = vmatpush1.msra.mxu0 0.0
  %1919 = vmatprep.subr.mxu0 0.0
  %1920 = vmatpush1.msra.mxu0 0.0
  %1921 = vmatprep.mubr.f32.mxu0 0.0
  %1922 = vmatmul.mubr.f32.gmra.mrb[0].mxu0 %v1846
  %v1923 = vpop.f32.mrb[0].mxu0
  %v1924 = vadd.f32 0.0, %v1923
  %v1925 = vpop.f32.mrb[0].mxu0
  %1926 = vmatprep.mubr.f32.mxu0 0.0
  %1927 = vmatmul.mubr.f32.gmra.mrb[0].mxu0 %v1849
  %v1928 = vpop.f32.mrb[0].mxu0
  %v1929 = vadd.f32 0.0, %v1928
  %v1930 = vpop.f32.mrb[0].mxu0
  %1931 = vmatprep.mubr.f32.mxu0 0.0
  %1932 = vmatmul.mubr.f32.gmra.mrb[0].mxu0 %v1852
  %v1933 = vpop.f32.mrb[0].mxu0
  %v1934 = vadd.f32 0.0, %v1933
  %v1935 = vpop.f32.mrb[0].mxu0
  %1936 = vmatprep.mubr.f32.mxu0 0.0
  %1937 = vmatmul.mubr.f32.gmra.mrb[0].mxu0 %v1855
  %v1938 = vpop.f32.mrb[0].mxu0
  %v1939 = vadd.f32 0.0, %v1938
  %v1940 = vpop.f32.mrb[0].mxu0
  %1941 = vdwg.mxu0
  %v1942 = vadd.f32 %v1541, %v1924
  %v1943 = vadd.f32 %v1542, %v1929
  %v1944 = vadd.f32 %v1543, %v1934
  %v1945 = vadd.f32 %v1544, %v1939
  %1946 = vrot.lane.b32.xlu0 %v1549, 32
  %v1947 = vpop.permute.xlu0 %1946
  %v1949 = vadd.f32 %v1942, %v1947
  %v1950 = vadd.f32 %v1943, %v1947
  %v1951 = vadd.f32 %v1944, %v1947
  %v1952 = vadd.f32 %v1945, %v1947
  %v1953 = vld [vmem:[%s8] sm:$0x3]
  %v1954 = vld [vmem:[%s7] sm:$0xff]
  %v1955 = vld [vmem:[%s7 + $0x8] sm:$0xff]
  %v1956 = vld [vmem:[%s7 + $0x10] sm:$0xff]
  %v1957 = vld [vmem:[%s7 + $0x18] sm:$0xff]
  %v1958 = vld [vmem:[%s7 + $0x20] sm:$0xff]
  %v1959 = vld [vmem:[%s7 + $0x28] sm:$0xff]
  %v1960 = vld [vmem:[%s7 + $0x30] sm:$0xff]
  %v1961 = vld [vmem:[%s7 + $0x38] sm:$0xff]
  %v1963 = vsel %vm232, %v1949, 0
  %1965 = vmatprep.subr.mxu0 %v1955
  %1966 = vmatpush1.msra.mxu0 %v1954
  %1967 = vmatprep.subr.mxu0 %v1957
  %1968 = vmatpush1.msra.mxu0 %v1956
  %1969 = vmatprep.subr.mxu0 %v1959
  %1970 = vmatpush1.msra.mxu0 %v1958
  %1971 = vmatprep.subr.mxu0 %v1961
  %1972 = vmatpush1.msra.mxu0 %v1960
  %1973 = vmatprep.subr.mxu0 0.0
  %1974 = vmatpush1.msra.mxu0 0.0
  %1975 = vmatprep.subr.mxu0 0.0
  %1976 = vmatpush1.msra.mxu0 0.0
  %1977 = vmatprep.subr.mxu0 0.0
  %1978 = vmatpush1.msra.mxu0 0.0
  %1979 = vmatprep.subr.mxu0 0.0
  %1980 = vmatpush1.msra.mxu0 0.0
  %1981 = vmatprep.subr.mxu0 0.0
  %1982 = vmatpush1.msra.mxu0 0.0
  %1983 = vmatprep.subr.mxu0 0.0
  %1984 = vmatpush1.msra.mxu0 0.0
  %1985 = vmatprep.subr.mxu0 0.0
  %1986 = vmatpush1.msra.mxu0 0.0
  %1987 = vmatprep.subr.mxu0 0.0
  %1988 = vmatpush1.msra.mxu0 0.0
  %1989 = vmatprep.subr.mxu0 0.0
  %1990 = vmatpush1.msra.mxu0 0.0
  %1991 = vmatprep.subr.mxu0 0.0
  %1992 = vmatpush1.msra.mxu0 0.0
  %1993 = vmatprep.subr.mxu0 0.0
  %1994 = vmatpush1.msra.mxu0 0.0
  %1995 = vmatprep.subr.mxu0 0.0
  %1996 = vmatpush1.msra.mxu0 0.0
  %1997 = vmatprep.subr.mxu0 0.0
  %1998 = vmatpush1.msra.mxu0 0.0
  %1999 = vmatprep.subr.mxu0 0.0
  %2000 = vmatpush1.msra.mxu0 0.0
  %2001 = vmatprep.subr.mxu0 0.0
  %2002 = vmatpush1.msra.mxu0 0.0
  %2003 = vmatprep.subr.mxu0 0.0
  %2004 = vmatpush1.msra.mxu0 0.0
  %2005 = vmatprep.subr.mxu0 0.0
  %2006 = vmatpush1.msra.mxu0 0.0
  %2007 = vmatprep.subr.mxu0 0.0
  %2008 = vmatpush1.msra.mxu0 0.0
  %2009 = vmatprep.subr.mxu0 0.0
  %2010 = vmatpush1.msra.mxu0 0.0
  %2011 = vmatprep.subr.mxu0 0.0
  %2012 = vmatpush1.msra.mxu0 0.0
  %2013 = vmatprep.subr.mxu0 0.0
  %2014 = vmatpush1.msra.mxu0 0.0
  %2015 = vmatprep.subr.mxu0 0.0
  %2016 = vmatpush1.msra.mxu0 0.0
  %2017 = vmatprep.subr.mxu0 0.0
  %2018 = vmatpush1.msra.mxu0 0.0
  %2019 = vmatprep.subr.mxu0 0.0
  %2020 = vmatpush1.msra.mxu0 0.0
  %2021 = vmatprep.subr.mxu0 0.0
  %2022 = vmatpush1.msra.mxu0 0.0
  %2023 = vmatprep.subr.mxu0 0.0
  %2024 = vmatpush1.msra.mxu0 0.0
  %2025 = vmatprep.subr.mxu0 0.0
  %2026 = vmatpush1.msra.mxu0 0.0
  %2027 = vmatprep.subr.mxu0 0.0
  %2028 = vmatpush1.msra.mxu0 0.0
  %2029 = vmatprep.mubr.f32.mxu0 0.0
  %2030 = vmatmul.mubr.f32.gmra.mrb[0].mxu0 %v1963
  %v2031 = vpop.f32.mrb[0].mxu0
  %v2032 = vadd.f32 0.0, %v2031
  %v2033 = vpop.f32.mrb[0].mxu0
  %v2034 = vadd.f32 0.0, %v2033
  %2035 = vdwg.mxu0
  %v2038 = vcombine.low %v2032, %v2034
  %v2040 = vunpack.c.l.s4 1966171168
  %v2041 = vunpack.c.0.s8 %v2040
  %v2042 = vlaneseq
  %v2043 = vshrl.u32 %v2042, 7
  %v2044 = vsub.s32 %v2041, %v2043
  %v2045 = vrot.slane %v2038, %v2044
  %v2047 = vunpack.c.l.s4 1966171168
  %v2048 = vunpack.c.0.s8 %v2047
  %v2049 = vlaneseq
  %v2050 = vshrl.u32 %v2049, 7
  %v2051 = vsub.s32 %v2048, %v2050
  %v2052 = vrot.slane %v2045, %v2051
  %v2054 = vadd.f32 %v1953, %v2052
  %v2056 = vsel %vm232, %v1951, 0
  %2058 = vmatprep.subr.mxu0 %v1955
  %2059 = vmatpush1.msra.mxu0 %v1954
  %2060 = vmatprep.subr.mxu0 %v1957
  %2061 = vmatpush1.msra.mxu0 %v1956
  %2062 = vmatprep.subr.mxu0 %v1959
  %2063 = vmatpush1.msra.mxu0 %v1958
  %2064 = vmatprep.subr.mxu0 %v1961
  %2065 = vmatpush1.msra.mxu0 %v1960
  %2066 = vmatprep.subr.mxu0 0.0
  %2067 = vmatpush1.msra.mxu0 0.0
  %2068 = vmatprep.subr.mxu0 0.0
  %2069 = vmatpush1.msra.mxu0 0.0
  %2070 = vmatprep.subr.mxu0 0.0
  %2071 = vmatpush1.msra.mxu0 0.0
  %2072 = vmatprep.subr.mxu0 0.0
  %2073 = vmatpush1.msra.mxu0 0.0
  %2074 = vmatprep.subr.mxu0 0.0
  %2075 = vmatpush1.msra.mxu0 0.0
  %2076 = vmatprep.subr.mxu0 0.0
  %2077 = vmatpush1.msra.mxu0 0.0
  %2078 = vmatprep.subr.mxu0 0.0
  %2079 = vmatpush1.msra.mxu0 0.0
  %2080 = vmatprep.subr.mxu0 0.0
  %2081 = vmatpush1.msra.mxu0 0.0
  %2082 = vmatprep.subr.mxu0 0.0
  %2083 = vmatpush1.msra.mxu0 0.0
  %2084 = vmatprep.subr.mxu0 0.0
  %2085 = vmatpush1.msra.mxu0 0.0
  %2086 = vmatprep.subr.mxu0 0.0
  %2087 = vmatpush1.msra.mxu0 0.0
  %2088 = vmatprep.subr.mxu0 0.0
  %2089 = vmatpush1.msra.mxu0 0.0
  %2090 = vmatprep.subr.mxu0 0.0
  %2091 = vmatpush1.msra.mxu0 0.0
  %2092 = vmatprep.subr.mxu0 0.0
  %2093 = vmatpush1.msra.mxu0 0.0
  %2094 = vmatprep.subr.mxu0 0.0
  %2095 = vmatpush1.msra.mxu0 0.0
  %2096 = vmatprep.subr.mxu0 0.0
  %2097 = vmatpush1.msra.mxu0 0.0
  %2098 = vmatprep.subr.mxu0 0.0
  %2099 = vmatpush1.msra.mxu0 0.0
  %2100 = vmatprep.subr.mxu0 0.0
  %2101 = vmatpush1.msra.mxu0 0.0
  %2102 = vmatprep.subr.mxu0 0.0
  %2103 = vmatpush1.msra.mxu0 0.0
  %2104 = vmatprep.subr.mxu0 0.0
  %2105 = vmatpush1.msra.mxu0 0.0
  %2106 = vmatprep.subr.mxu0 0.0
  %2107 = vmatpush1.msra.mxu0 0.0
  %2108 = vmatprep.subr.mxu0 0.0
  %2109 = vmatpush1.msra.mxu0 0.0
  %2110 = vmatprep.subr.mxu0 0.0
  %2111 = vmatpush1.msra.mxu0 0.0
  %2112 = vmatprep.subr.mxu0 0.0
  %2113 = vmatpush1.msra.mxu0 0.0
  %2114 = vmatprep.subr.mxu0 0.0
  %2115 = vmatpush1.msra.mxu0 0.0
  %2116 = vmatprep.subr.mxu0 0.0
  %2117 = vmatpush1.msra.mxu0 0.0
  %2118 = vmatprep.subr.mxu0 0.0
  %2119 = vmatpush1.msra.mxu0 0.0
  %2120 = vmatprep.subr.mxu0 0.0
  %2121 = vmatpush1.msra.mxu0 0.0
  %2122 = vmatprep.mubr.f32.mxu0 0.0
  %2123 = vmatmul.mubr.f32.gmra.mrb[0].mxu0 %v2056
  %v2124 = vpop.f32.mrb[0].mxu0
  %v2125 = vadd.f32 0.0, %v2124
  %v2126 = vpop.f32.mrb[0].mxu0
  %v2127 = vadd.f32 0.0, %v2126
  %2128 = vdwg.mxu0
  %v2131 = vcombine.low %v2125, %v2127
  %v2133 = vunpack.c.l.s4 1966171168
  %v2134 = vunpack.c.0.s8 %v2133
  %v2135 = vlaneseq
  %v2136 = vshrl.u32 %v2135, 7
  %v2137 = vsub.s32 %v2134, %v2136
  %v2138 = vrot.slane %v2131, %v2137
  %v2140 = vunpack.c.l.s4 1966171168
  %v2141 = vunpack.c.0.s8 %v2140
  %v2142 = vlaneseq
  %v2143 = vshrl.u32 %v2142, 7
  %v2144 = vsub.s32 %v2141, %v2143
  %v2145 = vrot.slane %v2138, %v2144
  %v2147 = vadd.f32 %v1953, %v2145
  %s2148 = scalar_lea.vmem %s7, 64
  %v2149 = vld [vmem:[%s2148] sm:$0xff]
  %v2150 = vld [vmem:[%s2148 + $0x8] sm:$0xff]
  %v2151 = vld [vmem:[%s2148 + $0x10] sm:$0xff]
  %v2152 = vld [vmem:[%s2148 + $0x18] sm:$0xff]
  %v2153 = vld [vmem:[%s2148 + $0x20] sm:$0xff]
  %v2154 = vld [vmem:[%s2148 + $0x28] sm:$0xff]
  %v2155 = vld [vmem:[%s2148 + $0x30] sm:$0xff]
  %v2156 = vld [vmem:[%s2148 + $0x38] sm:$0xff]
  %v2157 = vrot.slane %v1949, 1
  %v2158 = vsel %vm232, %v2157, 0
  %2160 = vmatprep.subr.mxu0 %v2150
  %2161 = vmatpush1.msra.mxu0 %v2149
  %2162 = vmatprep.subr.mxu0 %v2152
  %2163 = vmatpush1.msra.mxu0 %v2151
  %2164 = vmatprep.subr.mxu0 %v2154
  %2165 = vmatpush1.msra.mxu0 %v2153
  %2166 = vmatprep.subr.mxu0 %v2156
  %2167 = vmatpush1.msra.mxu0 %v2155
  %2168 = vmatprep.subr.mxu0 0.0
  %2169 = vmatpush1.msra.mxu0 0.0
  %2170 = vmatprep.subr.mxu0 0.0
  %2171 = vmatpush1.msra.mxu0 0.0
  %2172 = vmatprep.subr.mxu0 0.0
  %2173 = vmatpush1.msra.mxu0 0.0
  %2174 = vmatprep.subr.mxu0 0.0
  %2175 = vmatpush1.msra.mxu0 0.0
  %2176 = vmatprep.subr.mxu0 0.0
  %2177 = vmatpush1.msra.mxu0 0.0
  %2178 = vmatprep.subr.mxu0 0.0
  %2179 = vmatpush1.msra.mxu0 0.0
  %2180 = vmatprep.subr.mxu0 0.0
  %2181 = vmatpush1.msra.mxu0 0.0
  %2182 = vmatprep.subr.mxu0 0.0
  %2183 = vmatpush1.msra.mxu0 0.0
  %2184 = vmatprep.subr.mxu0 0.0
  %2185 = vmatpush1.msra.mxu0 0.0
  %2186 = vmatprep.subr.mxu0 0.0
  %2187 = vmatpush1.msra.mxu0 0.0
  %2188 = vmatprep.subr.mxu0 0.0
  %2189 = vmatpush1.msra.mxu0 0.0
  %2190 = vmatprep.subr.mxu0 0.0
  %2191 = vmatpush1.msra.mxu0 0.0
  %2192 = vmatprep.subr.mxu0 0.0
  %2193 = vmatpush1.msra.mxu0 0.0
  %2194 = vmatprep.subr.mxu0 0.0
  %2195 = vmatpush1.msra.mxu0 0.0
  %2196 = vmatprep.subr.mxu0 0.0
  %2197 = vmatpush1.msra.mxu0 0.0
  %2198 = vmatprep.subr.mxu0 0.0
  %2199 = vmatpush1.msra.mxu0 0.0
  %2200 = vmatprep.subr.mxu0 0.0
  %2201 = vmatpush1.msra.mxu0 0.0
  %2202 = vmatprep.subr.mxu0 0.0
  %2203 = vmatpush1.msra.mxu0 0.0
  %2204 = vmatprep.subr.mxu0 0.0
  %2205 = vmatpush1.msra.mxu0 0.0
  %2206 = vmatprep.subr.mxu0 0.0
  %2207 = vmatpush1.msra.mxu0 0.0
  %2208 = vmatprep.subr.mxu0 0.0
  %2209 = vmatpush1.msra.mxu0 0.0
  %2210 = vmatprep.subr.mxu0 0.0
  %2211 = vmatpush1.msra.mxu0 0.0
  %2212 = vmatprep.subr.mxu0 0.0
  %2213 = vmatpush1.msra.mxu0 0.0
  %2214 = vmatprep.subr.mxu0 0.0
  %2215 = vmatpush1.msra.mxu0 0.0
  %2216 = vmatprep.subr.mxu0 0.0
  %2217 = vmatpush1.msra.mxu0 0.0
  %2218 = vmatprep.subr.mxu0 0.0
  %2219 = vmatpush1.msra.mxu0 0.0
  %2220 = vmatprep.subr.mxu0 0.0
  %2221 = vmatpush1.msra.mxu0 0.0
  %2222 = vmatprep.subr.mxu0 0.0
  %2223 = vmatpush1.msra.mxu0 0.0
  %2224 = vmatprep.mubr.f32.mxu0 0.0
  %2225 = vmatmul.mubr.f32.gmra.mrb[0].mxu0 %v2158
  %v2226 = vpop.f32.mrb[0].mxu0
  %v2227 = vadd.f32 0.0, %v2226
  %v2228 = vpop.f32.mrb[0].mxu0
  %v2229 = vadd.f32 0.0, %v2228
  %2230 = vdwg.mxu0
  %v2233 = vcombine.low %v2227, %v2229
  %v2235 = vunpack.c.l.s4 1966171168
  %v2236 = vunpack.c.0.s8 %v2235
  %v2237 = vlaneseq
  %v2238 = vshrl.u32 %v2237, 7
  %v2239 = vsub.s32 %v2236, %v2238
  %v2240 = vrot.slane %v2233, %v2239
  %v2242 = vunpack.c.l.s4 1966171168
  %v2243 = vunpack.c.0.s8 %v2242
  %v2244 = vlaneseq
  %v2245 = vshrl.u32 %v2244, 7
  %v2246 = vsub.s32 %v2243, %v2245
  %v2247 = vrot.slane %v2240, %v2246
  %v2249 = vadd.f32 %v2054, %v2247
  %v2250 = vrot.slane %v1951, 1
  %v2251 = vsel %vm232, %v2250, 0
  %2253 = vmatprep.subr.mxu0 %v2150
  %2254 = vmatpush1.msra.mxu0 %v2149
  %2255 = vmatprep.subr.mxu0 %v2152
  %2256 = vmatpush1.msra.mxu0 %v2151
  %2257 = vmatprep.subr.mxu0 %v2154
  %2258 = vmatpush1.msra.mxu0 %v2153
  %2259 = vmatprep.subr.mxu0 %v2156
  %2260 = vmatpush1.msra.mxu0 %v2155
  %2261 = vmatprep.subr.mxu0 0.0
  %2262 = vmatpush1.msra.mxu0 0.0
  %2263 = vmatprep.subr.mxu0 0.0
  %2264 = vmatpush1.msra.mxu0 0.0
  %2265 = vmatprep.subr.mxu0 0.0
  %2266 = vmatpush1.msra.mxu0 0.0
  %2267 = vmatprep.subr.mxu0 0.0
  %2268 = vmatpush1.msra.mxu0 0.0
  %2269 = vmatprep.subr.mxu0 0.0
  %2270 = vmatpush1.msra.mxu0 0.0
  %2271 = vmatprep.subr.mxu0 0.0
  %2272 = vmatpush1.msra.mxu0 0.0
  %2273 = vmatprep.subr.mxu0 0.0
  %2274 = vmatpush1.msra.mxu0 0.0
  %2275 = vmatprep.subr.mxu0 0.0
  %2276 = vmatpush1.msra.mxu0 0.0
  %2277 = vmatprep.subr.mxu0 0.0
  %2278 = vmatpush1.msra.mxu0 0.0
  %2279 = vmatprep.subr.mxu0 0.0
  %2280 = vmatpush1.msra.mxu0 0.0
  %2281 = vmatprep.subr.mxu0 0.0
  %2282 = vmatpush1.msra.mxu0 0.0
  %2283 = vmatprep.subr.mxu0 0.0
  %2284 = vmatpush1.msra.mxu0 0.0
  %2285 = vmatprep.subr.mxu0 0.0
  %2286 = vmatpush1.msra.mxu0 0.0
  %2287 = vmatprep.subr.mxu0 0.0
  %2288 = vmatpush1.msra.mxu0 0.0
  %2289 = vmatprep.subr.mxu0 0.0
  %2290 = vmatpush1.msra.mxu0 0.0
  %2291 = vmatprep.subr.mxu0 0.0
  %2292 = vmatpush1.msra.mxu0 0.0
  %2293 = vmatprep.subr.mxu0 0.0
  %2294 = vmatpush1.msra.mxu0 0.0
  %2295 = vmatprep.subr.mxu0 0.0
  %2296 = vmatpush1.msra.mxu0 0.0
  %2297 = vmatprep.subr.mxu0 0.0
  %2298 = vmatpush1.msra.mxu0 0.0
  %2299 = vmatprep.subr.mxu0 0.0
  %2300 = vmatpush1.msra.mxu0 0.0
  %2301 = vmatprep.subr.mxu0 0.0
  %2302 = vmatpush1.msra.mxu0 0.0
  %2303 = vmatprep.subr.mxu0 0.0
  %2304 = vmatpush1.msra.mxu0 0.0
  %2305 = vmatprep.subr.mxu0 0.0
  %2306 = vmatpush1.msra.mxu0 0.0
  %2307 = vmatprep.subr.mxu0 0.0
  %2308 = vmatpush1.msra.mxu0 0.0
  %2309 = vmatprep.subr.mxu0 0.0
  %2310 = vmatpush1.msra.mxu0 0.0
  %2311 = vmatprep.subr.mxu0 0.0
  %2312 = vmatpush1.msra.mxu0 0.0
  %2313 = vmatprep.subr.mxu0 0.0
  %2314 = vmatpush1.msra.mxu0 0.0
  %2315 = vmatprep.subr.mxu0 0.0
  %2316 = vmatpush1.msra.mxu0 0.0
  %2317 = vmatprep.mubr.f32.mxu0 0.0
  %2318 = vmatmul.mubr.f32.gmra.mrb[0].mxu0 %v2251
  %v2319 = vpop.f32.mrb[0].mxu0
  %v2320 = vadd.f32 0.0, %v2319
  %v2321 = vpop.f32.mrb[0].mxu0
  %v2322 = vadd.f32 0.0, %v2321
  %2323 = vdwg.mxu0
  %v2326 = vcombine.low %v2320, %v2322
  %v2328 = vunpack.c.l.s4 1966171168
  %v2329 = vunpack.c.0.s8 %v2328
  %v2330 = vlaneseq
  %v2331 = vshrl.u32 %v2330, 7
  %v2332 = vsub.s32 %v2329, %v2331
  %v2333 = vrot.slane %v2326, %v2332
  %v2335 = vunpack.c.l.s4 1966171168
  %v2336 = vunpack.c.0.s8 %v2335
  %v2337 = vlaneseq
  %v2338 = vshrl.u32 %v2337, 7
  %v2339 = vsub.s32 %v2336, %v2338
  %v2340 = vrot.slane %v2333, %v2339
  %v2342 = vadd.f32 %v2147, %v2340
  %s2343 = scalar_lea.vmem %s7, 128
  %v2344 = vld [vmem:[%s2343] sm:$0xff]
  %v2345 = vld [vmem:[%s2343 + $0x8] sm:$0xff]
  %v2346 = vld [vmem:[%s2343 + $0x10] sm:$0xff]
  %v2347 = vld [vmem:[%s2343 + $0x18] sm:$0xff]
  %v2348 = vld [vmem:[%s2343 + $0x20] sm:$0xff]
  %v2349 = vld [vmem:[%s2343 + $0x28] sm:$0xff]
  %v2350 = vld [vmem:[%s2343 + $0x30] sm:$0xff]
  %v2351 = vld [vmem:[%s2343 + $0x38] sm:$0xff]
  %v2352 = vrot.slane %v1949, 2
  %v2353 = vsel %vm232, %v2352, 0
  %2355 = vmatprep.subr.mxu0 %v2345
  %2356 = vmatpush1.msra.mxu0 %v2344
  %2357 = vmatprep.subr.mxu0 %v2347
  %2358 = vmatpush1.msra.mxu0 %v2346
  %2359 = vmatprep.subr.mxu0 %v2349
  %2360 = vmatpush1.msra.mxu0 %v2348
  %2361 = vmatprep.subr.mxu0 %v2351
  %2362 = vmatpush1.msra.mxu0 %v2350
  %2363 = vmatprep.subr.mxu0 0.0
  %2364 = vmatpush1.msra.mxu0 0.0
  %2365 = vmatprep.subr.mxu0 0.0
  %2366 = vmatpush1.msra.mxu0 0.0
  %2367 = vmatprep.subr.mxu0 0.0
  %2368 = vmatpush1.msra.mxu0 0.0
  %2369 = vmatprep.subr.mxu0 0.0
  %2370 = vmatpush1.msra.mxu0 0.0
  %2371 = vmatprep.subr.mxu0 0.0
  %2372 = vmatpush1.msra.mxu0 0.0
  %2373 = vmatprep.subr.mxu0 0.0
  %2374 = vmatpush1.msra.mxu0 0.0
  %2375 = vmatprep.subr.mxu0 0.0
  %2376 = vmatpush1.msra.mxu0 0.0
  %2377 = vmatprep.subr.mxu0 0.0
  %2378 = vmatpush1.msra.mxu0 0.0
  %2379 = vmatprep.subr.mxu0 0.0
  %2380 = vmatpush1.msra.mxu0 0.0
  %2381 = vmatprep.subr.mxu0 0.0
  %2382 = vmatpush1.msra.mxu0 0.0
  %2383 = vmatprep.subr.mxu0 0.0
  %2384 = vmatpush1.msra.mxu0 0.0
  %2385 = vmatprep.subr.mxu0 0.0
  %2386 = vmatpush1.msra.mxu0 0.0
  %2387 = vmatprep.subr.mxu0 0.0
  %2388 = vmatpush1.msra.mxu0 0.0
  %2389 = vmatprep.subr.mxu0 0.0
  %2390 = vmatpush1.msra.mxu0 0.0
  %2391 = vmatprep.subr.mxu0 0.0
  %2392 = vmatpush1.msra.mxu0 0.0
  %2393 = vmatprep.subr.mxu0 0.0
  %2394 = vmatpush1.msra.mxu0 0.0
  %2395 = vmatprep.subr.mxu0 0.0
  %2396 = vmatpush1.msra.mxu0 0.0
  %2397 = vmatprep.subr.mxu0 0.0
  %2398 = vmatpush1.msra.mxu0 0.0
  %2399 = vmatprep.subr.mxu0 0.0
  %2400 = vmatpush1.msra.mxu0 0.0
  %2401 = vmatprep.subr.mxu0 0.0
  %2402 = vmatpush1.msra.mxu0 0.0
  %2403 = vmatprep.subr.mxu0 0.0
  %2404 = vmatpush1.msra.mxu0 0.0
  %2405 = vmatprep.subr.mxu0 0.0
  %2406 = vmatpush1.msra.mxu0 0.0
  %2407 = vmatprep.subr.mxu0 0.0
  %2408 = vmatpush1.msra.mxu0 0.0
  %2409 = vmatprep.subr.mxu0 0.0
  %2410 = vmatpush1.msra.mxu0 0.0
  %2411 = vmatprep.subr.mxu0 0.0
  %2412 = vmatpush1.msra.mxu0 0.0
  %2413 = vmatprep.subr.mxu0 0.0
  %2414 = vmatpush1.msra.mxu0 0.0
  %2415 = vmatprep.subr.mxu0 0.0
  %2416 = vmatpush1.msra.mxu0 0.0
  %2417 = vmatprep.subr.mxu0 0.0
  %2418 = vmatpush1.msra.mxu0 0.0
  %2419 = vmatprep.mubr.f32.mxu0 0.0
  %2420 = vmatmul.mubr.f32.gmra.mrb[0].mxu0 %v2353
  %v2421 = vpop.f32.mrb[0].mxu0
  %v2422 = vadd.f32 0.0, %v2421
  %v2423 = vpop.f32.mrb[0].mxu0
  %v2424 = vadd.f32 0.0, %v2423
  %2425 = vdwg.mxu0
  %v2428 = vcombine.low %v2422, %v2424
  %v2430 = vunpack.c.l.s4 1966171168
  %v2431 = vunpack.c.0.s8 %v2430
  %v2432 = vlaneseq
  %v2433 = vshrl.u32 %v2432, 7
  %v2434 = vsub.s32 %v2431, %v2433
  %v2435 = vrot.slane %v2428, %v2434
  %v2437 = vunpack.c.l.s4 1966171168
  %v2438 = vunpack.c.0.s8 %v2437
  %v2439 = vlaneseq
  %v2440 = vshrl.u32 %v2439, 7
  %v2441 = vsub.s32 %v2438, %v2440
  %v2442 = vrot.slane %v2435, %v2441
  %v2444 = vadd.f32 %v2249, %v2442
  %v2445 = vrot.slane %v1951, 2
  %v2446 = vsel %vm232, %v2445, 0
  %2448 = vmatprep.subr.mxu0 %v2345
  %2449 = vmatpush1.msra.mxu0 %v2344
  %2450 = vmatprep.subr.mxu0 %v2347
  %2451 = vmatpush1.msra.mxu0 %v2346
  %2452 = vmatprep.subr.mxu0 %v2349
  %2453 = vmatpush1.msra.mxu0 %v2348
  %2454 = vmatprep.subr.mxu0 %v2351
  %2455 = vmatpush1.msra.mxu0 %v2350
  %2456 = vmatprep.subr.mxu0 0.0
  %2457 = vmatpush1.msra.mxu0 0.0
  %2458 = vmatprep.subr.mxu0 0.0
  %2459 = vmatpush1.msra.mxu0 0.0
  %2460 = vmatprep.subr.mxu0 0.0
  %2461 = vmatpush1.msra.mxu0 0.0
  %2462 = vmatprep.subr.mxu0 0.0
  %2463 = vmatpush1.msra.mxu0 0.0
  %2464 = vmatprep.subr.mxu0 0.0
  %2465 = vmatpush1.msra.mxu0 0.0
  %2466 = vmatprep.subr.mxu0 0.0
  %2467 = vmatpush1.msra.mxu0 0.0
  %2468 = vmatprep.subr.mxu0 0.0
  %2469 = vmatpush1.msra.mxu0 0.0
  %2470 = vmatprep.subr.mxu0 0.0
  %2471 = vmatpush1.msra.mxu0 0.0
  %2472 = vmatprep.subr.mxu0 0.0
  %2473 = vmatpush1.msra.mxu0 0.0
  %2474 = vmatprep.subr.mxu0 0.0
  %2475 = vmatpush1.msra.mxu0 0.0
  %2476 = vmatprep.subr.mxu0 0.0
  %2477 = vmatpush1.msra.mxu0 0.0
  %2478 = vmatprep.subr.mxu0 0.0
  %2479 = vmatpush1.msra.mxu0 0.0
  %2480 = vmatprep.subr.mxu0 0.0
  %2481 = vmatpush1.msra.mxu0 0.0
  %2482 = vmatprep.subr.mxu0 0.0
  %2483 = vmatpush1.msra.mxu0 0.0
  %2484 = vmatprep.subr.mxu0 0.0
  %2485 = vmatpush1.msra.mxu0 0.0
  %2486 = vmatprep.subr.mxu0 0.0
  %2487 = vmatpush1.msra.mxu0 0.0
  %2488 = vmatprep.subr.mxu0 0.0
  %2489 = vmatpush1.msra.mxu0 0.0
  %2490 = vmatprep.subr.mxu0 0.0
  %2491 = vmatpush1.msra.mxu0 0.0
  %2492 = vmatprep.subr.mxu0 0.0
  %2493 = vmatpush1.msra.mxu0 0.0
  %2494 = vmatprep.subr.mxu0 0.0
  %2495 = vmatpush1.msra.mxu0 0.0
  %2496 = vmatprep.subr.mxu0 0.0
  %2497 = vmatpush1.msra.mxu0 0.0
  %2498 = vmatprep.subr.mxu0 0.0
  %2499 = vmatpush1.msra.mxu0 0.0
  %2500 = vmatprep.subr.mxu0 0.0
  %2501 = vmatpush1.msra.mxu0 0.0
  %2502 = vmatprep.subr.mxu0 0.0
  %2503 = vmatpush1.msra.mxu0 0.0
  %2504 = vmatprep.subr.mxu0 0.0
  %2505 = vmatpush1.msra.mxu0 0.0
  %2506 = vmatprep.subr.mxu0 0.0
  %2507 = vmatpush1.msra.mxu0 0.0
  %2508 = vmatprep.subr.mxu0 0.0
  %2509 = vmatpush1.msra.mxu0 0.0
  %2510 = vmatprep.subr.mxu0 0.0
  %2511 = vmatpush1.msra.mxu0 0.0
  %2512 = vmatprep.mubr.f32.mxu0 0.0
  %2513 = vmatmul.mubr.f32.gmra.mrb[0].mxu0 %v2446
  %v2514 = vpop.f32.mrb[0].mxu0
  %v2515 = vadd.f32 0.0, %v2514
  %v2516 = vpop.f32.mrb[0].mxu0
  %v2517 = vadd.f32 0.0, %v2516
  %2518 = vdwg.mxu0
  %v2521 = vcombine.low %v2515, %v2517
  %v2523 = vunpack.c.l.s4 1966171168
  %v2524 = vunpack.c.0.s8 %v2523
  %v2525 = vlaneseq
  %v2526 = vshrl.u32 %v2525, 7
  %v2527 = vsub.s32 %v2524, %v2526
  %v2528 = vrot.slane %v2521, %v2527
  %v2530 = vunpack.c.l.s4 1966171168
  %v2531 = vunpack.c.0.s8 %v2530
  %v2532 = vlaneseq
  %v2533 = vshrl.u32 %v2532, 7
  %v2534 = vsub.s32 %v2531, %v2533
  %v2535 = vrot.slane %v2528, %v2534
  %v2537 = vadd.f32 %v2342, %v2535
  %s2538 = scalar_lea.vmem %s7, 192
  %v2539 = vld [vmem:[%s2538] sm:$0xff]
  %v2540 = vld [vmem:[%s2538 + $0x8] sm:$0xff]
  %v2541 = vld [vmem:[%s2538 + $0x10] sm:$0xff]
  %v2542 = vld [vmem:[%s2538 + $0x18] sm:$0xff]
  %v2543 = vld [vmem:[%s2538 + $0x20] sm:$0xff]
  %v2544 = vld [vmem:[%s2538 + $0x28] sm:$0xff]
  %v2545 = vld [vmem:[%s2538 + $0x30] sm:$0xff]
  %v2546 = vld [vmem:[%s2538 + $0x38] sm:$0xff]
  %v2547 = vrot.slane %v1949, 3
  %v2548 = vsel %vm232, %v2547, 0
  %2550 = vmatprep.subr.mxu0 %v2540
  %2551 = vmatpush1.msra.mxu0 %v2539
  %2552 = vmatprep.subr.mxu0 %v2542
  %2553 = vmatpush1.msra.mxu0 %v2541
  %2554 = vmatprep.subr.mxu0 %v2544
  %2555 = vmatpush1.msra.mxu0 %v2543
  %2556 = vmatprep.subr.mxu0 %v2546
  %2557 = vmatpush1.msra.mxu0 %v2545
  %2558 = vmatprep.subr.mxu0 0.0
  %2559 = vmatpush1.msra.mxu0 0.0
  %2560 = vmatprep.subr.mxu0 0.0
  %2561 = vmatpush1.msra.mxu0 0.0
  %2562 = vmatprep.subr.mxu0 0.0
  %2563 = vmatpush1.msra.mxu0 0.0
  %2564 = vmatprep.subr.mxu0 0.0
  %2565 = vmatpush1.msra.mxu0 0.0
  %2566 = vmatprep.subr.mxu0 0.0
  %2567 = vmatpush1.msra.mxu0 0.0
  %2568 = vmatprep.subr.mxu0 0.0
  %2569 = vmatpush1.msra.mxu0 0.0
  %2570 = vmatprep.subr.mxu0 0.0
  %2571 = vmatpush1.msra.mxu0 0.0
  %2572 = vmatprep.subr.mxu0 0.0
  %2573 = vmatpush1.msra.mxu0 0.0
  %2574 = vmatprep.subr.mxu0 0.0
  %2575 = vmatpush1.msra.mxu0 0.0
  %2576 = vmatprep.subr.mxu0 0.0
  %2577 = vmatpush1.msra.mxu0 0.0
  %2578 = vmatprep.subr.mxu0 0.0
  %2579 = vmatpush1.msra.mxu0 0.0
  %2580 = vmatprep.subr.mxu0 0.0
  %2581 = vmatpush1.msra.mxu0 0.0
  %2582 = vmatprep.subr.mxu0 0.0
  %2583 = vmatpush1.msra.mxu0 0.0
  %2584 = vmatprep.subr.mxu0 0.0
  %2585 = vmatpush1.msra.mxu0 0.0
  %2586 = vmatprep.subr.mxu0 0.0
  %2587 = vmatpush1.msra.mxu0 0.0
  %2588 = vmatprep.subr.mxu0 0.0
  %2589 = vmatpush1.msra.mxu0 0.0
  %2590 = vmatprep.subr.mxu0 0.0
  %2591 = vmatpush1.msra.mxu0 0.0
  %2592 = vmatprep.subr.mxu0 0.0
  %2593 = vmatpush1.msra.mxu0 0.0
  %2594 = vmatprep.subr.mxu0 0.0
  %2595 = vmatpush1.msra.mxu0 0.0
  %2596 = vmatprep.subr.mxu0 0.0
  %2597 = vmatpush1.msra.mxu0 0.0
  %2598 = vmatprep.subr.mxu0 0.0
  %2599 = vmatpush1.msra.mxu0 0.0
  %2600 = vmatprep.subr.mxu0 0.0
  %2601 = vmatpush1.msra.mxu0 0.0
  %2602 = vmatprep.subr.mxu0 0.0
  %2603 = vmatpush1.msra.mxu0 0.0
  %2604 = vmatprep.subr.mxu0 0.0
  %2605 = vmatpush1.msra.mxu0 0.0
  %2606 = vmatprep.subr.mxu0 0.0
  %2607 = vmatpush1.msra.mxu0 0.0
  %2608 = vmatprep.subr.mxu0 0.0
  %2609 = vmatpush1.msra.mxu0 0.0
  %2610 = vmatprep.subr.mxu0 0.0
  %2611 = vmatpush1.msra.mxu0 0.0
  %2612 = vmatprep.subr.mxu0 0.0
  %2613 = vmatpush1.msra.mxu0 0.0
  %2614 = vmatprep.mubr.f32.mxu0 0.0
  %2615 = vmatmul.mubr.f32.gmra.mrb[0].mxu0 %v2548
  %v2616 = vpop.f32.mrb[0].mxu0
  %v2617 = vadd.f32 0.0, %v2616
  %v2618 = vpop.f32.mrb[0].mxu0
  %v2619 = vadd.f32 0.0, %v2618
  %2620 = vdwg.mxu0
  %v2623 = vcombine.low %v2617, %v2619
  %v2625 = vunpack.c.l.s4 1966171168
  %v2626 = vunpack.c.0.s8 %v2625
  %v2627 = vlaneseq
  %v2628 = vshrl.u32 %v2627, 7
  %v2629 = vsub.s32 %v2626, %v2628
  %v2630 = vrot.slane %v2623, %v2629
  %v2632 = vunpack.c.l.s4 1966171168
  %v2633 = vunpack.c.0.s8 %v2632
  %v2634 = vlaneseq
  %v2635 = vshrl.u32 %v2634, 7
  %v2636 = vsub.s32 %v2633, %v2635
  %v2637 = vrot.slane %v2630, %v2636
  %v2639 = vadd.f32 %v2444, %v2637
  %v2640 = vrot.slane %v1951, 3
  %v2641 = vsel %vm232, %v2640, 0
  %2643 = vmatprep.subr.mxu0 %v2540
  %2644 = vmatpush1.msra.mxu0 %v2539
  %2645 = vmatprep.subr.mxu0 %v2542
  %2646 = vmatpush1.msra.mxu0 %v2541
  %2647 = vmatprep.subr.mxu0 %v2544
  %2648 = vmatpush1.msra.mxu0 %v2543
  %2649 = vmatprep.subr.mxu0 %v2546
  %2650 = vmatpush1.msra.mxu0 %v2545
  %2651 = vmatprep.subr.mxu0 0.0
  %2652 = vmatpush1.msra.mxu0 0.0
  %2653 = vmatprep.subr.mxu0 0.0
  %2654 = vmatpush1.msra.mxu0 0.0
  %2655 = vmatprep.subr.mxu0 0.0
  %2656 = vmatpush1.msra.mxu0 0.0
  %2657 = vmatprep.subr.mxu0 0.0
  %2658 = vmatpush1.msra.mxu0 0.0
  %2659 = vmatprep.subr.mxu0 0.0
  %2660 = vmatpush1.msra.mxu0 0.0
  %2661 = vmatprep.subr.mxu0 0.0
  %2662 = vmatpush1.msra.mxu0 0.0
  %2663 = vmatprep.subr.mxu0 0.0
  %2664 = vmatpush1.msra.mxu0 0.0
  %2665 = vmatprep.subr.mxu0 0.0
  %2666 = vmatpush1.msra.mxu0 0.0
  %2667 = vmatprep.subr.mxu0 0.0
  %2668 = vmatpush1.msra.mxu0 0.0
  %2669 = vmatprep.subr.mxu0 0.0
  %2670 = vmatpush1.msra.mxu0 0.0
  %2671 = vmatprep.subr.mxu0 0.0
  %2672 = vmatpush1.msra.mxu0 0.0
  %2673 = vmatprep.subr.mxu0 0.0
  %2674 = vmatpush1.msra.mxu0 0.0
  %2675 = vmatprep.subr.mxu0 0.0
  %2676 = vmatpush1.msra.mxu0 0.0
  %2677 = vmatprep.subr.mxu0 0.0
  %2678 = vmatpush1.msra.mxu0 0.0
  %2679 = vmatprep.subr.mxu0 0.0
  %2680 = vmatpush1.msra.mxu0 0.0
  %2681 = vmatprep.subr.mxu0 0.0
  %2682 = vmatpush1.msra.mxu0 0.0
  %2683 = vmatprep.subr.mxu0 0.0
  %2684 = vmatpush1.msra.mxu0 0.0
  %2685 = vmatprep.subr.mxu0 0.0
  %2686 = vmatpush1.msra.mxu0 0.0
  %2687 = vmatprep.subr.mxu0 0.0
  %2688 = vmatpush1.msra.mxu0 0.0
  %2689 = vmatprep.subr.mxu0 0.0
  %2690 = vmatpush1.msra.mxu0 0.0
  %2691 = vmatprep.subr.mxu0 0.0
  %2692 = vmatpush1.msra.mxu0 0.0
  %2693 = vmatprep.subr.mxu0 0.0
  %2694 = vmatpush1.msra.mxu0 0.0
  %2695 = vmatprep.subr.mxu0 0.0
  %2696 = vmatpush1.msra.mxu0 0.0
  %2697 = vmatprep.subr.mxu0 0.0
  %2698 = vmatpush1.msra.mxu0 0.0
  %2699 = vmatprep.subr.mxu0 0.0
  %2700 = vmatpush1.msra.mxu0 0.0
  %2701 = vmatprep.subr.mxu0 0.0
  %2702 = vmatpush1.msra.mxu0 0.0
  %2703 = vmatprep.subr.mxu0 0.0
  %2704 = vmatpush1.msra.mxu0 0.0
  %2705 = vmatprep.subr.mxu0 0.0
  %2706 = vmatpush1.msra.mxu0 0.0
  %2707 = vmatprep.mubr.f32.mxu0 0.0
  %2708 = vmatmul.mubr.f32.gmra.mrb[0].mxu0 %v2641
  %v2709 = vpop.f32.mrb[0].mxu0
  %v2710 = vadd.f32 0.0, %v2709
  %v2711 = vpop.f32.mrb[0].mxu0
  %v2712 = vadd.f32 0.0, %v2711
  %2713 = vdwg.mxu0
  %v2716 = vcombine.low %v2710, %v2712
  %v2718 = vunpack.c.l.s4 1966171168
  %v2719 = vunpack.c.0.s8 %v2718
  %v2720 = vlaneseq
  %v2721 = vshrl.u32 %v2720, 7
  %v2722 = vsub.s32 %v2719, %v2721
  %v2723 = vrot.slane %v2716, %v2722
  %v2725 = vunpack.c.l.s4 1966171168
  %v2726 = vunpack.c.0.s8 %v2725
  %v2727 = vlaneseq
  %v2728 = vshrl.u32 %v2727, 7
  %v2729 = vsub.s32 %v2726, %v2728
  %v2730 = vrot.slane %v2723, %v2729
  %v2732 = vadd.f32 %v2537, %v2730
  %s2733 = scalar_lea.vmem %s7, 256
  %v2734 = vld [vmem:[%s2733] sm:$0xff]
  %v2735 = vld [vmem:[%s2733 + $0x8] sm:$0xff]
  %v2736 = vld [vmem:[%s2733 + $0x10] sm:$0xff]
  %v2737 = vld [vmem:[%s2733 + $0x18] sm:$0xff]
  %v2738 = vld [vmem:[%s2733 + $0x20] sm:$0xff]
  %v2739 = vld [vmem:[%s2733 + $0x28] sm:$0xff]
  %v2740 = vld [vmem:[%s2733 + $0x30] sm:$0xff]
  %v2741 = vld [vmem:[%s2733 + $0x38] sm:$0xff]
  %v2742 = vrot.slane %v1949, 4
  %v2743 = vsel %vm232, %v2742, 0
  %2745 = vmatprep.subr.mxu0 %v2735
  %2746 = vmatpush1.msra.mxu0 %v2734
  %2747 = vmatprep.subr.mxu0 %v2737
  %2748 = vmatpush1.msra.mxu0 %v2736
  %2749 = vmatprep.subr.mxu0 %v2739
  %2750 = vmatpush1.msra.mxu0 %v2738
  %2751 = vmatprep.subr.mxu0 %v2741
  %2752 = vmatpush1.msra.mxu0 %v2740
  %2753 = vmatprep.subr.mxu0 0.0
  %2754 = vmatpush1.msra.mxu0 0.0
  %2755 = vmatprep.subr.mxu0 0.0
  %2756 = vmatpush1.msra.mxu0 0.0
  %2757 = vmatprep.subr.mxu0 0.0
  %2758 = vmatpush1.msra.mxu0 0.0
  %2759 = vmatprep.subr.mxu0 0.0
  %2760 = vmatpush1.msra.mxu0 0.0
  %2761 = vmatprep.subr.mxu0 0.0
  %2762 = vmatpush1.msra.mxu0 0.0
  %2763 = vmatprep.subr.mxu0 0.0
  %2764 = vmatpush1.msra.mxu0 0.0
  %2765 = vmatprep.subr.mxu0 0.0
  %2766 = vmatpush1.msra.mxu0 0.0
  %2767 = vmatprep.subr.mxu0 0.0
  %2768 = vmatpush1.msra.mxu0 0.0
  %2769 = vmatprep.subr.mxu0 0.0
  %2770 = vmatpush1.msra.mxu0 0.0
  %2771 = vmatprep.subr.mxu0 0.0
  %2772 = vmatpush1.msra.mxu0 0.0
  %2773 = vmatprep.subr.mxu0 0.0
  %2774 = vmatpush1.msra.mxu0 0.0
  %2775 = vmatprep.subr.mxu0 0.0
  %2776 = vmatpush1.msra.mxu0 0.0
  %2777 = vmatprep.subr.mxu0 0.0
  %2778 = vmatpush1.msra.mxu0 0.0
  %2779 = vmatprep.subr.mxu0 0.0
  %2780 = vmatpush1.msra.mxu0 0.0
  %2781 = vmatprep.subr.mxu0 0.0
  %2782 = vmatpush1.msra.mxu0 0.0
  %2783 = vmatprep.subr.mxu0 0.0
  %2784 = vmatpush1.msra.mxu0 0.0
  %2785 = vmatprep.subr.mxu0 0.0
  %2786 = vmatpush1.msra.mxu0 0.0
  %2787 = vmatprep.subr.mxu0 0.0
  %2788 = vmatpush1.msra.mxu0 0.0
  %2789 = vmatprep.subr.mxu0 0.0
  %2790 = vmatpush1.msra.mxu0 0.0
  %2791 = vmatprep.subr.mxu0 0.0
  %2792 = vmatpush1.msra.mxu0 0.0
  %2793 = vmatprep.subr.mxu0 0.0
  %2794 = vmatpush1.msra.mxu0 0.0
  %2795 = vmatprep.subr.mxu0 0.0
  %2796 = vmatpush1.msra.mxu0 0.0
  %2797 = vmatprep.subr.mxu0 0.0
  %2798 = vmatpush1.msra.mxu0 0.0
  %2799 = vmatprep.subr.mxu0 0.0
  %2800 = vmatpush1.msra.mxu0 0.0
  %2801 = vmatprep.subr.mxu0 0.0
  %2802 = vmatpush1.msra.mxu0 0.0
  %2803 = vmatprep.subr.mxu0 0.0
  %2804 = vmatpush1.msra.mxu0 0.0
  %2805 = vmatprep.subr.mxu0 0.0
  %2806 = vmatpush1.msra.mxu0 0.0
  %2807 = vmatprep.subr.mxu0 0.0
  %2808 = vmatpush1.msra.mxu0 0.0
  %2809 = vmatprep.mubr.f32.mxu0 0.0
  %2810 = vmatmul.mubr.f32.gmra.mrb[0].mxu0 %v2743
  %v2811 = vpop.f32.mrb[0].mxu0
  %v2812 = vadd.f32 0.0, %v2811
  %v2813 = vpop.f32.mrb[0].mxu0
  %v2814 = vadd.f32 0.0, %v2813
  %2815 = vdwg.mxu0
  %v2818 = vcombine.low %v2812, %v2814
  %v2820 = vunpack.c.l.s4 1966171168
  %v2821 = vunpack.c.0.s8 %v2820
  %v2822 = vlaneseq
  %v2823 = vshrl.u32 %v2822, 7
  %v2824 = vsub.s32 %v2821, %v2823
  %v2825 = vrot.slane %v2818, %v2824
  %v2827 = vunpack.c.l.s4 1966171168
  %v2828 = vunpack.c.0.s8 %v2827
  %v2829 = vlaneseq
  %v2830 = vshrl.u32 %v2829, 7
  %v2831 = vsub.s32 %v2828, %v2830
  %v2832 = vrot.slane %v2825, %v2831
  %v2834 = vadd.f32 %v2639, %v2832
  %v2835 = vrot.slane %v1951, 4
  %v2836 = vsel %vm232, %v2835, 0
  %2838 = vmatprep.subr.mxu0 %v2735
  %2839 = vmatpush1.msra.mxu0 %v2734
  %2840 = vmatprep.subr.mxu0 %v2737
  %2841 = vmatpush1.msra.mxu0 %v2736
  %2842 = vmatprep.subr.mxu0 %v2739
  %2843 = vmatpush1.msra.mxu0 %v2738
  %2844 = vmatprep.subr.mxu0 %v2741
  %2845 = vmatpush1.msra.mxu0 %v2740
  %2846 = vmatprep.subr.mxu0 0.0
  %2847 = vmatpush1.msra.mxu0 0.0
  %2848 = vmatprep.subr.mxu0 0.0
  %2849 = vmatpush1.msra.mxu0 0.0
  %2850 = vmatprep.subr.mxu0 0.0
  %2851 = vmatpush1.msra.mxu0 0.0
  %2852 = vmatprep.subr.mxu0 0.0
  %2853 = vmatpush1.msra.mxu0 0.0
  %2854 = vmatprep.subr.mxu0 0.0
  %2855 = vmatpush1.msra.mxu0 0.0
  %2856 = vmatprep.subr.mxu0 0.0
  %2857 = vmatpush1.msra.mxu0 0.0
  %2858 = vmatprep.subr.mxu0 0.0
  %2859 = vmatpush1.msra.mxu0 0.0
  %2860 = vmatprep.subr.mxu0 0.0
  %2861 = vmatpush1.msra.mxu0 0.0
  %2862 = vmatprep.subr.mxu0 0.0
  %2863 = vmatpush1.msra.mxu0 0.0
  %2864 = vmatprep.subr.mxu0 0.0
  %2865 = vmatpush1.msra.mxu0 0.0
  %2866 = vmatprep.subr.mxu0 0.0
  %2867 = vmatpush1.msra.mxu0 0.0
  %2868 = vmatprep.subr.mxu0 0.0
  %2869 = vmatpush1.msra.mxu0 0.0
  %2870 = vmatprep.subr.mxu0 0.0
  %2871 = vmatpush1.msra.mxu0 0.0
  %2872 = vmatprep.subr.mxu0 0.0
  %2873 = vmatpush1.msra.mxu0 0.0
  %2874 = vmatprep.subr.mxu0 0.0
  %2875 = vmatpush1.msra.mxu0 0.0
  %2876 = vmatprep.subr.mxu0 0.0
  %2877 = vmatpush1.msra.mxu0 0.0
  %2878 = vmatprep.subr.mxu0 0.0
  %2879 = vmatpush1.msra.mxu0 0.0
  %2880 = vmatprep.subr.mxu0 0.0
  %2881 = vmatpush1.msra.mxu0 0.0
  %2882 = vmatprep.subr.mxu0 0.0
  %2883 = vmatpush1.msra.mxu0 0.0
  %2884 = vmatprep.subr.mxu0 0.0
  %2885 = vmatpush1.msra.mxu0 0.0
  %2886 = vmatprep.subr.mxu0 0.0
  %2887 = vmatpush1.msra.mxu0 0.0
  %2888 = vmatprep.subr.mxu0 0.0
  %2889 = vmatpush1.msra.mxu0 0.0
  %2890 = vmatprep.subr.mxu0 0.0
  %2891 = vmatpush1.msra.mxu0 0.0
  %2892 = vmatprep.subr.mxu0 0.0
  %2893 = vmatpush1.msra.mxu0 0.0
  %2894 = vmatprep.subr.mxu0 0.0
  %2895 = vmatpush1.msra.mxu0 0.0
  %2896 = vmatprep.subr.mxu0 0.0
  %2897 = vmatpush1.msra.mxu0 0.0
  %2898 = vmatprep.subr.mxu0 0.0
  %2899 = vmatpush1.msra.mxu0 0.0
  %2900 = vmatprep.subr.mxu0 0.0
  %2901 = vmatpush1.msra.mxu0 0.0
  %2902 = vmatprep.mubr.f32.mxu0 0.0
  %2903 = vmatmul.mubr.f32.gmra.mrb[0].mxu0 %v2836
  %v2904 = vpop.f32.mrb[0].mxu0
  %v2905 = vadd.f32 0.0, %v2904
  %v2906 = vpop.f32.mrb[0].mxu0
  %v2907 = vadd.f32 0.0, %v2906
  %2908 = vdwg.mxu0
  %v2911 = vcombine.low %v2905, %v2907
  %v2913 = vunpack.c.l.s4 1966171168
  %v2914 = vunpack.c.0.s8 %v2913
  %v2915 = vlaneseq
  %v2916 = vshrl.u32 %v2915, 7
  %v2917 = vsub.s32 %v2914, %v2916
  %v2918 = vrot.slane %v2911, %v2917
  %v2920 = vunpack.c.l.s4 1966171168
  %v2921 = vunpack.c.0.s8 %v2920
  %v2922 = vlaneseq
  %v2923 = vshrl.u32 %v2922, 7
  %v2924 = vsub.s32 %v2921, %v2923
  %v2925 = vrot.slane %v2918, %v2924
  %v2927 = vadd.f32 %v2732, %v2925
  %s2928 = scalar_lea.vmem %s7, 320
  %v2929 = vld [vmem:[%s2928] sm:$0xff]
  %v2930 = vld [vmem:[%s2928 + $0x8] sm:$0xff]
  %v2931 = vld [vmem:[%s2928 + $0x10] sm:$0xff]
  %v2932 = vld [vmem:[%s2928 + $0x18] sm:$0xff]
  %v2933 = vld [vmem:[%s2928 + $0x20] sm:$0xff]
  %v2934 = vld [vmem:[%s2928 + $0x28] sm:$0xff]
  %v2935 = vld [vmem:[%s2928 + $0x30] sm:$0xff]
  %v2936 = vld [vmem:[%s2928 + $0x38] sm:$0xff]
  %v2937 = vrot.slane %v1949, 5
  %v2938 = vsel %vm232, %v2937, 0
  %2940 = vmatprep.subr.mxu0 %v2930
  %2941 = vmatpush1.msra.mxu0 %v2929
  %2942 = vmatprep.subr.mxu0 %v2932
  %2943 = vmatpush1.msra.mxu0 %v2931
  %2944 = vmatprep.subr.mxu0 %v2934
  %2945 = vmatpush1.msra.mxu0 %v2933
  %2946 = vmatprep.subr.mxu0 %v2936
  %2947 = vmatpush1.msra.mxu0 %v2935
  %2948 = vmatprep.subr.mxu0 0.0
  %2949 = vmatpush1.msra.mxu0 0.0
  %2950 = vmatprep.subr.mxu0 0.0
  %2951 = vmatpush1.msra.mxu0 0.0
  %2952 = vmatprep.subr.mxu0 0.0
  %2953 = vmatpush1.msra.mxu0 0.0
  %2954 = vmatprep.subr.mxu0 0.0
  %2955 = vmatpush1.msra.mxu0 0.0
  %2956 = vmatprep.subr.mxu0 0.0
  %2957 = vmatpush1.msra.mxu0 0.0
  %2958 = vmatprep.subr.mxu0 0.0
  %2959 = vmatpush1.msra.mxu0 0.0
  %2960 = vmatprep.subr.mxu0 0.0
  %2961 = vmatpush1.msra.mxu0 0.0
  %2962 = vmatprep.subr.mxu0 0.0
  %2963 = vmatpush1.msra.mxu0 0.0
  %2964 = vmatprep.subr.mxu0 0.0
  %2965 = vmatpush1.msra.mxu0 0.0
  %2966 = vmatprep.subr.mxu0 0.0
  %2967 = vmatpush1.msra.mxu0 0.0
  %2968 = vmatprep.subr.mxu0 0.0
  %2969 = vmatpush1.msra.mxu0 0.0
  %2970 = vmatprep.subr.mxu0 0.0
  %2971 = vmatpush1.msra.mxu0 0.0
  %2972 = vmatprep.subr.mxu0 0.0
  %2973 = vmatpush1.msra.mxu0 0.0
  %2974 = vmatprep.subr.mxu0 0.0
  %2975 = vmatpush1.msra.mxu0 0.0
  %2976 = vmatprep.subr.mxu0 0.0
  %2977 = vmatpush1.msra.mxu0 0.0
  %2978 = vmatprep.subr.mxu0 0.0
  %2979 = vmatpush1.msra.mxu0 0.0
  %2980 = vmatprep.subr.mxu0 0.0
  %2981 = vmatpush1.msra.mxu0 0.0
  %2982 = vmatprep.subr.mxu0 0.0
  %2983 = vmatpush1.msra.mxu0 0.0
  %2984 = vmatprep.subr.mxu0 0.0
  %2985 = vmatpush1.msra.mxu0 0.0
  %2986 = vmatprep.subr.mxu0 0.0
  %2987 = vmatpush1.msra.mxu0 0.0
  %2988 = vmatprep.subr.mxu0 0.0
  %2989 = vmatpush1.msra.mxu0 0.0
  %2990 = vmatprep.subr.mxu0 0.0
  %2991 = vmatpush1.msra.mxu0 0.0
  %2992 = vmatprep.subr.mxu0 0.0
  %2993 = vmatpush1.msra.mxu0 0.0
  %2994 = vmatprep.subr.mxu0 0.0
  %2995 = vmatpush1.msra.mxu0 0.0
  %2996 = vmatprep.subr.mxu0 0.0
  %2997 = vmatpush1.msra.mxu0 0.0
  %2998 = vmatprep.subr.mxu0 0.0
  %2999 = vmatpush1.msra.mxu0 0.0
  %3000 = vmatprep.subr.mxu0 0.0
  %3001 = vmatpush1.msra.mxu0 0.0
  %3002 = vmatprep.subr.mxu0 0.0
  %3003 = vmatpush1.msra.mxu0 0.0
  %3004 = vmatprep.mubr.f32.mxu0 0.0
  %3005 = vmatmul.mubr.f32.gmra.mrb[0].mxu0 %v2938
  %v3006 = vpop.f32.mrb[0].mxu0
  %v3007 = vadd.f32 0.0, %v3006
  %v3008 = vpop.f32.mrb[0].mxu0
  %v3009 = vadd.f32 0.0, %v3008
  %3010 = vdwg.mxu0
  %v3013 = vcombine.low %v3007, %v3009
  %v3015 = vunpack.c.l.s4 1966171168
  %v3016 = vunpack.c.0.s8 %v3015
  %v3017 = vlaneseq
  %v3018 = vshrl.u32 %v3017, 7
  %v3019 = vsub.s32 %v3016, %v3018
  %v3020 = vrot.slane %v3013, %v3019
  %v3022 = vunpack.c.l.s4 1966171168
  %v3023 = vunpack.c.0.s8 %v3022
  %v3024 = vlaneseq
  %v3025 = vshrl.u32 %v3024, 7
  %v3026 = vsub.s32 %v3023, %v3025
  %v3027 = vrot.slane %v3020, %v3026
  %v3029 = vadd.f32 %v2834, %v3027
  %v3030 = vrot.slane %v1951, 5
  %v3031 = vsel %vm232, %v3030, 0
  %3033 = vmatprep.subr.mxu0 %v2930
  %3034 = vmatpush1.msra.mxu0 %v2929
  %3035 = vmatprep.subr.mxu0 %v2932
  %3036 = vmatpush1.msra.mxu0 %v2931
  %3037 = vmatprep.subr.mxu0 %v2934
  %3038 = vmatpush1.msra.mxu0 %v2933
  %3039 = vmatprep.subr.mxu0 %v2936
  %3040 = vmatpush1.msra.mxu0 %v2935
  %3041 = vmatprep.subr.mxu0 0.0
  %3042 = vmatpush1.msra.mxu0 0.0
  %3043 = vmatprep.subr.mxu0 0.0
  %3044 = vmatpush1.msra.mxu0 0.0
  %3045 = vmatprep.subr.mxu0 0.0
  %3046 = vmatpush1.msra.mxu0 0.0
  %3047 = vmatprep.subr.mxu0 0.0
  %3048 = vmatpush1.msra.mxu0 0.0
  %3049 = vmatprep.subr.mxu0 0.0
  %3050 = vmatpush1.msra.mxu0 0.0
  %3051 = vmatprep.subr.mxu0 0.0
  %3052 = vmatpush1.msra.mxu0 0.0
  %3053 = vmatprep.subr.mxu0 0.0
  %3054 = vmatpush1.msra.mxu0 0.0
  %3055 = vmatprep.subr.mxu0 0.0
  %3056 = vmatpush1.msra.mxu0 0.0
  %3057 = vmatprep.subr.mxu0 0.0
  %3058 = vmatpush1.msra.mxu0 0.0
  %3059 = vmatprep.subr.mxu0 0.0
  %3060 = vmatpush1.msra.mxu0 0.0
  %3061 = vmatprep.subr.mxu0 0.0
  %3062 = vmatpush1.msra.mxu0 0.0
  %3063 = vmatprep.subr.mxu0 0.0
  %3064 = vmatpush1.msra.mxu0 0.0
  %3065 = vmatprep.subr.mxu0 0.0
  %3066 = vmatpush1.msra.mxu0 0.0
  %3067 = vmatprep.subr.mxu0 0.0
  %3068 = vmatpush1.msra.mxu0 0.0
  %3069 = vmatprep.subr.mxu0 0.0
  %3070 = vmatpush1.msra.mxu0 0.0
  %3071 = vmatprep.subr.mxu0 0.0
  %3072 = vmatpush1.msra.mxu0 0.0
  %3073 = vmatprep.subr.mxu0 0.0
  %3074 = vmatpush1.msra.mxu0 0.0
  %3075 = vmatprep.subr.mxu0 0.0
  %3076 = vmatpush1.msra.mxu0 0.0
  %3077 = vmatprep.subr.mxu0 0.0
  %3078 = vmatpush1.msra.mxu0 0.0
  %3079 = vmatprep.subr.mxu0 0.0
  %3080 = vmatpush1.msra.mxu0 0.0
  %3081 = vmatprep.subr.mxu0 0.0
  %3082 = vmatpush1.msra.mxu0 0.0
  %3083 = vmatprep.subr.mxu0 0.0
  %3084 = vmatpush1.msra.mxu0 0.0
  %3085 = vmatprep.subr.mxu0 0.0
  %3086 = vmatpush1.msra.mxu0 0.0
  %3087 = vmatprep.subr.mxu0 0.0
  %3088 = vmatpush1.msra.mxu0 0.0
  %3089 = vmatprep.subr.mxu0 0.0
  %3090 = vmatpush1.msra.mxu0 0.0
  %3091 = vmatprep.subr.mxu0 0.0
  %3092 = vmatpush1.msra.mxu0 0.0
  %3093 = vmatprep.subr.mxu0 0.0
  %3094 = vmatpush1.msra.mxu0 0.0
  %3095 = vmatprep.subr.mxu0 0.0
  %3096 = vmatpush1.msra.mxu0 0.0
  %3097 = vmatprep.mubr.f32.mxu0 0.0
  %3098 = vmatmul.mubr.f32.gmra.mrb[0].mxu0 %v3031
  %v3099 = vpop.f32.mrb[0].mxu0
  %v3100 = vadd.f32 0.0, %v3099
  %v3101 = vpop.f32.mrb[0].mxu0
  %v3102 = vadd.f32 0.0, %v3101
  %3103 = vdwg.mxu0
  %v3106 = vcombine.low %v3100, %v3102
  %v3108 = vunpack.c.l.s4 1966171168
  %v3109 = vunpack.c.0.s8 %v3108
  %v3110 = vlaneseq
  %v3111 = vshrl.u32 %v3110, 7
  %v3112 = vsub.s32 %v3109, %v3111
  %v3113 = vrot.slane %v3106, %v3112
  %v3115 = vunpack.c.l.s4 1966171168
  %v3116 = vunpack.c.0.s8 %v3115
  %v3117 = vlaneseq
  %v3118 = vshrl.u32 %v3117, 7
  %v3119 = vsub.s32 %v3116, %v3118
  %v3120 = vrot.slane %v3113, %v3119
  %v3122 = vadd.f32 %v2927, %v3120
  %s3123 = scalar_lea.vmem %s7, 384
  %v3124 = vld [vmem:[%s3123] sm:$0xff]
  %v3125 = vld [vmem:[%s3123 + $0x8] sm:$0xff]
  %v3126 = vld [vmem:[%s3123 + $0x10] sm:$0xff]
  %v3127 = vld [vmem:[%s3123 + $0x18] sm:$0xff]
  %v3128 = vld [vmem:[%s3123 + $0x20] sm:$0xff]
  %v3129 = vld [vmem:[%s3123 + $0x28] sm:$0xff]
  %v3130 = vld [vmem:[%s3123 + $0x30] sm:$0xff]
  %v3131 = vld [vmem:[%s3123 + $0x38] sm:$0xff]
  %v3132 = vrot.slane %v1949, 6
  %v3133 = vsel %vm232, %v3132, 0
  %3135 = vmatprep.subr.mxu0 %v3125
  %3136 = vmatpush1.msra.mxu0 %v3124
  %3137 = vmatprep.subr.mxu0 %v3127
  %3138 = vmatpush1.msra.mxu0 %v3126
  %3139 = vmatprep.subr.mxu0 %v3129
  %3140 = vmatpush1.msra.mxu0 %v3128
  %3141 = vmatprep.subr.mxu0 %v3131
  %3142 = vmatpush1.msra.mxu0 %v3130
  %3143 = vmatprep.subr.mxu0 0.0
  %3144 = vmatpush1.msra.mxu0 0.0
  %3145 = vmatprep.subr.mxu0 0.0
  %3146 = vmatpush1.msra.mxu0 0.0
  %3147 = vmatprep.subr.mxu0 0.0
  %3148 = vmatpush1.msra.mxu0 0.0
  %3149 = vmatprep.subr.mxu0 0.0
  %3150 = vmatpush1.msra.mxu0 0.0
  %3151 = vmatprep.subr.mxu0 0.0
  %3152 = vmatpush1.msra.mxu0 0.0
  %3153 = vmatprep.subr.mxu0 0.0
  %3154 = vmatpush1.msra.mxu0 0.0
  %3155 = vmatprep.subr.mxu0 0.0
  %3156 = vmatpush1.msra.mxu0 0.0
  %3157 = vmatprep.subr.mxu0 0.0
  %3158 = vmatpush1.msra.mxu0 0.0
  %3159 = vmatprep.subr.mxu0 0.0
  %3160 = vmatpush1.msra.mxu0 0.0
  %3161 = vmatprep.subr.mxu0 0.0
  %3162 = vmatpush1.msra.mxu0 0.0
  %3163 = vmatprep.subr.mxu0 0.0
  %3164 = vmatpush1.msra.mxu0 0.0
  %3165 = vmatprep.subr.mxu0 0.0
  %3166 = vmatpush1.msra.mxu0 0.0
  %3167 = vmatprep.subr.mxu0 0.0
  %3168 = vmatpush1.msra.mxu0 0.0
  %3169 = vmatprep.subr.mxu0 0.0
  %3170 = vmatpush1.msra.mxu0 0.0
  %3171 = vmatprep.subr.mxu0 0.0
  %3172 = vmatpush1.msra.mxu0 0.0
  %3173 = vmatprep.subr.mxu0 0.0
  %3174 = vmatpush1.msra.mxu0 0.0
  %3175 = vmatprep.subr.mxu0 0.0
  %3176 = vmatpush1.msra.mxu0 0.0
  %3177 = vmatprep.subr.mxu0 0.0
  %3178 = vmatpush1.msra.mxu0 0.0
  %3179 = vmatprep.subr.mxu0 0.0
  %3180 = vmatpush1.msra.mxu0 0.0
  %3181 = vmatprep.subr.mxu0 0.0
  %3182 = vmatpush1.msra.mxu0 0.0
  %3183 = vmatprep.subr.mxu0 0.0
  %3184 = vmatpush1.msra.mxu0 0.0
  %3185 = vmatprep.subr.mxu0 0.0
  %3186 = vmatpush1.msra.mxu0 0.0
  %3187 = vmatprep.subr.mxu0 0.0
  %3188 = vmatpush1.msra.mxu0 0.0
  %3189 = vmatprep.subr.mxu0 0.0
  %3190 = vmatpush1.msra.mxu0 0.0
  %3191 = vmatprep.subr.mxu0 0.0
  %3192 = vmatpush1.msra.mxu0 0.0
  %3193 = vmatprep.subr.mxu0 0.0
  %3194 = vmatpush1.msra.mxu0 0.0
  %3195 = vmatprep.subr.mxu0 0.0
  %3196 = vmatpush1.msra.mxu0 0.0
  %3197 = vmatprep.subr.mxu0 0.0
  %3198 = vmatpush1.msra.mxu0 0.0
  %3199 = vmatprep.mubr.f32.mxu0 0.0
  %3200 = vmatmul.mubr.f32.gmra.mrb[0].mxu0 %v3133
  %v3201 = vpop.f32.mrb[0].mxu0
  %v3202 = vadd.f32 0.0, %v3201
  %v3203 = vpop.f32.mrb[0].mxu0
  %v3204 = vadd.f32 0.0, %v3203
  %3205 = vdwg.mxu0
  %v3208 = vcombine.low %v3202, %v3204
  %v3210 = vunpack.c.l.s4 1966171168
  %v3211 = vunpack.c.0.s8 %v3210
  %v3212 = vlaneseq
  %v3213 = vshrl.u32 %v3212, 7
  %v3214 = vsub.s32 %v3211, %v3213
  %v3215 = vrot.slane %v3208, %v3214
  %v3217 = vunpack.c.l.s4 1966171168
  %v3218 = vunpack.c.0.s8 %v3217
  %v3219 = vlaneseq
  %v3220 = vshrl.u32 %v3219, 7
  %v3221 = vsub.s32 %v3218, %v3220
  %v3222 = vrot.slane %v3215, %v3221
  %v3224 = vadd.f32 %v3029, %v3222
  %v3225 = vrot.slane %v1951, 6
  %v3226 = vsel %vm232, %v3225, 0
  %3228 = vmatprep.subr.mxu0 %v3125
  %3229 = vmatpush1.msra.mxu0 %v3124
  %3230 = vmatprep.subr.mxu0 %v3127
  %3231 = vmatpush1.msra.mxu0 %v3126
  %3232 = vmatprep.subr.mxu0 %v3129
  %3233 = vmatpush1.msra.mxu0 %v3128
  %3234 = vmatprep.subr.mxu0 %v3131
  %3235 = vmatpush1.msra.mxu0 %v3130
  %3236 = vmatprep.subr.mxu0 0.0
  %3237 = vmatpush1.msra.mxu0 0.0
  %3238 = vmatprep.subr.mxu0 0.0
  %3239 = vmatpush1.msra.mxu0 0.0
  %3240 = vmatprep.subr.mxu0 0.0
  %3241 = vmatpush1.msra.mxu0 0.0
  %3242 = vmatprep.subr.mxu0 0.0
  %3243 = vmatpush1.msra.mxu0 0.0
  %3244 = vmatprep.subr.mxu0 0.0
  %3245 = vmatpush1.msra.mxu0 0.0
  %3246 = vmatprep.subr.mxu0 0.0
  %3247 = vmatpush1.msra.mxu0 0.0
  %3248 = vmatprep.subr.mxu0 0.0
  %3249 = vmatpush1.msra.mxu0 0.0
  %3250 = vmatprep.subr.mxu0 0.0
  %3251 = vmatpush1.msra.mxu0 0.0
  %3252 = vmatprep.subr.mxu0 0.0
  %3253 = vmatpush1.msra.mxu0 0.0
  %3254 = vmatprep.subr.mxu0 0.0
  %3255 = vmatpush1.msra.mxu0 0.0
  %3256 = vmatprep.subr.mxu0 0.0
  %3257 = vmatpush1.msra.mxu0 0.0
  %3258 = vmatprep.subr.mxu0 0.0
  %3259 = vmatpush1.msra.mxu0 0.0
  %3260 = vmatprep.subr.mxu0 0.0
  %3261 = vmatpush1.msra.mxu0 0.0
  %3262 = vmatprep.subr.mxu0 0.0
  %3263 = vmatpush1.msra.mxu0 0.0
  %3264 = vmatprep.subr.mxu0 0.0
  %3265 = vmatpush1.msra.mxu0 0.0
  %3266 = vmatprep.subr.mxu0 0.0
  %3267 = vmatpush1.msra.mxu0 0.0
  %3268 = vmatprep.subr.mxu0 0.0
  %3269 = vmatpush1.msra.mxu0 0.0
  %3270 = vmatprep.subr.mxu0 0.0
  %3271 = vmatpush1.msra.mxu0 0.0
  %3272 = vmatprep.subr.mxu0 0.0
  %3273 = vmatpush1.msra.mxu0 0.0
  %3274 = vmatprep.subr.mxu0 0.0
  %3275 = vmatpush1.msra.mxu0 0.0
  %3276 = vmatprep.subr.mxu0 0.0
  %3277 = vmatpush1.msra.mxu0 0.0
  %3278 = vmatprep.subr.mxu0 0.0
  %3279 = vmatpush1.msra.mxu0 0.0
  %3280 = vmatprep.subr.mxu0 0.0
  %3281 = vmatpush1.msra.mxu0 0.0
  %3282 = vmatprep.subr.mxu0 0.0
  %3283 = vmatpush1.msra.mxu0 0.0
  %3284 = vmatprep.subr.mxu0 0.0
  %3285 = vmatpush1.msra.mxu0 0.0
  %3286 = vmatprep.subr.mxu0 0.0
  %3287 = vmatpush1.msra.mxu0 0.0
  %3288 = vmatprep.subr.mxu0 0.0
  %3289 = vmatpush1.msra.mxu0 0.0
  %3290 = vmatprep.subr.mxu0 0.0
  %3291 = vmatpush1.msra.mxu0 0.0
  %3292 = vmatprep.mubr.f32.mxu0 0.0
  %3293 = vmatmul.mubr.f32.gmra.mrb[0].mxu0 %v3226
  %v3294 = vpop.f32.mrb[0].mxu0
  %v3295 = vadd.f32 0.0, %v3294
  %v3296 = vpop.f32.mrb[0].mxu0
  %v3297 = vadd.f32 0.0, %v3296
  %3298 = vdwg.mxu0
  %v3301 = vcombine.low %v3295, %v3297
  %v3303 = vunpack.c.l.s4 1966171168
  %v3304 = vunpack.c.0.s8 %v3303
  %v3305 = vlaneseq
  %v3306 = vshrl.u32 %v3305, 7
  %v3307 = vsub.s32 %v3304, %v3306
  %v3308 = vrot.slane %v3301, %v3307
  %v3310 = vunpack.c.l.s4 1966171168
  %v3311 = vunpack.c.0.s8 %v3310
  %v3312 = vlaneseq
  %v3313 = vshrl.u32 %v3312, 7
  %v3314 = vsub.s32 %v3311, %v3313
  %v3315 = vrot.slane %v3308, %v3314
  %v3317 = vadd.f32 %v3122, %v3315
  %s3318 = scalar_lea.vmem %s7, 448
  %v3319 = vld [vmem:[%s3318] sm:$0xff]
  %v3320 = vld [vmem:[%s3318 + $0x8] sm:$0xff]
  %v3321 = vld [vmem:[%s3318 + $0x10] sm:$0xff]
  %v3322 = vld [vmem:[%s3318 + $0x18] sm:$0xff]
  %v3323 = vld [vmem:[%s3318 + $0x20] sm:$0xff]
  %v3324 = vld [vmem:[%s3318 + $0x28] sm:$0xff]
  %v3325 = vld [vmem:[%s3318 + $0x30] sm:$0xff]
  %v3326 = vld [vmem:[%s3318 + $0x38] sm:$0xff]
  %v3327 = vrot.slane %v1949, 7
  %v3328 = vsel %vm232, %v3327, 0
  %3330 = vmatprep.subr.mxu0 %v3320
  %3331 = vmatpush1.msra.mxu0 %v3319
  %3332 = vmatprep.subr.mxu0 %v3322
  %3333 = vmatpush1.msra.mxu0 %v3321
  %3334 = vmatprep.subr.mxu0 %v3324
  %3335 = vmatpush1.msra.mxu0 %v3323
  %3336 = vmatprep.subr.mxu0 %v3326
  %3337 = vmatpush1.msra.mxu0 %v3325
  %3338 = vmatprep.subr.mxu0 0.0
  %3339 = vmatpush1.msra.mxu0 0.0
  %3340 = vmatprep.subr.mxu0 0.0
  %3341 = vmatpush1.msra.mxu0 0.0
  %3342 = vmatprep.subr.mxu0 0.0
  %3343 = vmatpush1.msra.mxu0 0.0
  %3344 = vmatprep.subr.mxu0 0.0
  %3345 = vmatpush1.msra.mxu0 0.0
  %3346 = vmatprep.subr.mxu0 0.0
  %3347 = vmatpush1.msra.mxu0 0.0
  %3348 = vmatprep.subr.mxu0 0.0
  %3349 = vmatpush1.msra.mxu0 0.0
  %3350 = vmatprep.subr.mxu0 0.0
  %3351 = vmatpush1.msra.mxu0 0.0
  %3352 = vmatprep.subr.mxu0 0.0
  %3353 = vmatpush1.msra.mxu0 0.0
  %3354 = vmatprep.subr.mxu0 0.0
  %3355 = vmatpush1.msra.mxu0 0.0
  %3356 = vmatprep.subr.mxu0 0.0
  %3357 = vmatpush1.msra.mxu0 0.0
  %3358 = vmatprep.subr.mxu0 0.0
  %3359 = vmatpush1.msra.mxu0 0.0
  %3360 = vmatprep.subr.mxu0 0.0
  %3361 = vmatpush1.msra.mxu0 0.0
  %3362 = vmatprep.subr.mxu0 0.0
  %3363 = vmatpush1.msra.mxu0 0.0
  %3364 = vmatprep.subr.mxu0 0.0
  %3365 = vmatpush1.msra.mxu0 0.0
  %3366 = vmatprep.subr.mxu0 0.0
  %3367 = vmatpush1.msra.mxu0 0.0
  %3368 = vmatprep.subr.mxu0 0.0
  %3369 = vmatpush1.msra.mxu0 0.0
  %3370 = vmatprep.subr.mxu0 0.0
  %3371 = vmatpush1.msra.mxu0 0.0
  %3372 = vmatprep.subr.mxu0 0.0
  %3373 = vmatpush1.msra.mxu0 0.0
  %3374 = vmatprep.subr.mxu0 0.0
  %3375 = vmatpush1.msra.mxu0 0.0
  %3376 = vmatprep.subr.mxu0 0.0
  %3377 = vmatpush1.msra.mxu0 0.0
  %3378 = vmatprep.subr.mxu0 0.0
  %3379 = vmatpush1.msra.mxu0 0.0
  %3380 = vmatprep.subr.mxu0 0.0
  %3381 = vmatpush1.msra.mxu0 0.0
  %3382 = vmatprep.subr.mxu0 0.0
  %3383 = vmatpush1.msra.mxu0 0.0
  %3384 = vmatprep.subr.mxu0 0.0
  %3385 = vmatpush1.msra.mxu0 0.0
  %3386 = vmatprep.subr.mxu0 0.0
  %3387 = vmatpush1.msra.mxu0 0.0
  %3388 = vmatprep.subr.mxu0 0.0
  %3389 = vmatpush1.msra.mxu0 0.0
  %3390 = vmatprep.subr.mxu0 0.0
  %3391 = vmatpush1.msra.mxu0 0.0
  %3392 = vmatprep.subr.mxu0 0.0
  %3393 = vmatpush1.msra.mxu0 0.0
  %3394 = vmatprep.mubr.f32.mxu0 0.0
  %3395 = vmatmul.mubr.f32.gmra.mrb[0].mxu0 %v3328
  %v3396 = vpop.f32.mrb[0].mxu0
  %v3397 = vadd.f32 0.0, %v3396
  %v3398 = vpop.f32.mrb[0].mxu0
  %v3399 = vadd.f32 0.0, %v3398
  %3400 = vdwg.mxu0
  %v3403 = vcombine.low %v3397, %v3399
  %v3405 = vunpack.c.l.s4 1966171168
  %v3406 = vunpack.c.0.s8 %v3405
  %v3407 = vlaneseq
  %v3408 = vshrl.u32 %v3407, 7
  %v3409 = vsub.s32 %v3406, %v3408
  %v3410 = vrot.slane %v3403, %v3409
  %v3412 = vunpack.c.l.s4 1966171168
  %v3413 = vunpack.c.0.s8 %v3412
  %v3414 = vlaneseq
  %v3415 = vshrl.u32 %v3414, 7
  %v3416 = vsub.s32 %v3413, %v3415
  %v3417 = vrot.slane %v3410, %v3416
  %v3419 = vadd.f32 %v3224, %v3417
  %v3420 = vrot.slane %v1951, 7
  %v3421 = vsel %vm232, %v3420, 0
  %3423 = vmatprep.subr.mxu0 %v3320
  %3424 = vmatpush1.msra.mxu0 %v3319
  %3425 = vmatprep.subr.mxu0 %v3322
  %3426 = vmatpush1.msra.mxu0 %v3321
  %3427 = vmatprep.subr.mxu0 %v3324
  %3428 = vmatpush1.msra.mxu0 %v3323
  %3429 = vmatprep.subr.mxu0 %v3326
  %3430 = vmatpush1.msra.mxu0 %v3325
  %3431 = vmatprep.subr.mxu0 0.0
  %3432 = vmatpush1.msra.mxu0 0.0
  %3433 = vmatprep.subr.mxu0 0.0
  %3434 = vmatpush1.msra.mxu0 0.0
  %3435 = vmatprep.subr.mxu0 0.0
  %3436 = vmatpush1.msra.mxu0 0.0
  %3437 = vmatprep.subr.mxu0 0.0
  %3438 = vmatpush1.msra.mxu0 0.0
  %3439 = vmatprep.subr.mxu0 0.0
  %3440 = vmatpush1.msra.mxu0 0.0
  %3441 = vmatprep.subr.mxu0 0.0
  %3442 = vmatpush1.msra.mxu0 0.0
  %3443 = vmatprep.subr.mxu0 0.0
  %3444 = vmatpush1.msra.mxu0 0.0
  %3445 = vmatprep.subr.mxu0 0.0
  %3446 = vmatpush1.msra.mxu0 0.0
  %3447 = vmatprep.subr.mxu0 0.0
  %3448 = vmatpush1.msra.mxu0 0.0
  %3449 = vmatprep.subr.mxu0 0.0
  %3450 = vmatpush1.msra.mxu0 0.0
  %3451 = vmatprep.subr.mxu0 0.0
  %3452 = vmatpush1.msra.mxu0 0.0
  %3453 = vmatprep.subr.mxu0 0.0
  %3454 = vmatpush1.msra.mxu0 0.0
  %3455 = vmatprep.subr.mxu0 0.0
  %3456 = vmatpush1.msra.mxu0 0.0
  %3457 = vmatprep.subr.mxu0 0.0
  %3458 = vmatpush1.msra.mxu0 0.0
  %3459 = vmatprep.subr.mxu0 0.0
  %3460 = vmatpush1.msra.mxu0 0.0
  %3461 = vmatprep.subr.mxu0 0.0
  %3462 = vmatpush1.msra.mxu0 0.0
  %3463 = vmatprep.subr.mxu0 0.0
  %3464 = vmatpush1.msra.mxu0 0.0
  %3465 = vmatprep.subr.mxu0 0.0
  %3466 = vmatpush1.msra.mxu0 0.0
  %3467 = vmatprep.subr.mxu0 0.0
  %3468 = vmatpush1.msra.mxu0 0.0
  %3469 = vmatprep.subr.mxu0 0.0
  %3470 = vmatpush1.msra.mxu0 0.0
  %3471 = vmatprep.subr.mxu0 0.0
  %3472 = vmatpush1.msra.mxu0 0.0
  %3473 = vmatprep.subr.mxu0 0.0
  %3474 = vmatpush1.msra.mxu0 0.0
  %3475 = vmatprep.subr.mxu0 0.0
  %3476 = vmatpush1.msra.mxu0 0.0
  %3477 = vmatprep.subr.mxu0 0.0
  %3478 = vmatpush1.msra.mxu0 0.0
  %3479 = vmatprep.subr.mxu0 0.0
  %3480 = vmatpush1.msra.mxu0 0.0
  %3481 = vmatprep.subr.mxu0 0.0
  %3482 = vmatpush1.msra.mxu0 0.0
  %3483 = vmatprep.subr.mxu0 0.0
  %3484 = vmatpush1.msra.mxu0 0.0
  %3485 = vmatprep.subr.mxu0 0.0
  %3486 = vmatpush1.msra.mxu0 0.0
  %3487 = vmatprep.mubr.f32.mxu0 0.0
  %3488 = vmatmul.mubr.f32.gmra.mrb[0].mxu0 %v3421
  %v3489 = vpop.f32.mrb[0].mxu0
  %v3490 = vadd.f32 0.0, %v3489
  %v3491 = vpop.f32.mrb[0].mxu0
  %v3492 = vadd.f32 0.0, %v3491
  %3493 = vdwg.mxu0
  %v3496 = vcombine.low %v3490, %v3492
  %v3498 = vunpack.c.l.s4 1966171168
  %v3499 = vunpack.c.0.s8 %v3498
  %v3500 = vlaneseq
  %v3501 = vshrl.u32 %v3500, 7
  %v3502 = vsub.s32 %v3499, %v3501
  %v3503 = vrot.slane %v3496, %v3502
  %v3505 = vunpack.c.l.s4 1966171168
  %v3506 = vunpack.c.0.s8 %v3505
  %v3507 = vlaneseq
  %v3508 = vshrl.u32 %v3507, 7
  %v3509 = vsub.s32 %v3506, %v3508
  %v3510 = vrot.slane %v3503, %v3509
  %v3512 = vadd.f32 %v3317, %v3510
  %s3513 = scalar_lea.vmem %s7, 512
  %v3514 = vld [vmem:[%s3513] sm:$0xff]
  %v3515 = vld [vmem:[%s3513 + $0x8] sm:$0xff]
  %v3516 = vld [vmem:[%s3513 + $0x10] sm:$0xff]
  %v3517 = vld [vmem:[%s3513 + $0x18] sm:$0xff]
  %v3518 = vld [vmem:[%s3513 + $0x20] sm:$0xff]
  %v3519 = vld [vmem:[%s3513 + $0x28] sm:$0xff]
  %v3520 = vld [vmem:[%s3513 + $0x30] sm:$0xff]
  %v3521 = vld [vmem:[%s3513 + $0x38] sm:$0xff]
  %v3523 = vsel %vm232, %v1950, 0
  %3525 = vmatprep.subr.mxu0 %v3515
  %3526 = vmatpush1.msra.mxu0 %v3514
  %3527 = vmatprep.subr.mxu0 %v3517
  %3528 = vmatpush1.msra.mxu0 %v3516
  %3529 = vmatprep.subr.mxu0 %v3519
  %3530 = vmatpush1.msra.mxu0 %v3518
  %3531 = vmatprep.subr.mxu0 %v3521
  %3532 = vmatpush1.msra.mxu0 %v3520
  %3533 = vmatprep.subr.mxu0 0.0
  %3534 = vmatpush1.msra.mxu0 0.0
  %3535 = vmatprep.subr.mxu0 0.0
  %3536 = vmatpush1.msra.mxu0 0.0
  %3537 = vmatprep.subr.mxu0 0.0
  %3538 = vmatpush1.msra.mxu0 0.0
  %3539 = vmatprep.subr.mxu0 0.0
  %3540 = vmatpush1.msra.mxu0 0.0
  %3541 = vmatprep.subr.mxu0 0.0
  %3542 = vmatpush1.msra.mxu0 0.0
  %3543 = vmatprep.subr.mxu0 0.0
  %3544 = vmatpush1.msra.mxu0 0.0
  %3545 = vmatprep.subr.mxu0 0.0
  %3546 = vmatpush1.msra.mxu0 0.0
  %3547 = vmatprep.subr.mxu0 0.0
  %3548 = vmatpush1.msra.mxu0 0.0
  %3549 = vmatprep.subr.mxu0 0.0
  %3550 = vmatpush1.msra.mxu0 0.0
  %3551 = vmatprep.subr.mxu0 0.0
  %3552 = vmatpush1.msra.mxu0 0.0
  %3553 = vmatprep.subr.mxu0 0.0
  %3554 = vmatpush1.msra.mxu0 0.0
  %3555 = vmatprep.subr.mxu0 0.0
  %3556 = vmatpush1.msra.mxu0 0.0
  %3557 = vmatprep.subr.mxu0 0.0
  %3558 = vmatpush1.msra.mxu0 0.0
  %3559 = vmatprep.subr.mxu0 0.0
  %3560 = vmatpush1.msra.mxu0 0.0
  %3561 = vmatprep.subr.mxu0 0.0
  %3562 = vmatpush1.msra.mxu0 0.0
  %3563 = vmatprep.subr.mxu0 0.0
  %3564 = vmatpush1.msra.mxu0 0.0
  %3565 = vmatprep.subr.mxu0 0.0
  %3566 = vmatpush1.msra.mxu0 0.0
  %3567 = vmatprep.subr.mxu0 0.0
  %3568 = vmatpush1.msra.mxu0 0.0
  %3569 = vmatprep.subr.mxu0 0.0
  %3570 = vmatpush1.msra.mxu0 0.0
  %3571 = vmatprep.subr.mxu0 0.0
  %3572 = vmatpush1.msra.mxu0 0.0
  %3573 = vmatprep.subr.mxu0 0.0
  %3574 = vmatpush1.msra.mxu0 0.0
  %3575 = vmatprep.subr.mxu0 0.0
  %3576 = vmatpush1.msra.mxu0 0.0
  %3577 = vmatprep.subr.mxu0 0.0
  %3578 = vmatpush1.msra.mxu0 0.0
  %3579 = vmatprep.subr.mxu0 0.0
  %3580 = vmatpush1.msra.mxu0 0.0
  %3581 = vmatprep.subr.mxu0 0.0
  %3582 = vmatpush1.msra.mxu0 0.0
  %3583 = vmatprep.subr.mxu0 0.0
  %3584 = vmatpush1.msra.mxu0 0.0
  %3585 = vmatprep.subr.mxu0 0.0
  %3586 = vmatpush1.msra.mxu0 0.0
  %3587 = vmatprep.subr.mxu0 0.0
  %3588 = vmatpush1.msra.mxu0 0.0
  %3589 = vmatprep.mubr.f32.mxu0 0.0
  %3590 = vmatmul.mubr.f32.gmra.mrb[0].mxu0 %v3523
  %v3591 = vpop.f32.mrb[0].mxu0
  %v3592 = vadd.f32 0.0, %v3591
  %v3593 = vpop.f32.mrb[0].mxu0
  %v3594 = vadd.f32 0.0, %v3593
  %3595 = vdwg.mxu0
  %v3598 = vcombine.low %v3592, %v3594
  %v3600 = vunpack.c.l.s4 1966171168
  %v3601 = vunpack.c.0.s8 %v3600
  %v3602 = vlaneseq
  %v3603 = vshrl.u32 %v3602, 7
  %v3604 = vsub.s32 %v3601, %v3603
  %v3605 = vrot.slane %v3598, %v3604
  %v3607 = vunpack.c.l.s4 1966171168
  %v3608 = vunpack.c.0.s8 %v3607
  %v3609 = vlaneseq
  %v3610 = vshrl.u32 %v3609, 7
  %v3611 = vsub.s32 %v3608, %v3610
  %v3612 = vrot.slane %v3605, %v3611
  %v3614 = vadd.f32 %v3419, %v3612
  %v3616 = vsel %vm232, %v1952, 0
  %3618 = vmatprep.subr.mxu0 %v3515
  %3619 = vmatpush1.msra.mxu0 %v3514
  %3620 = vmatprep.subr.mxu0 %v3517
  %3621 = vmatpush1.msra.mxu0 %v3516
  %3622 = vmatprep.subr.mxu0 %v3519
  %3623 = vmatpush1.msra.mxu0 %v3518
  %3624 = vmatprep.subr.mxu0 %v3521
  %3625 = vmatpush1.msra.mxu0 %v3520
  %3626 = vmatprep.subr.mxu0 0.0
  %3627 = vmatpush1.msra.mxu0 0.0
  %3628 = vmatprep.subr.mxu0 0.0
  %3629 = vmatpush1.msra.mxu0 0.0
  %3630 = vmatprep.subr.mxu0 0.0
  %3631 = vmatpush1.msra.mxu0 0.0
  %3632 = vmatprep.subr.mxu0 0.0
  %3633 = vmatpush1.msra.mxu0 0.0
  %3634 = vmatprep.subr.mxu0 0.0
  %3635 = vmatpush1.msra.mxu0 0.0
  %3636 = vmatprep.subr.mxu0 0.0
  %3637 = vmatpush1.msra.mxu0 0.0
  %3638 = vmatprep.subr.mxu0 0.0
  %3639 = vmatpush1.msra.mxu0 0.0
  %3640 = vmatprep.subr.mxu0 0.0
  %3641 = vmatpush1.msra.mxu0 0.0
  %3642 = vmatprep.subr.mxu0 0.0
  %3643 = vmatpush1.msra.mxu0 0.0
  %3644 = vmatprep.subr.mxu0 0.0
  %3645 = vmatpush1.msra.mxu0 0.0
  %3646 = vmatprep.subr.mxu0 0.0
  %3647 = vmatpush1.msra.mxu0 0.0
  %3648 = vmatprep.subr.mxu0 0.0
  %3649 = vmatpush1.msra.mxu0 0.0
  %3650 = vmatprep.subr.mxu0 0.0
  %3651 = vmatpush1.msra.mxu0 0.0
  %3652 = vmatprep.subr.mxu0 0.0
  %3653 = vmatpush1.msra.mxu0 0.0
  %3654 = vmatprep.subr.mxu0 0.0
  %3655 = vmatpush1.msra.mxu0 0.0
  %3656 = vmatprep.subr.mxu0 0.0
  %3657 = vmatpush1.msra.mxu0 0.0
  %3658 = vmatprep.subr.mxu0 0.0
  %3659 = vmatpush1.msra.mxu0 0.0
  %3660 = vmatprep.subr.mxu0 0.0
  %3661 = vmatpush1.msra.mxu0 0.0
  %3662 = vmatprep.subr.mxu0 0.0
  %3663 = vmatpush1.msra.mxu0 0.0
  %3664 = vmatprep.subr.mxu0 0.0
  %3665 = vmatpush1.msra.mxu0 0.0
  %3666 = vmatprep.subr.mxu0 0.0
  %3667 = vmatpush1.msra.mxu0 0.0
  %3668 = vmatprep.subr.mxu0 0.0
  %3669 = vmatpush1.msra.mxu0 0.0
  %3670 = vmatprep.subr.mxu0 0.0
  %3671 = vmatpush1.msra.mxu0 0.0
  %3672 = vmatprep.subr.mxu0 0.0
  %3673 = vmatpush1.msra.mxu0 0.0
  %3674 = vmatprep.subr.mxu0 0.0
  %3675 = vmatpush1.msra.mxu0 0.0
  %3676 = vmatprep.subr.mxu0 0.0
  %3677 = vmatpush1.msra.mxu0 0.0
  %3678 = vmatprep.subr.mxu0 0.0
  %3679 = vmatpush1.msra.mxu0 0.0
  %3680 = vmatprep.subr.mxu0 0.0
  %3681 = vmatpush1.msra.mxu0 0.0
  %3682 = vmatprep.mubr.f32.mxu0 0.0
  %3683 = vmatmul.mubr.f32.gmra.mrb[0].mxu0 %v3616
  %v3684 = vpop.f32.mrb[0].mxu0
  %v3685 = vadd.f32 0.0, %v3684
  %v3686 = vpop.f32.mrb[0].mxu0
  %v3687 = vadd.f32 0.0, %v3686
  %3688 = vdwg.mxu0
  %v3691 = vcombine.low %v3685, %v3687
  %v3693 = vunpack.c.l.s4 1966171168
  %v3694 = vunpack.c.0.s8 %v3693
  %v3695 = vlaneseq
  %v3696 = vshrl.u32 %v3695, 7
  %v3697 = vsub.s32 %v3694, %v3696
  %v3698 = vrot.slane %v3691, %v3697
  %v3700 = vunpack.c.l.s4 1966171168
  %v3701 = vunpack.c.0.s8 %v3700
  %v3702 = vlaneseq
  %v3703 = vshrl.u32 %v3702, 7
  %v3704 = vsub.s32 %v3701, %v3703
  %v3705 = vrot.slane %v3698, %v3704
  %v3707 = vadd.f32 %v3512, %v3705
  %s3708 = scalar_lea.vmem %s7, 576
  %v3709 = vld [vmem:[%s3708] sm:$0xff]
  %v3710 = vld [vmem:[%s3708 + $0x8] sm:$0xff]
  %v3711 = vld [vmem:[%s3708 + $0x10] sm:$0xff]
  %v3712 = vld [vmem:[%s3708 + $0x18] sm:$0xff]
  %v3713 = vld [vmem:[%s3708 + $0x20] sm:$0xff]
  %v3714 = vld [vmem:[%s3708 + $0x28] sm:$0xff]
  %v3715 = vld [vmem:[%s3708 + $0x30] sm:$0xff]
  %v3716 = vld [vmem:[%s3708 + $0x38] sm:$0xff]
  %v3717 = vrot.slane %v1950, 1
  %v3718 = vsel %vm232, %v3717, 0
  %3720 = vmatprep.subr.mxu0 %v3710
  %3721 = vmatpush1.msra.mxu0 %v3709
  %3722 = vmatprep.subr.mxu0 %v3712
  %3723 = vmatpush1.msra.mxu0 %v3711
  %3724 = vmatprep.subr.mxu0 %v3714
  %3725 = vmatpush1.msra.mxu0 %v3713
  %3726 = vmatprep.subr.mxu0 %v3716
  %3727 = vmatpush1.msra.mxu0 %v3715
  %3728 = vmatprep.subr.mxu0 0.0
  %3729 = vmatpush1.msra.mxu0 0.0
  %3730 = vmatprep.subr.mxu0 0.0
  %3731 = vmatpush1.msra.mxu0 0.0
  %3732 = vmatprep.subr.mxu0 0.0
  %3733 = vmatpush1.msra.mxu0 0.0
  %3734 = vmatprep.subr.mxu0 0.0
  %3735 = vmatpush1.msra.mxu0 0.0
  %3736 = vmatprep.subr.mxu0 0.0
  %3737 = vmatpush1.msra.mxu0 0.0
  %3738 = vmatprep.subr.mxu0 0.0
  %3739 = vmatpush1.msra.mxu0 0.0
  %3740 = vmatprep.subr.mxu0 0.0
  %3741 = vmatpush1.msra.mxu0 0.0
  %3742 = vmatprep.subr.mxu0 0.0
  %3743 = vmatpush1.msra.mxu0 0.0
  %3744 = vmatprep.subr.mxu0 0.0
  %3745 = vmatpush1.msra.mxu0 0.0
  %3746 = vmatprep.subr.mxu0 0.0
  %3747 = vmatpush1.msra.mxu0 0.0
  %3748 = vmatprep.subr.mxu0 0.0
  %3749 = vmatpush1.msra.mxu0 0.0
  %3750 = vmatprep.subr.mxu0 0.0
  %3751 = vmatpush1.msra.mxu0 0.0
  %3752 = vmatprep.subr.mxu0 0.0
  %3753 = vmatpush1.msra.mxu0 0.0
  %3754 = vmatprep.subr.mxu0 0.0
  %3755 = vmatpush1.msra.mxu0 0.0
  %3756 = vmatprep.subr.mxu0 0.0
  %3757 = vmatpush1.msra.mxu0 0.0
  %3758 = vmatprep.subr.mxu0 0.0
  %3759 = vmatpush1.msra.mxu0 0.0
  %3760 = vmatprep.subr.mxu0 0.0
  %3761 = vmatpush1.msra.mxu0 0.0
  %3762 = vmatprep.subr.mxu0 0.0
  %3763 = vmatpush1.msra.mxu0 0.0
  %3764 = vmatprep.subr.mxu0 0.0
  %3765 = vmatpush1.msra.mxu0 0.0
  %3766 = vmatprep.subr.mxu0 0.0
  %3767 = vmatpush1.msra.mxu0 0.0
  %3768 = vmatprep.subr.mxu0 0.0
  %3769 = vmatpush1.msra.mxu0 0.0
  %3770 = vmatprep.subr.mxu0 0.0
  %3771 = vmatpush1.msra.mxu0 0.0
  %3772 = vmatprep.subr.mxu0 0.0
  %3773 = vmatpush1.msra.mxu0 0.0
  %3774 = vmatprep.subr.mxu0 0.0
  %3775 = vmatpush1.msra.mxu0 0.0
  %3776 = vmatprep.subr.mxu0 0.0
  %3777 = vmatpush1.msra.mxu0 0.0
  %3778 = vmatprep.subr.mxu0 0.0
  %3779 = vmatpush1.msra.mxu0 0.0
  %3780 = vmatprep.subr.mxu0 0.0
  %3781 = vmatpush1.msra.mxu0 0.0
  %3782 = vmatprep.subr.mxu0 0.0
  %3783 = vmatpush1.msra.mxu0 0.0
  %3784 = vmatprep.mubr.f32.mxu0 0.0
  %3785 = vmatmul.mubr.f32.gmra.mrb[0].mxu0 %v3718
  %v3786 = vpop.f32.mrb[0].mxu0
  %v3787 = vadd.f32 0.0, %v3786
  %v3788 = vpop.f32.mrb[0].mxu0
  %v3789 = vadd.f32 0.0, %v3788
  %3790 = vdwg.mxu0
  %v3793 = vcombine.low %v3787, %v3789
  %v3795 = vunpack.c.l.s4 1966171168
  %v3796 = vunpack.c.0.s8 %v3795
  %v3797 = vlaneseq
  %v3798 = vshrl.u32 %v3797, 7
  %v3799 = vsub.s32 %v3796, %v3798
  %v3800 = vrot.slane %v3793, %v3799
  %v3802 = vunpack.c.l.s4 1966171168
  %v3803 = vunpack.c.0.s8 %v3802
  %v3804 = vlaneseq
  %v3805 = vshrl.u32 %v3804, 7
  %v3806 = vsub.s32 %v3803, %v3805
  %v3807 = vrot.slane %v3800, %v3806
  %v3809 = vadd.f32 %v3614, %v3807
  %v3810 = vrot.slane %v1952, 1
  %v3811 = vsel %vm232, %v3810, 0
  %3813 = vmatprep.subr.mxu0 %v3710
  %3814 = vmatpush1.msra.mxu0 %v3709
  %3815 = vmatprep.subr.mxu0 %v3712
  %3816 = vmatpush1.msra.mxu0 %v3711
  %3817 = vmatprep.subr.mxu0 %v3714
  %3818 = vmatpush1.msra.mxu0 %v3713
  %3819 = vmatprep.subr.mxu0 %v3716
  %3820 = vmatpush1.msra.mxu0 %v3715
  %3821 = vmatprep.subr.mxu0 0.0
  %3822 = vmatpush1.msra.mxu0 0.0
  %3823 = vmatprep.subr.mxu0 0.0
  %3824 = vmatpush1.msra.mxu0 0.0
  %3825 = vmatprep.subr.mxu0 0.0
  %3826 = vmatpush1.msra.mxu0 0.0
  %3827 = vmatprep.subr.mxu0 0.0
  %3828 = vmatpush1.msra.mxu0 0.0
  %3829 = vmatprep.subr.mxu0 0.0
  %3830 = vmatpush1.msra.mxu0 0.0
  %3831 = vmatprep.subr.mxu0 0.0
  %3832 = vmatpush1.msra.mxu0 0.0
  %3833 = vmatprep.subr.mxu0 0.0
  %3834 = vmatpush1.msra.mxu0 0.0
  %3835 = vmatprep.subr.mxu0 0.0
  %3836 = vmatpush1.msra.mxu0 0.0
  %3837 = vmatprep.subr.mxu0 0.0
  %3838 = vmatpush1.msra.mxu0 0.0
  %3839 = vmatprep.subr.mxu0 0.0
  %3840 = vmatpush1.msra.mxu0 0.0
  %3841 = vmatprep.subr.mxu0 0.0
  %3842 = vmatpush1.msra.mxu0 0.0
  %3843 = vmatprep.subr.mxu0 0.0
  %3844 = vmatpush1.msra.mxu0 0.0
  %3845 = vmatprep.subr.mxu0 0.0
  %3846 = vmatpush1.msra.mxu0 0.0
  %3847 = vmatprep.subr.mxu0 0.0
  %3848 = vmatpush1.msra.mxu0 0.0
  %3849 = vmatprep.subr.mxu0 0.0
  %3850 = vmatpush1.msra.mxu0 0.0
  %3851 = vmatprep.subr.mxu0 0.0
  %3852 = vmatpush1.msra.mxu0 0.0
  %3853 = vmatprep.subr.mxu0 0.0
  %3854 = vmatpush1.msra.mxu0 0.0
  %3855 = vmatprep.subr.mxu0 0.0
  %3856 = vmatpush1.msra.mxu0 0.0
  %3857 = vmatprep.subr.mxu0 0.0
  %3858 = vmatpush1.msra.mxu0 0.0
  %3859 = vmatprep.subr.mxu0 0.0
  %3860 = vmatpush1.msra.mxu0 0.0
  %3861 = vmatprep.subr.mxu0 0.0
  %3862 = vmatpush1.msra.mxu0 0.0
  %3863 = vmatprep.subr.mxu0 0.0
  %3864 = vmatpush1.msra.mxu0 0.0
  %3865 = vmatprep.subr.mxu0 0.0
  %3866 = vmatpush1.msra.mxu0 0.0
  %3867 = vmatprep.subr.mxu0 0.0
  %3868 = vmatpush1.msra.mxu0 0.0
  %3869 = vmatprep.subr.mxu0 0.0
  %3870 = vmatpush1.msra.mxu0 0.0
  %3871 = vmatprep.subr.mxu0 0.0
  %3872 = vmatpush1.msra.mxu0 0.0
  %3873 = vmatprep.subr.mxu0 0.0
  %3874 = vmatpush1.msra.mxu0 0.0
  %3875 = vmatprep.subr.mxu0 0.0
  %3876 = vmatpush1.msra.mxu0 0.0
  %3877 = vmatprep.mubr.f32.mxu0 0.0
  %3878 = vmatmul.mubr.f32.gmra.mrb[0].mxu0 %v3811
  %v3879 = vpop.f32.mrb[0].mxu0
  %v3880 = vadd.f32 0.0, %v3879
  %v3881 = vpop.f32.mrb[0].mxu0
  %v3882 = vadd.f32 0.0, %v3881
  %3883 = vdwg.mxu0
  %v3886 = vcombine.low %v3880, %v3882
  %v3888 = vunpack.c.l.s4 1966171168
  %v3889 = vunpack.c.0.s8 %v3888
  %v3890 = vlaneseq
  %v3891 = vshrl.u32 %v3890, 7
  %v3892 = vsub.s32 %v3889, %v3891
  %v3893 = vrot.slane %v3886, %v3892
  %v3895 = vunpack.c.l.s4 1966171168
  %v3896 = vunpack.c.0.s8 %v3895
  %v3897 = vlaneseq
  %v3898 = vshrl.u32 %v3897, 7
  %v3899 = vsub.s32 %v3896, %v3898
  %v3900 = vrot.slane %v3893, %v3899
  %v3902 = vadd.f32 %v3707, %v3900
  %s3903 = scalar_lea.vmem %s7, 640
  %v3904 = vld [vmem:[%s3903] sm:$0xff]
  %v3905 = vld [vmem:[%s3903 + $0x8] sm:$0xff]
  %v3906 = vld [vmem:[%s3903 + $0x10] sm:$0xff]
  %v3907 = vld [vmem:[%s3903 + $0x18] sm:$0xff]
  %v3908 = vld [vmem:[%s3903 + $0x20] sm:$0xff]
  %v3909 = vld [vmem:[%s3903 + $0x28] sm:$0xff]
  %v3910 = vld [vmem:[%s3903 + $0x30] sm:$0xff]
  %v3911 = vld [vmem:[%s3903 + $0x38] sm:$0xff]
  %v3912 = vrot.slane %v1950, 2
  %v3913 = vsel %vm232, %v3912, 0
  %3915 = vmatprep.subr.mxu0 %v3905
  %3916 = vmatpush1.msra.mxu0 %v3904
  %3917 = vmatprep.subr.mxu0 %v3907
  %3918 = vmatpush1.msra.mxu0 %v3906
  %3919 = vmatprep.subr.mxu0 %v3909
  %3920 = vmatpush1.msra.mxu0 %v3908
  %3921 = vmatprep.subr.mxu0 %v3911
  %3922 = vmatpush1.msra.mxu0 %v3910
  %3923 = vmatprep.subr.mxu0 0.0
  %3924 = vmatpush1.msra.mxu0 0.0
  %3925 = vmatprep.subr.mxu0 0.0
  %3926 = vmatpush1.msra.mxu0 0.0
  %3927 = vmatprep.subr.mxu0 0.0
  %3928 = vmatpush1.msra.mxu0 0.0
  %3929 = vmatprep.subr.mxu0 0.0
  %3930 = vmatpush1.msra.mxu0 0.0
  %3931 = vmatprep.subr.mxu0 0.0
  %3932 = vmatpush1.msra.mxu0 0.0
  %3933 = vmatprep.subr.mxu0 0.0
  %3934 = vmatpush1.msra.mxu0 0.0
  %3935 = vmatprep.subr.mxu0 0.0
  %3936 = vmatpush1.msra.mxu0 0.0
  %3937 = vmatprep.subr.mxu0 0.0
  %3938 = vmatpush1.msra.mxu0 0.0
  %3939 = vmatprep.subr.mxu0 0.0
  %3940 = vmatpush1.msra.mxu0 0.0
  %3941 = vmatprep.subr.mxu0 0.0
  %3942 = vmatpush1.msra.mxu0 0.0
  %3943 = vmatprep.subr.mxu0 0.0
  %3944 = vmatpush1.msra.mxu0 0.0
  %3945 = vmatprep.subr.mxu0 0.0
  %3946 = vmatpush1.msra.mxu0 0.0
  %3947 = vmatprep.subr.mxu0 0.0
  %3948 = vmatpush1.msra.mxu0 0.0
  %3949 = vmatprep.subr.mxu0 0.0
  %3950 = vmatpush1.msra.mxu0 0.0
  %3951 = vmatprep.subr.mxu0 0.0
  %3952 = vmatpush1.msra.mxu0 0.0
  %3953 = vmatprep.subr.mxu0 0.0
  %3954 = vmatpush1.msra.mxu0 0.0
  %3955 = vmatprep.subr.mxu0 0.0
  %3956 = vmatpush1.msra.mxu0 0.0
  %3957 = vmatprep.subr.mxu0 0.0
  %3958 = vmatpush1.msra.mxu0 0.0
  %3959 = vmatprep.subr.mxu0 0.0
  %3960 = vmatpush1.msra.mxu0 0.0
  %3961 = vmatprep.subr.mxu0 0.0
  %3962 = vmatpush1.msra.mxu0 0.0
  %3963 = vmatprep.subr.mxu0 0.0
  %3964 = vmatpush1.msra.mxu0 0.0
  %3965 = vmatprep.subr.mxu0 0.0
  %3966 = vmatpush1.msra.mxu0 0.0
  %3967 = vmatprep.subr.mxu0 0.0
  %3968 = vmatpush1.msra.mxu0 0.0
  %3969 = vmatprep.subr.mxu0 0.0
  %3970 = vmatpush1.msra.mxu0 0.0
  %3971 = vmatprep.subr.mxu0 0.0
  %3972 = vmatpush1.msra.mxu0 0.0
  %3973 = vmatprep.subr.mxu0 0.0
  %3974 = vmatpush1.msra.mxu0 0.0
  %3975 = vmatprep.subr.mxu0 0.0
  %3976 = vmatpush1.msra.mxu0 0.0
  %3977 = vmatprep.subr.mxu0 0.0
  %3978 = vmatpush1.msra.mxu0 0.0
  %3979 = vmatprep.mubr.f32.mxu0 0.0
  %3980 = vmatmul.mubr.f32.gmra.mrb[0].mxu0 %v3913
  %v3981 = vpop.f32.mrb[0].mxu0
  %v3982 = vadd.f32 0.0, %v3981
  %v3983 = vpop.f32.mrb[0].mxu0
  %v3984 = vadd.f32 0.0, %v3983
  %3985 = vdwg.mxu0
  %v3988 = vcombine.low %v3982, %v3984
  %v3990 = vunpack.c.l.s4 1966171168
  %v3991 = vunpack.c.0.s8 %v3990
  %v3992 = vlaneseq
  %v3993 = vshrl.u32 %v3992, 7
  %v3994 = vsub.s32 %v3991, %v3993
  %v3995 = vrot.slane %v3988, %v3994
  %v3997 = vunpack.c.l.s4 1966171168
  %v3998 = vunpack.c.0.s8 %v3997
  %v3999 = vlaneseq
  %v4000 = vshrl.u32 %v3999, 7
  %v4001 = vsub.s32 %v3998, %v4000
  %v4002 = vrot.slane %v3995, %v4001
  %v4004 = vadd.f32 %v3809, %v4002
  %v4005 = vrot.slane %v1952, 2
  %v4006 = vsel %vm232, %v4005, 0
  %4008 = vmatprep.subr.mxu0 %v3905
  %4009 = vmatpush1.msra.mxu0 %v3904
  %4010 = vmatprep.subr.mxu0 %v3907
  %4011 = vmatpush1.msra.mxu0 %v3906
  %4012 = vmatprep.subr.mxu0 %v3909
  %4013 = vmatpush1.msra.mxu0 %v3908
  %4014 = vmatprep.subr.mxu0 %v3911
  %4015 = vmatpush1.msra.mxu0 %v3910
  %4016 = vmatprep.subr.mxu0 0.0
  %4017 = vmatpush1.msra.mxu0 0.0
  %4018 = vmatprep.subr.mxu0 0.0
  %4019 = vmatpush1.msra.mxu0 0.0
  %4020 = vmatprep.subr.mxu0 0.0
  %4021 = vmatpush1.msra.mxu0 0.0
  %4022 = vmatprep.subr.mxu0 0.0
  %4023 = vmatpush1.msra.mxu0 0.0
  %4024 = vmatprep.subr.mxu0 0.0
  %4025 = vmatpush1.msra.mxu0 0.0
  %4026 = vmatprep.subr.mxu0 0.0
  %4027 = vmatpush1.msra.mxu0 0.0
  %4028 = vmatprep.subr.mxu0 0.0
  %4029 = vmatpush1.msra.mxu0 0.0
  %4030 = vmatprep.subr.mxu0 0.0
  %4031 = vmatpush1.msra.mxu0 0.0
  %4032 = vmatprep.subr.mxu0 0.0
  %4033 = vmatpush1.msra.mxu0 0.0
  %4034 = vmatprep.subr.mxu0 0.0
  %4035 = vmatpush1.msra.mxu0 0.0
  %4036 = vmatprep.subr.mxu0 0.0
  %4037 = vmatpush1.msra.mxu0 0.0
  %4038 = vmatprep.subr.mxu0 0.0
  %4039 = vmatpush1.msra.mxu0 0.0
  %4040 = vmatprep.subr.mxu0 0.0
  %4041 = vmatpush1.msra.mxu0 0.0
  %4042 = vmatprep.subr.mxu0 0.0
  %4043 = vmatpush1.msra.mxu0 0.0
  %4044 = vmatprep.subr.mxu0 0.0
  %4045 = vmatpush1.msra.mxu0 0.0
  %4046 = vmatprep.subr.mxu0 0.0
  %4047 = vmatpush1.msra.mxu0 0.0
  %4048 = vmatprep.subr.mxu0 0.0
  %4049 = vmatpush1.msra.mxu0 0.0
  %4050 = vmatprep.subr.mxu0 0.0
  %4051 = vmatpush1.msra.mxu0 0.0
  %4052 = vmatprep.subr.mxu0 0.0
  %4053 = vmatpush1.msra.mxu0 0.0
  %4054 = vmatprep.subr.mxu0 0.0
  %4055 = vmatpush1.msra.mxu0 0.0
  %4056 = vmatprep.subr.mxu0 0.0
  %4057 = vmatpush1.msra.mxu0 0.0
  %4058 = vmatprep.subr.mxu0 0.0
  %4059 = vmatpush1.msra.mxu0 0.0
  %4060 = vmatprep.subr.mxu0 0.0
  %4061 = vmatpush1.msra.mxu0 0.0
  %4062 = vmatprep.subr.mxu0 0.0
  %4063 = vmatpush1.msra.mxu0 0.0
  %4064 = vmatprep.subr.mxu0 0.0
  %4065 = vmatpush1.msra.mxu0 0.0
  %4066 = vmatprep.subr.mxu0 0.0
  %4067 = vmatpush1.msra.mxu0 0.0
  %4068 = vmatprep.subr.mxu0 0.0
  %4069 = vmatpush1.msra.mxu0 0.0
  %4070 = vmatprep.subr.mxu0 0.0
  %4071 = vmatpush1.msra.mxu0 0.0
  %4072 = vmatprep.mubr.f32.mxu0 0.0
  %4073 = vmatmul.mubr.f32.gmra.mrb[0].mxu0 %v4006
  %v4074 = vpop.f32.mrb[0].mxu0
  %v4075 = vadd.f32 0.0, %v4074
  %v4076 = vpop.f32.mrb[0].mxu0
  %v4077 = vadd.f32 0.0, %v4076
  %4078 = vdwg.mxu0
  %v4081 = vcombine.low %v4075, %v4077
  %v4083 = vunpack.c.l.s4 1966171168
  %v4084 = vunpack.c.0.s8 %v4083
  %v4085 = vlaneseq
  %v4086 = vshrl.u32 %v4085, 7
  %v4087 = vsub.s32 %v4084, %v4086
  %v4088 = vrot.slane %v4081, %v4087
  %v4090 = vunpack.c.l.s4 1966171168
  %v4091 = vunpack.c.0.s8 %v4090
  %v4092 = vlaneseq
  %v4093 = vshrl.u32 %v4092, 7
  %v4094 = vsub.s32 %v4091, %v4093
  %v4095 = vrot.slane %v4088, %v4094
  %v4097 = vadd.f32 %v3902, %v4095
  %s4098 = scalar_lea.vmem %s7, 704
  %v4099 = vld [vmem:[%s4098] sm:$0xff]
  %v4100 = vld [vmem:[%s4098 + $0x8] sm:$0xff]
  %v4101 = vld [vmem:[%s4098 + $0x10] sm:$0xff]
  %v4102 = vld [vmem:[%s4098 + $0x18] sm:$0xff]
  %v4103 = vld [vmem:[%s4098 + $0x20] sm:$0xff]
  %v4104 = vld [vmem:[%s4098 + $0x28] sm:$0xff]
  %v4105 = vld [vmem:[%s4098 + $0x30] sm:$0xff]
  %v4106 = vld [vmem:[%s4098 + $0x38] sm:$0xff]
  %v4107 = vrot.slane %v1950, 3
  %v4108 = vsel %vm232, %v4107, 0
  %4110 = vmatprep.subr.mxu0 %v4100
  %4111 = vmatpush1.msra.mxu0 %v4099
  %4112 = vmatprep.subr.mxu0 %v4102
  %4113 = vmatpush1.msra.mxu0 %v4101
  %4114 = vmatprep.subr.mxu0 %v4104
  %4115 = vmatpush1.msra.mxu0 %v4103
  %4116 = vmatprep.subr.mxu0 %v4106
  %4117 = vmatpush1.msra.mxu0 %v4105
  %4118 = vmatprep.subr.mxu0 0.0
  %4119 = vmatpush1.msra.mxu0 0.0
  %4120 = vmatprep.subr.mxu0 0.0
  %4121 = vmatpush1.msra.mxu0 0.0
  %4122 = vmatprep.subr.mxu0 0.0
  %4123 = vmatpush1.msra.mxu0 0.0
  %4124 = vmatprep.subr.mxu0 0.0
  %4125 = vmatpush1.msra.mxu0 0.0
  %4126 = vmatprep.subr.mxu0 0.0
  %4127 = vmatpush1.msra.mxu0 0.0
  %4128 = vmatprep.subr.mxu0 0.0
  %4129 = vmatpush1.msra.mxu0 0.0
  %4130 = vmatprep.subr.mxu0 0.0
  %4131 = vmatpush1.msra.mxu0 0.0
  %4132 = vmatprep.subr.mxu0 0.0
  %4133 = vmatpush1.msra.mxu0 0.0
  %4134 = vmatprep.subr.mxu0 0.0
  %4135 = vmatpush1.msra.mxu0 0.0
  %4136 = vmatprep.subr.mxu0 0.0
  %4137 = vmatpush1.msra.mxu0 0.0
  %4138 = vmatprep.subr.mxu0 0.0
  %4139 = vmatpush1.msra.mxu0 0.0
  %4140 = vmatprep.subr.mxu0 0.0
  %4141 = vmatpush1.msra.mxu0 0.0
  %4142 = vmatprep.subr.mxu0 0.0
  %4143 = vmatpush1.msra.mxu0 0.0
  %4144 = vmatprep.subr.mxu0 0.0
  %4145 = vmatpush1.msra.mxu0 0.0
  %4146 = vmatprep.subr.mxu0 0.0
  %4147 = vmatpush1.msra.mxu0 0.0
  %4148 = vmatprep.subr.mxu0 0.0
  %4149 = vmatpush1.msra.mxu0 0.0
  %4150 = vmatprep.subr.mxu0 0.0
  %4151 = vmatpush1.msra.mxu0 0.0
  %4152 = vmatprep.subr.mxu0 0.0
  %4153 = vmatpush1.msra.mxu0 0.0
  %4154 = vmatprep.subr.mxu0 0.0
  %4155 = vmatpush1.msra.mxu0 0.0
  %4156 = vmatprep.subr.mxu0 0.0
  %4157 = vmatpush1.msra.mxu0 0.0
  %4158 = vmatprep.subr.mxu0 0.0
  %4159 = vmatpush1.msra.mxu0 0.0
  %4160 = vmatprep.subr.mxu0 0.0
  %4161 = vmatpush1.msra.mxu0 0.0
  %4162 = vmatprep.subr.mxu0 0.0
  %4163 = vmatpush1.msra.mxu0 0.0
  %4164 = vmatprep.subr.mxu0 0.0
  %4165 = vmatpush1.msra.mxu0 0.0
  %4166 = vmatprep.subr.mxu0 0.0
  %4167 = vmatpush1.msra.mxu0 0.0
  %4168 = vmatprep.subr.mxu0 0.0
  %4169 = vmatpush1.msra.mxu0 0.0
  %4170 = vmatprep.subr.mxu0 0.0
  %4171 = vmatpush1.msra.mxu0 0.0
  %4172 = vmatprep.subr.mxu0 0.0
  %4173 = vmatpush1.msra.mxu0 0.0
  %4174 = vmatprep.mubr.f32.mxu0 0.0
  %4175 = vmatmul.mubr.f32.gmra.mrb[0].mxu0 %v4108
  %v4176 = vpop.f32.mrb[0].mxu0
  %v4177 = vadd.f32 0.0, %v4176
  %v4178 = vpop.f32.mrb[0].mxu0
  %v4179 = vadd.f32 0.0, %v4178
  %4180 = vdwg.mxu0
  %v4183 = vcombine.low %v4177, %v4179
  %v4185 = vunpack.c.l.s4 1966171168
  %v4186 = vunpack.c.0.s8 %v4185
  %v4187 = vlaneseq
  %v4188 = vshrl.u32 %v4187, 7
  %v4189 = vsub.s32 %v4186, %v4188
  %v4190 = vrot.slane %v4183, %v4189
  %v4192 = vunpack.c.l.s4 1966171168
  %v4193 = vunpack.c.0.s8 %v4192
  %v4194 = vlaneseq
  %v4195 = vshrl.u32 %v4194, 7
  %v4196 = vsub.s32 %v4193, %v4195
  %v4197 = vrot.slane %v4190, %v4196
  %v4199 = vadd.f32 %v4004, %v4197
  %v4200 = vrot.slane %v1952, 3
  %v4201 = vsel %vm232, %v4200, 0
  %4203 = vmatprep.subr.mxu0 %v4100
  %4204 = vmatpush1.msra.mxu0 %v4099
  %4205 = vmatprep.subr.mxu0 %v4102
  %4206 = vmatpush1.msra.mxu0 %v4101
  %4207 = vmatprep.subr.mxu0 %v4104
  %4208 = vmatpush1.msra.mxu0 %v4103
  %4209 = vmatprep.subr.mxu0 %v4106
  %4210 = vmatpush1.msra.mxu0 %v4105
  %4211 = vmatprep.subr.mxu0 0.0
  %4212 = vmatpush1.msra.mxu0 0.0
  %4213 = vmatprep.subr.mxu0 0.0
  %4214 = vmatpush1.msra.mxu0 0.0
  %4215 = vmatprep.subr.mxu0 0.0
  %4216 = vmatpush1.msra.mxu0 0.0
  %4217 = vmatprep.subr.mxu0 0.0
  %4218 = vmatpush1.msra.mxu0 0.0
  %4219 = vmatprep.subr.mxu0 0.0
  %4220 = vmatpush1.msra.mxu0 0.0
  %4221 = vmatprep.subr.mxu0 0.0
  %4222 = vmatpush1.msra.mxu0 0.0
  %4223 = vmatprep.subr.mxu0 0.0
  %4224 = vmatpush1.msra.mxu0 0.0
  %4225 = vmatprep.subr.mxu0 0.0
  %4226 = vmatpush1.msra.mxu0 0.0
  %4227 = vmatprep.subr.mxu0 0.0
  %4228 = vmatpush1.msra.mxu0 0.0
  %4229 = vmatprep.subr.mxu0 0.0
  %4230 = vmatpush1.msra.mxu0 0.0
  %4231 = vmatprep.subr.mxu0 0.0
  %4232 = vmatpush1.msra.mxu0 0.0
  %4233 = vmatprep.subr.mxu0 0.0
  %4234 = vmatpush1.msra.mxu0 0.0
  %4235 = vmatprep.subr.mxu0 0.0
  %4236 = vmatpush1.msra.mxu0 0.0
  %4237 = vmatprep.subr.mxu0 0.0
  %4238 = vmatpush1.msra.mxu0 0.0
  %4239 = vmatprep.subr.mxu0 0.0
  %4240 = vmatpush1.msra.mxu0 0.0
  %4241 = vmatprep.subr.mxu0 0.0
  %4242 = vmatpush1.msra.mxu0 0.0
  %4243 = vmatprep.subr.mxu0 0.0
  %4244 = vmatpush1.msra.mxu0 0.0
  %4245 = vmatprep.subr.mxu0 0.0
  %4246 = vmatpush1.msra.mxu0 0.0
  %4247 = vmatprep.subr.mxu0 0.0
  %4248 = vmatpush1.msra.mxu0 0.0
  %4249 = vmatprep.subr.mxu0 0.0
  %4250 = vmatpush1.msra.mxu0 0.0
  %4251 = vmatprep.subr.mxu0 0.0
  %4252 = vmatpush1.msra.mxu0 0.0
  %4253 = vmatprep.subr.mxu0 0.0
  %4254 = vmatpush1.msra.mxu0 0.0
  %4255 = vmatprep.subr.mxu0 0.0
  %4256 = vmatpush1.msra.mxu0 0.0
  %4257 = vmatprep.subr.mxu0 0.0
  %4258 = vmatpush1.msra.mxu0 0.0
  %4259 = vmatprep.subr.mxu0 0.0
  %4260 = vmatpush1.msra.mxu0 0.0
  %4261 = vmatprep.subr.mxu0 0.0
  %4262 = vmatpush1.msra.mxu0 0.0
  %4263 = vmatprep.subr.mxu0 0.0
  %4264 = vmatpush1.msra.mxu0 0.0
  %4265 = vmatprep.subr.mxu0 0.0
  %4266 = vmatpush1.msra.mxu0 0.0
  %4267 = vmatprep.mubr.f32.mxu0 0.0
  %4268 = vmatmul.mubr.f32.gmra.mrb[0].mxu0 %v4201
  %v4269 = vpop.f32.mrb[0].mxu0
  %v4270 = vadd.f32 0.0, %v4269
  %v4271 = vpop.f32.mrb[0].mxu0
  %v4272 = vadd.f32 0.0, %v4271
  %4273 = vdwg.mxu0
  %v4276 = vcombine.low %v4270, %v4272
  %v4278 = vunpack.c.l.s4 1966171168
  %v4279 = vunpack.c.0.s8 %v4278
  %v4280 = vlaneseq
  %v4281 = vshrl.u32 %v4280, 7
  %v4282 = vsub.s32 %v4279, %v4281
  %v4283 = vrot.slane %v4276, %v4282
  %v4285 = vunpack.c.l.s4 1966171168
  %v4286 = vunpack.c.0.s8 %v4285
  %v4287 = vlaneseq
  %v4288 = vshrl.u32 %v4287, 7
  %v4289 = vsub.s32 %v4286, %v4288
  %v4290 = vrot.slane %v4283, %v4289
  %v4292 = vadd.f32 %v4097, %v4290
  %s4293 = scalar_lea.vmem %s7, 768
  %v4294 = vld [vmem:[%s4293] sm:$0xff]
  %v4295 = vld [vmem:[%s4293 + $0x8] sm:$0xff]
  %v4296 = vld [vmem:[%s4293 + $0x10] sm:$0xff]
  %v4297 = vld [vmem:[%s4293 + $0x18] sm:$0xff]
  %v4298 = vld [vmem:[%s4293 + $0x20] sm:$0xff]
  %v4299 = vld [vmem:[%s4293 + $0x28] sm:$0xff]
  %v4300 = vld [vmem:[%s4293 + $0x30] sm:$0xff]
  %v4301 = vld [vmem:[%s4293 + $0x38] sm:$0xff]
  %v4302 = vrot.slane %v1950, 4
  %v4303 = vsel %vm232, %v4302, 0
  %4305 = vmatprep.subr.mxu0 %v4295
  %4306 = vmatpush1.msra.mxu0 %v4294
  %4307 = vmatprep.subr.mxu0 %v4297
  %4308 = vmatpush1.msra.mxu0 %v4296
  %4309 = vmatprep.subr.mxu0 %v4299
  %4310 = vmatpush1.msra.mxu0 %v4298
  %4311 = vmatprep.subr.mxu0 %v4301
  %4312 = vmatpush1.msra.mxu0 %v4300
  %4313 = vmatprep.subr.mxu0 0.0
  %4314 = vmatpush1.msra.mxu0 0.0
  %4315 = vmatprep.subr.mxu0 0.0
  %4316 = vmatpush1.msra.mxu0 0.0
  %4317 = vmatprep.subr.mxu0 0.0
  %4318 = vmatpush1.msra.mxu0 0.0
  %4319 = vmatprep.subr.mxu0 0.0
  %4320 = vmatpush1.msra.mxu0 0.0
  %4321 = vmatprep.subr.mxu0 0.0
  %4322 = vmatpush1.msra.mxu0 0.0
  %4323 = vmatprep.subr.mxu0 0.0
  %4324 = vmatpush1.msra.mxu0 0.0
  %4325 = vmatprep.subr.mxu0 0.0
  %4326 = vmatpush1.msra.mxu0 0.0
  %4327 = vmatprep.subr.mxu0 0.0
  %4328 = vmatpush1.msra.mxu0 0.0
  %4329 = vmatprep.subr.mxu0 0.0
  %4330 = vmatpush1.msra.mxu0 0.0
  %4331 = vmatprep.subr.mxu0 0.0
  %4332 = vmatpush1.msra.mxu0 0.0
  %4333 = vmatprep.subr.mxu0 0.0
  %4334 = vmatpush1.msra.mxu0 0.0
  %4335 = vmatprep.subr.mxu0 0.0
  %4336 = vmatpush1.msra.mxu0 0.0
  %4337 = vmatprep.subr.mxu0 0.0
  %4338 = vmatpush1.msra.mxu0 0.0
  %4339 = vmatprep.subr.mxu0 0.0
  %4340 = vmatpush1.msra.mxu0 0.0
  %4341 = vmatprep.subr.mxu0 0.0
  %4342 = vmatpush1.msra.mxu0 0.0
  %4343 = vmatprep.subr.mxu0 0.0
  %4344 = vmatpush1.msra.mxu0 0.0
  %4345 = vmatprep.subr.mxu0 0.0
  %4346 = vmatpush1.msra.mxu0 0.0
  %4347 = vmatprep.subr.mxu0 0.0
  %4348 = vmatpush1.msra.mxu0 0.0
  %4349 = vmatprep.subr.mxu0 0.0
  %4350 = vmatpush1.msra.mxu0 0.0
  %4351 = vmatprep.subr.mxu0 0.0
  %4352 = vmatpush1.msra.mxu0 0.0
  %4353 = vmatprep.subr.mxu0 0.0
  %4354 = vmatpush1.msra.mxu0 0.0
  %4355 = vmatprep.subr.mxu0 0.0
  %4356 = vmatpush1.msra.mxu0 0.0
  %4357 = vmatprep.subr.mxu0 0.0
  %4358 = vmatpush1.msra.mxu0 0.0
  %4359 = vmatprep.subr.mxu0 0.0
  %4360 = vmatpush1.msra.mxu0 0.0
  %4361 = vmatprep.subr.mxu0 0.0
  %4362 = vmatpush1.msra.mxu0 0.0
  %4363 = vmatprep.subr.mxu0 0.0
  %4364 = vmatpush1.msra.mxu0 0.0
  %4365 = vmatprep.subr.mxu0 0.0
  %4366 = vmatpush1.msra.mxu0 0.0
  %4367 = vmatprep.subr.mxu0 0.0
  %4368 = vmatpush1.msra.mxu0 0.0
  %4369 = vmatprep.mubr.f32.mxu0 0.0
  %4370 = vmatmul.mubr.f32.gmra.mrb[0].mxu0 %v4303
  %v4371 = vpop.f32.mrb[0].mxu0
  %v4372 = vadd.f32 0.0, %v4371
  %v4373 = vpop.f32.mrb[0].mxu0
  %v4374 = vadd.f32 0.0, %v4373
  %4375 = vdwg.mxu0
  %v4378 = vcombine.low %v4372, %v4374
  %v4380 = vunpack.c.l.s4 1966171168
  %v4381 = vunpack.c.0.s8 %v4380
  %v4382 = vlaneseq
  %v4383 = vshrl.u32 %v4382, 7
  %v4384 = vsub.s32 %v4381, %v4383
  %v4385 = vrot.slane %v4378, %v4384
  %v4387 = vunpack.c.l.s4 1966171168
  %v4388 = vunpack.c.0.s8 %v4387
  %v4389 = vlaneseq
  %v4390 = vshrl.u32 %v4389, 7
  %v4391 = vsub.s32 %v4388, %v4390
  %v4392 = vrot.slane %v4385, %v4391
  %v4394 = vadd.f32 %v4199, %v4392
  %v4395 = vrot.slane %v1952, 4
  %v4396 = vsel %vm232, %v4395, 0
  %4398 = vmatprep.subr.mxu0 %v4295
  %4399 = vmatpush1.msra.mxu0 %v4294
  %4400 = vmatprep.subr.mxu0 %v4297
  %4401 = vmatpush1.msra.mxu0 %v4296
  %4402 = vmatprep.subr.mxu0 %v4299
  %4403 = vmatpush1.msra.mxu0 %v4298
  %4404 = vmatprep.subr.mxu0 %v4301
  %4405 = vmatpush1.msra.mxu0 %v4300
  %4406 = vmatprep.subr.mxu0 0.0
  %4407 = vmatpush1.msra.mxu0 0.0
  %4408 = vmatprep.subr.mxu0 0.0
  %4409 = vmatpush1.msra.mxu0 0.0
  %4410 = vmatprep.subr.mxu0 0.0
  %4411 = vmatpush1.msra.mxu0 0.0
  %4412 = vmatprep.subr.mxu0 0.0
  %4413 = vmatpush1.msra.mxu0 0.0
  %4414 = vmatprep.subr.mxu0 0.0
  %4415 = vmatpush1.msra.mxu0 0.0
  %4416 = vmatprep.subr.mxu0 0.0
  %4417 = vmatpush1.msra.mxu0 0.0
  %4418 = vmatprep.subr.mxu0 0.0
  %4419 = vmatpush1.msra.mxu0 0.0
  %4420 = vmatprep.subr.mxu0 0.0
  %4421 = vmatpush1.msra.mxu0 0.0
  %4422 = vmatprep.subr.mxu0 0.0
  %4423 = vmatpush1.msra.mxu0 0.0
  %4424 = vmatprep.subr.mxu0 0.0
  %4425 = vmatpush1.msra.mxu0 0.0
  %4426 = vmatprep.subr.mxu0 0.0
  %4427 = vmatpush1.msra.mxu0 0.0
  %4428 = vmatprep.subr.mxu0 0.0
  %4429 = vmatpush1.msra.mxu0 0.0
  %4430 = vmatprep.subr.mxu0 0.0
  %4431 = vmatpush1.msra.mxu0 0.0
  %4432 = vmatprep.subr.mxu0 0.0
  %4433 = vmatpush1.msra.mxu0 0.0
  %4434 = vmatprep.subr.mxu0 0.0
  %4435 = vmatpush1.msra.mxu0 0.0
  %4436 = vmatprep.subr.mxu0 0.0
  %4437 = vmatpush1.msra.mxu0 0.0
  %4438 = vmatprep.subr.mxu0 0.0
  %4439 = vmatpush1.msra.mxu0 0.0
  %4440 = vmatprep.subr.mxu0 0.0
  %4441 = vmatpush1.msra.mxu0 0.0
  %4442 = vmatprep.subr.mxu0 0.0
  %4443 = vmatpush1.msra.mxu0 0.0
  %4444 = vmatprep.subr.mxu0 0.0
  %4445 = vmatpush1.msra.mxu0 0.0
  %4446 = vmatprep.subr.mxu0 0.0
  %4447 = vmatpush1.msra.mxu0 0.0
  %4448 = vmatprep.subr.mxu0 0.0
  %4449 = vmatpush1.msra.mxu0 0.0
  %4450 = vmatprep.subr.mxu0 0.0
  %4451 = vmatpush1.msra.mxu0 0.0
  %4452 = vmatprep.subr.mxu0 0.0
  %4453 = vmatpush1.msra.mxu0 0.0
  %4454 = vmatprep.subr.mxu0 0.0
  %4455 = vmatpush1.msra.mxu0 0.0
  %4456 = vmatprep.subr.mxu0 0.0
  %4457 = vmatpush1.msra.mxu0 0.0
  %4458 = vmatprep.subr.mxu0 0.0
  %4459 = vmatpush1.msra.mxu0 0.0
  %4460 = vmatprep.subr.mxu0 0.0
  %4461 = vmatpush1.msra.mxu0 0.0
  %4462 = vmatprep.mubr.f32.mxu0 0.0
  %4463 = vmatmul.mubr.f32.gmra.mrb[0].mxu0 %v4396
  %v4464 = vpop.f32.mrb[0].mxu0
  %v4465 = vadd.f32 0.0, %v4464
  %v4466 = vpop.f32.mrb[0].mxu0
  %v4467 = vadd.f32 0.0, %v4466
  %4468 = vdwg.mxu0
  %v4471 = vcombine.low %v4465, %v4467
  %v4473 = vunpack.c.l.s4 1966171168
  %v4474 = vunpack.c.0.s8 %v4473
  %v4475 = vlaneseq
  %v4476 = vshrl.u32 %v4475, 7
  %v4477 = vsub.s32 %v4474, %v4476
  %v4478 = vrot.slane %v4471, %v4477
  %v4480 = vunpack.c.l.s4 1966171168
  %v4481 = vunpack.c.0.s8 %v4480
  %v4482 = vlaneseq
  %v4483 = vshrl.u32 %v4482, 7
  %v4484 = vsub.s32 %v4481, %v4483
  %v4485 = vrot.slane %v4478, %v4484
  %v4487 = vadd.f32 %v4292, %v4485
  %s4488 = scalar_lea.vmem %s7, 832
  %v4489 = vld [vmem:[%s4488] sm:$0xff]
  %v4490 = vld [vmem:[%s4488 + $0x8] sm:$0xff]
  %v4491 = vld [vmem:[%s4488 + $0x10] sm:$0xff]
  %v4492 = vld [vmem:[%s4488 + $0x18] sm:$0xff]
  %v4493 = vld [vmem:[%s4488 + $0x20] sm:$0xff]
  %v4494 = vld [vmem:[%s4488 + $0x28] sm:$0xff]
  %v4495 = vld [vmem:[%s4488 + $0x30] sm:$0xff]
  %v4496 = vld [vmem:[%s4488 + $0x38] sm:$0xff]
  %v4497 = vrot.slane %v1950, 5
  %v4498 = vsel %vm232, %v4497, 0
  %4500 = vmatprep.subr.mxu0 %v4490
  %4501 = vmatpush1.msra.mxu0 %v4489
  %4502 = vmatprep.subr.mxu0 %v4492
  %4503 = vmatpush1.msra.mxu0 %v4491
  %4504 = vmatprep.subr.mxu0 %v4494
  %4505 = vmatpush1.msra.mxu0 %v4493
  %4506 = vmatprep.subr.mxu0 %v4496
  %4507 = vmatpush1.msra.mxu0 %v4495
  %4508 = vmatprep.subr.mxu0 0.0
  %4509 = vmatpush1.msra.mxu0 0.0
  %4510 = vmatprep.subr.mxu0 0.0
  %4511 = vmatpush1.msra.mxu0 0.0
  %4512 = vmatprep.subr.mxu0 0.0
  %4513 = vmatpush1.msra.mxu0 0.0
  %4514 = vmatprep.subr.mxu0 0.0
  %4515 = vmatpush1.msra.mxu0 0.0
  %4516 = vmatprep.subr.mxu0 0.0
  %4517 = vmatpush1.msra.mxu0 0.0
  %4518 = vmatprep.subr.mxu0 0.0
  %4519 = vmatpush1.msra.mxu0 0.0
  %4520 = vmatprep.subr.mxu0 0.0
  %4521 = vmatpush1.msra.mxu0 0.0
  %4522 = vmatprep.subr.mxu0 0.0
  %4523 = vmatpush1.msra.mxu0 0.0
  %4524 = vmatprep.subr.mxu0 0.0
  %4525 = vmatpush1.msra.mxu0 0.0
  %4526 = vmatprep.subr.mxu0 0.0
  %4527 = vmatpush1.msra.mxu0 0.0
  %4528 = vmatprep.subr.mxu0 0.0
  %4529 = vmatpush1.msra.mxu0 0.0
  %4530 = vmatprep.subr.mxu0 0.0
  %4531 = vmatpush1.msra.mxu0 0.0
  %4532 = vmatprep.subr.mxu0 0.0
  %4533 = vmatpush1.msra.mxu0 0.0
  %4534 = vmatprep.subr.mxu0 0.0
  %4535 = vmatpush1.msra.mxu0 0.0
  %4536 = vmatprep.subr.mxu0 0.0
  %4537 = vmatpush1.msra.mxu0 0.0
  %4538 = vmatprep.subr.mxu0 0.0
  %4539 = vmatpush1.msra.mxu0 0.0
  %4540 = vmatprep.subr.mxu0 0.0
  %4541 = vmatpush1.msra.mxu0 0.0
  %4542 = vmatprep.subr.mxu0 0.0
  %4543 = vmatpush1.msra.mxu0 0.0
  %4544 = vmatprep.subr.mxu0 0.0
  %4545 = vmatpush1.msra.mxu0 0.0
  %4546 = vmatprep.subr.mxu0 0.0
  %4547 = vmatpush1.msra.mxu0 0.0
  %4548 = vmatprep.subr.mxu0 0.0
  %4549 = vmatpush1.msra.mxu0 0.0
  %4550 = vmatprep.subr.mxu0 0.0
  %4551 = vmatpush1.msra.mxu0 0.0
  %4552 = vmatprep.subr.mxu0 0.0
  %4553 = vmatpush1.msra.mxu0 0.0
  %4554 = vmatprep.subr.mxu0 0.0
  %4555 = vmatpush1.msra.mxu0 0.0
  %4556 = vmatprep.subr.mxu0 0.0
  %4557 = vmatpush1.msra.mxu0 0.0
  %4558 = vmatprep.subr.mxu0 0.0
  %4559 = vmatpush1.msra.mxu0 0.0
  %4560 = vmatprep.subr.mxu0 0.0
  %4561 = vmatpush1.msra.mxu0 0.0
  %4562 = vmatprep.subr.mxu0 0.0
  %4563 = vmatpush1.msra.mxu0 0.0
  %4564 = vmatprep.mubr.f32.mxu0 0.0
  %4565 = vmatmul.mubr.f32.gmra.mrb[0].mxu0 %v4498
  %v4566 = vpop.f32.mrb[0].mxu0
  %v4567 = vadd.f32 0.0, %v4566
  %v4568 = vpop.f32.mrb[0].mxu0
  %v4569 = vadd.f32 0.0, %v4568
  %4570 = vdwg.mxu0
  %v4573 = vcombine.low %v4567, %v4569
  %v4575 = vunpack.c.l.s4 1966171168
  %v4576 = vunpack.c.0.s8 %v4575
  %v4577 = vlaneseq
  %v4578 = vshrl.u32 %v4577, 7
  %v4579 = vsub.s32 %v4576, %v4578
  %v4580 = vrot.slane %v4573, %v4579
  %v4582 = vunpack.c.l.s4 1966171168
  %v4583 = vunpack.c.0.s8 %v4582
  %v4584 = vlaneseq
  %v4585 = vshrl.u32 %v4584, 7
  %v4586 = vsub.s32 %v4583, %v4585
  %v4587 = vrot.slane %v4580, %v4586
  %v4589 = vadd.f32 %v4394, %v4587
  %v4590 = vrot.slane %v1952, 5
  %v4591 = vsel %vm232, %v4590, 0
  %4593 = vmatprep.subr.mxu0 %v4490
  %4594 = vmatpush1.msra.mxu0 %v4489
  %4595 = vmatprep.subr.mxu0 %v4492
  %4596 = vmatpush1.msra.mxu0 %v4491
  %4597 = vmatprep.subr.mxu0 %v4494
  %4598 = vmatpush1.msra.mxu0 %v4493
  %4599 = vmatprep.subr.mxu0 %v4496
  %4600 = vmatpush1.msra.mxu0 %v4495
  %4601 = vmatprep.subr.mxu0 0.0
  %4602 = vmatpush1.msra.mxu0 0.0
  %4603 = vmatprep.subr.mxu0 0.0
  %4604 = vmatpush1.msra.mxu0 0.0
  %4605 = vmatprep.subr.mxu0 0.0
  %4606 = vmatpush1.msra.mxu0 0.0
  %4607 = vmatprep.subr.mxu0 0.0
  %4608 = vmatpush1.msra.mxu0 0.0
  %4609 = vmatprep.subr.mxu0 0.0
  %4610 = vmatpush1.msra.mxu0 0.0
  %4611 = vmatprep.subr.mxu0 0.0
  %4612 = vmatpush1.msra.mxu0 0.0
  %4613 = vmatprep.subr.mxu0 0.0
  %4614 = vmatpush1.msra.mxu0 0.0
  %4615 = vmatprep.subr.mxu0 0.0
  %4616 = vmatpush1.msra.mxu0 0.0
  %4617 = vmatprep.subr.mxu0 0.0
  %4618 = vmatpush1.msra.mxu0 0.0
  %4619 = vmatprep.subr.mxu0 0.0
  %4620 = vmatpush1.msra.mxu0 0.0
  %4621 = vmatprep.subr.mxu0 0.0
  %4622 = vmatpush1.msra.mxu0 0.0
  %4623 = vmatprep.subr.mxu0 0.0
  %4624 = vmatpush1.msra.mxu0 0.0
  %4625 = vmatprep.subr.mxu0 0.0
  %4626 = vmatpush1.msra.mxu0 0.0
  %4627 = vmatprep.subr.mxu0 0.0
  %4628 = vmatpush1.msra.mxu0 0.0
  %4629 = vmatprep.subr.mxu0 0.0
  %4630 = vmatpush1.msra.mxu0 0.0
  %4631 = vmatprep.subr.mxu0 0.0
  %4632 = vmatpush1.msra.mxu0 0.0
  %4633 = vmatprep.subr.mxu0 0.0
  %4634 = vmatpush1.msra.mxu0 0.0
  %4635 = vmatprep.subr.mxu0 0.0
  %4636 = vmatpush1.msra.mxu0 0.0
  %4637 = vmatprep.subr.mxu0 0.0
  %4638 = vmatpush1.msra.mxu0 0.0
  %4639 = vmatprep.subr.mxu0 0.0
  %4640 = vmatpush1.msra.mxu0 0.0
  %4641 = vmatprep.subr.mxu0 0.0
  %4642 = vmatpush1.msra.mxu0 0.0
  %4643 = vmatprep.subr.mxu0 0.0
  %4644 = vmatpush1.msra.mxu0 0.0
  %4645 = vmatprep.subr.mxu0 0.0
  %4646 = vmatpush1.msra.mxu0 0.0
  %4647 = vmatprep.subr.mxu0 0.0
  %4648 = vmatpush1.msra.mxu0 0.0
  %4649 = vmatprep.subr.mxu0 0.0
  %4650 = vmatpush1.msra.mxu0 0.0
  %4651 = vmatprep.subr.mxu0 0.0
  %4652 = vmatpush1.msra.mxu0 0.0
  %4653 = vmatprep.subr.mxu0 0.0
  %4654 = vmatpush1.msra.mxu0 0.0
  %4655 = vmatprep.subr.mxu0 0.0
  %4656 = vmatpush1.msra.mxu0 0.0
  %4657 = vmatprep.mubr.f32.mxu0 0.0
  %4658 = vmatmul.mubr.f32.gmra.mrb[0].mxu0 %v4591
  %v4659 = vpop.f32.mrb[0].mxu0
  %v4660 = vadd.f32 0.0, %v4659
  %v4661 = vpop.f32.mrb[0].mxu0
  %v4662 = vadd.f32 0.0, %v4661
  %4663 = vdwg.mxu0
  %v4666 = vcombine.low %v4660, %v4662
  %v4668 = vunpack.c.l.s4 1966171168
  %v4669 = vunpack.c.0.s8 %v4668
  %v4670 = vlaneseq
  %v4671 = vshrl.u32 %v4670, 7
  %v4672 = vsub.s32 %v4669, %v4671
  %v4673 = vrot.slane %v4666, %v4672
  %v4675 = vunpack.c.l.s4 1966171168
  %v4676 = vunpack.c.0.s8 %v4675
  %v4677 = vlaneseq
  %v4678 = vshrl.u32 %v4677, 7
  %v4679 = vsub.s32 %v4676, %v4678
  %v4680 = vrot.slane %v4673, %v4679
  %v4682 = vadd.f32 %v4487, %v4680
  %s4683 = scalar_lea.vmem %s7, 896
  %v4684 = vld [vmem:[%s4683] sm:$0xff]
  %v4685 = vld [vmem:[%s4683 + $0x8] sm:$0xff]
  %v4686 = vld [vmem:[%s4683 + $0x10] sm:$0xff]
  %v4687 = vld [vmem:[%s4683 + $0x18] sm:$0xff]
  %v4688 = vld [vmem:[%s4683 + $0x20] sm:$0xff]
  %v4689 = vld [vmem:[%s4683 + $0x28] sm:$0xff]
  %v4690 = vld [vmem:[%s4683 + $0x30] sm:$0xff]
  %v4691 = vld [vmem:[%s4683 + $0x38] sm:$0xff]
  %v4692 = vrot.slane %v1950, 6
  %v4693 = vsel %vm232, %v4692, 0
  %4695 = vmatprep.subr.mxu0 %v4685
  %4696 = vmatpush1.msra.mxu0 %v4684
  %4697 = vmatprep.subr.mxu0 %v4687
  %4698 = vmatpush1.msra.mxu0 %v4686
  %4699 = vmatprep.subr.mxu0 %v4689
  %4700 = vmatpush1.msra.mxu0 %v4688
  %4701 = vmatprep.subr.mxu0 %v4691
  %4702 = vmatpush1.msra.mxu0 %v4690
  %4703 = vmatprep.subr.mxu0 0.0
  %4704 = vmatpush1.msra.mxu0 0.0
  %4705 = vmatprep.subr.mxu0 0.0
  %4706 = vmatpush1.msra.mxu0 0.0
  %4707 = vmatprep.subr.mxu0 0.0
  %4708 = vmatpush1.msra.mxu0 0.0
  %4709 = vmatprep.subr.mxu0 0.0
  %4710 = vmatpush1.msra.mxu0 0.0
  %4711 = vmatprep.subr.mxu0 0.0
  %4712 = vmatpush1.msra.mxu0 0.0
  %4713 = vmatprep.subr.mxu0 0.0
  %4714 = vmatpush1.msra.mxu0 0.0
  %4715 = vmatprep.subr.mxu0 0.0
  %4716 = vmatpush1.msra.mxu0 0.0
  %4717 = vmatprep.subr.mxu0 0.0
  %4718 = vmatpush1.msra.mxu0 0.0
  %4719 = vmatprep.subr.mxu0 0.0
  %4720 = vmatpush1.msra.mxu0 0.0
  %4721 = vmatprep.subr.mxu0 0.0
  %4722 = vmatpush1.msra.mxu0 0.0
  %4723 = vmatprep.subr.mxu0 0.0
  %4724 = vmatpush1.msra.mxu0 0.0
  %4725 = vmatprep.subr.mxu0 0.0
  %4726 = vmatpush1.msra.mxu0 0.0
  %4727 = vmatprep.subr.mxu0 0.0
  %4728 = vmatpush1.msra.mxu0 0.0
  %4729 = vmatprep.subr.mxu0 0.0
  %4730 = vmatpush1.msra.mxu0 0.0
  %4731 = vmatprep.subr.mxu0 0.0
  %4732 = vmatpush1.msra.mxu0 0.0
  %4733 = vmatprep.subr.mxu0 0.0
  %4734 = vmatpush1.msra.mxu0 0.0
  %4735 = vmatprep.subr.mxu0 0.0
  %4736 = vmatpush1.msra.mxu0 0.0
  %4737 = vmatprep.subr.mxu0 0.0
  %4738 = vmatpush1.msra.mxu0 0.0
  %4739 = vmatprep.subr.mxu0 0.0
  %4740 = vmatpush1.msra.mxu0 0.0
  %4741 = vmatprep.subr.mxu0 0.0
  %4742 = vmatpush1.msra.mxu0 0.0
  %4743 = vmatprep.subr.mxu0 0.0
  %4744 = vmatpush1.msra.mxu0 0.0
  %4745 = vmatprep.subr.mxu0 0.0
  %4746 = vmatpush1.msra.mxu0 0.0
  %4747 = vmatprep.subr.mxu0 0.0
  %4748 = vmatpush1.msra.mxu0 0.0
  %4749 = vmatprep.subr.mxu0 0.0
  %4750 = vmatpush1.msra.mxu0 0.0
  %4751 = vmatprep.subr.mxu0 0.0
  %4752 = vmatpush1.msra.mxu0 0.0
  %4753 = vmatprep.subr.mxu0 0.0
  %4754 = vmatpush1.msra.mxu0 0.0
  %4755 = vmatprep.subr.mxu0 0.0
  %4756 = vmatpush1.msra.mxu0 0.0
  %4757 = vmatprep.subr.mxu0 0.0
  %4758 = vmatpush1.msra.mxu0 0.0
  %4759 = vmatprep.mubr.f32.mxu0 0.0
  %4760 = vmatmul.mubr.f32.gmra.mrb[0].mxu0 %v4693
  %v4761 = vpop.f32.mrb[0].mxu0
  %v4762 = vadd.f32 0.0, %v4761
  %v4763 = vpop.f32.mrb[0].mxu0
  %v4764 = vadd.f32 0.0, %v4763
  %4765 = vdwg.mxu0
  %v4768 = vcombine.low %v4762, %v4764
  %v4770 = vunpack.c.l.s4 1966171168
  %v4771 = vunpack.c.0.s8 %v4770
  %v4772 = vlaneseq
  %v4773 = vshrl.u32 %v4772, 7
  %v4774 = vsub.s32 %v4771, %v4773
  %v4775 = vrot.slane %v4768, %v4774
  %v4777 = vunpack.c.l.s4 1966171168
  %v4778 = vunpack.c.0.s8 %v4777
  %v4779 = vlaneseq
  %v4780 = vshrl.u32 %v4779, 7
  %v4781 = vsub.s32 %v4778, %v4780
  %v4782 = vrot.slane %v4775, %v4781
  %v4784 = vadd.f32 %v4589, %v4782
  %v4785 = vrot.slane %v1952, 6
  %v4786 = vsel %vm232, %v4785, 0
  %4788 = vmatprep.subr.mxu0 %v4685
  %4789 = vmatpush1.msra.mxu0 %v4684
  %4790 = vmatprep.subr.mxu0 %v4687
  %4791 = vmatpush1.msra.mxu0 %v4686
  %4792 = vmatprep.subr.mxu0 %v4689
  %4793 = vmatpush1.msra.mxu0 %v4688
  %4794 = vmatprep.subr.mxu0 %v4691
  %4795 = vmatpush1.msra.mxu0 %v4690
  %4796 = vmatprep.subr.mxu0 0.0
  %4797 = vmatpush1.msra.mxu0 0.0
  %4798 = vmatprep.subr.mxu0 0.0
  %4799 = vmatpush1.msra.mxu0 0.0
  %4800 = vmatprep.subr.mxu0 0.0
  %4801 = vmatpush1.msra.mxu0 0.0
  %4802 = vmatprep.subr.mxu0 0.0
  %4803 = vmatpush1.msra.mxu0 0.0
  %4804 = vmatprep.subr.mxu0 0.0
  %4805 = vmatpush1.msra.mxu0 0.0
  %4806 = vmatprep.subr.mxu0 0.0
  %4807 = vmatpush1.msra.mxu0 0.0
  %4808 = vmatprep.subr.mxu0 0.0
  %4809 = vmatpush1.msra.mxu0 0.0
  %4810 = vmatprep.subr.mxu0 0.0
  %4811 = vmatpush1.msra.mxu0 0.0
  %4812 = vmatprep.subr.mxu0 0.0
  %4813 = vmatpush1.msra.mxu0 0.0
  %4814 = vmatprep.subr.mxu0 0.0
  %4815 = vmatpush1.msra.mxu0 0.0
  %4816 = vmatprep.subr.mxu0 0.0
  %4817 = vmatpush1.msra.mxu0 0.0
  %4818 = vmatprep.subr.mxu0 0.0
  %4819 = vmatpush1.msra.mxu0 0.0
  %4820 = vmatprep.subr.mxu0 0.0
  %4821 = vmatpush1.msra.mxu0 0.0
  %4822 = vmatprep.subr.mxu0 0.0
  %4823 = vmatpush1.msra.mxu0 0.0
  %4824 = vmatprep.subr.mxu0 0.0
  %4825 = vmatpush1.msra.mxu0 0.0
  %4826 = vmatprep.subr.mxu0 0.0
  %4827 = vmatpush1.msra.mxu0 0.0
  %4828 = vmatprep.subr.mxu0 0.0
  %4829 = vmatpush1.msra.mxu0 0.0
  %4830 = vmatprep.subr.mxu0 0.0
  %4831 = vmatpush1.msra.mxu0 0.0
  %4832 = vmatprep.subr.mxu0 0.0
  %4833 = vmatpush1.msra.mxu0 0.0
  %4834 = vmatprep.subr.mxu0 0.0
  %4835 = vmatpush1.msra.mxu0 0.0
  %4836 = vmatprep.subr.mxu0 0.0
  %4837 = vmatpush1.msra.mxu0 0.0
  %4838 = vmatprep.subr.mxu0 0.0
  %4839 = vmatpush1.msra.mxu0 0.0
  %4840 = vmatprep.subr.mxu0 0.0
  %4841 = vmatpush1.msra.mxu0 0.0
  %4842 = vmatprep.subr.mxu0 0.0
  %4843 = vmatpush1.msra.mxu0 0.0
  %4844 = vmatprep.subr.mxu0 0.0
  %4845 = vmatpush1.msra.mxu0 0.0
  %4846 = vmatprep.subr.mxu0 0.0
  %4847 = vmatpush1.msra.mxu0 0.0
  %4848 = vmatprep.subr.mxu0 0.0
  %4849 = vmatpush1.msra.mxu0 0.0
  %4850 = vmatprep.subr.mxu0 0.0
  %4851 = vmatpush1.msra.mxu0 0.0
  %4852 = vmatprep.mubr.f32.mxu0 0.0
  %4853 = vmatmul.mubr.f32.gmra.mrb[0].mxu0 %v4786
  %v4854 = vpop.f32.mrb[0].mxu0
  %v4855 = vadd.f32 0.0, %v4854
  %v4856 = vpop.f32.mrb[0].mxu0
  %v4857 = vadd.f32 0.0, %v4856
  %4858 = vdwg.mxu0
  %v4861 = vcombine.low %v4855, %v4857
  %v4863 = vunpack.c.l.s4 1966171168
  %v4864 = vunpack.c.0.s8 %v4863
  %v4865 = vlaneseq
  %v4866 = vshrl.u32 %v4865, 7
  %v4867 = vsub.s32 %v4864, %v4866
  %v4868 = vrot.slane %v4861, %v4867
  %v4870 = vunpack.c.l.s4 1966171168
  %v4871 = vunpack.c.0.s8 %v4870
  %v4872 = vlaneseq
  %v4873 = vshrl.u32 %v4872, 7
  %v4874 = vsub.s32 %v4871, %v4873
  %v4875 = vrot.slane %v4868, %v4874
  %v4877 = vadd.f32 %v4682, %v4875
  %s4878 = scalar_lea.vmem %s7, 960
  %v4879 = vld [vmem:[%s4878] sm:$0xff]
  %v4880 = vld [vmem:[%s4878 + $0x8] sm:$0xff]
  %v4881 = vld [vmem:[%s4878 + $0x10] sm:$0xff]
  %v4882 = vld [vmem:[%s4878 + $0x18] sm:$0xff]
  %v4883 = vld [vmem:[%s4878 + $0x20] sm:$0xff]
  %v4884 = vld [vmem:[%s4878 + $0x28] sm:$0xff]
  %v4885 = vld [vmem:[%s4878 + $0x30] sm:$0xff]
  %v4886 = vld [vmem:[%s4878 + $0x38] sm:$0xff]
  %v4887 = vrot.slane %v1950, 7
  %v4888 = vsel %vm232, %v4887, 0
  %4890 = vmatprep.subr.mxu0 %v4880
  %4891 = vmatpush1.msra.mxu0 %v4879
  %4892 = vmatprep.subr.mxu0 %v4882
  %4893 = vmatpush1.msra.mxu0 %v4881
  %4894 = vmatprep.subr.mxu0 %v4884
  %4895 = vmatpush1.msra.mxu0 %v4883
  %4896 = vmatprep.subr.mxu0 %v4886
  %4897 = vmatpush1.msra.mxu0 %v4885
  %4898 = vmatprep.subr.mxu0 0.0
  %4899 = vmatpush1.msra.mxu0 0.0
  %4900 = vmatprep.subr.mxu0 0.0
  %4901 = vmatpush1.msra.mxu0 0.0
  %4902 = vmatprep.subr.mxu0 0.0
  %4903 = vmatpush1.msra.mxu0 0.0
  %4904 = vmatprep.subr.mxu0 0.0
  %4905 = vmatpush1.msra.mxu0 0.0
  %4906 = vmatprep.subr.mxu0 0.0
  %4907 = vmatpush1.msra.mxu0 0.0
  %4908 = vmatprep.subr.mxu0 0.0
  %4909 = vmatpush1.msra.mxu0 0.0
  %4910 = vmatprep.subr.mxu0 0.0
  %4911 = vmatpush1.msra.mxu0 0.0
  %4912 = vmatprep.subr.mxu0 0.0
  %4913 = vmatpush1.msra.mxu0 0.0
  %4914 = vmatprep.subr.mxu0 0.0
  %4915 = vmatpush1.msra.mxu0 0.0
  %4916 = vmatprep.subr.mxu0 0.0
  %4917 = vmatpush1.msra.mxu0 0.0
  %4918 = vmatprep.subr.mxu0 0.0
  %4919 = vmatpush1.msra.mxu0 0.0
  %4920 = vmatprep.subr.mxu0 0.0
  %4921 = vmatpush1.msra.mxu0 0.0
  %4922 = vmatprep.subr.mxu0 0.0
  %4923 = vmatpush1.msra.mxu0 0.0
  %4924 = vmatprep.subr.mxu0 0.0
  %4925 = vmatpush1.msra.mxu0 0.0
  %4926 = vmatprep.subr.mxu0 0.0
  %4927 = vmatpush1.msra.mxu0 0.0
  %4928 = vmatprep.subr.mxu0 0.0
  %4929 = vmatpush1.msra.mxu0 0.0
  %4930 = vmatprep.subr.mxu0 0.0
  %4931 = vmatpush1.msra.mxu0 0.0
  %4932 = vmatprep.subr.mxu0 0.0
  %4933 = vmatpush1.msra.mxu0 0.0
  %4934 = vmatprep.subr.mxu0 0.0
  %4935 = vmatpush1.msra.mxu0 0.0
  %4936 = vmatprep.subr.mxu0 0.0
  %4937 = vmatpush1.msra.mxu0 0.0
  %4938 = vmatprep.subr.mxu0 0.0
  %4939 = vmatpush1.msra.mxu0 0.0
  %4940 = vmatprep.subr.mxu0 0.0
  %4941 = vmatpush1.msra.mxu0 0.0
  %4942 = vmatprep.subr.mxu0 0.0
  %4943 = vmatpush1.msra.mxu0 0.0
  %4944 = vmatprep.subr.mxu0 0.0
  %4945 = vmatpush1.msra.mxu0 0.0
  %4946 = vmatprep.subr.mxu0 0.0
  %4947 = vmatpush1.msra.mxu0 0.0
  %4948 = vmatprep.subr.mxu0 0.0
  %4949 = vmatpush1.msra.mxu0 0.0
  %4950 = vmatprep.subr.mxu0 0.0
  %4951 = vmatpush1.msra.mxu0 0.0
  %4952 = vmatprep.subr.mxu0 0.0
  %4953 = vmatpush1.msra.mxu0 0.0
  %4954 = vmatprep.mubr.f32.mxu0 0.0
  %4955 = vmatmul.mubr.f32.gmra.mrb[0].mxu0 %v4888
  %v4956 = vpop.f32.mrb[0].mxu0
  %v4957 = vadd.f32 0.0, %v4956
  %v4958 = vpop.f32.mrb[0].mxu0
  %v4959 = vadd.f32 0.0, %v4958
  %4960 = vdwg.mxu0
  %v4963 = vcombine.low %v4957, %v4959
  %v4965 = vunpack.c.l.s4 1966171168
  %v4966 = vunpack.c.0.s8 %v4965
  %v4967 = vlaneseq
  %v4968 = vshrl.u32 %v4967, 7
  %v4969 = vsub.s32 %v4966, %v4968
  %v4970 = vrot.slane %v4963, %v4969
  %v4972 = vunpack.c.l.s4 1966171168
  %v4973 = vunpack.c.0.s8 %v4972
  %v4974 = vlaneseq
  %v4975 = vshrl.u32 %v4974, 7
  %v4976 = vsub.s32 %v4973, %v4975
  %v4977 = vrot.slane %v4970, %v4976
  %v4979 = vadd.f32 %v4784, %v4977
  %v4980 = vrot.slane %v1952, 7
  %v4981 = vsel %vm232, %v4980, 0
  %4983 = vmatprep.subr.mxu0 %v4880
  %4984 = vmatpush1.msra.mxu0 %v4879
  %4985 = vmatprep.subr.mxu0 %v4882
  %4986 = vmatpush1.msra.mxu0 %v4881
  %4987 = vmatprep.subr.mxu0 %v4884
  %4988 = vmatpush1.msra.mxu0 %v4883
  %4989 = vmatprep.subr.mxu0 %v4886
  %4990 = vmatpush1.msra.mxu0 %v4885
  %4991 = vmatprep.subr.mxu0 0.0
  %4992 = vmatpush1.msra.mxu0 0.0
  %4993 = vmatprep.subr.mxu0 0.0
  %4994 = vmatpush1.msra.mxu0 0.0
  %4995 = vmatprep.subr.mxu0 0.0
  %4996 = vmatpush1.msra.mxu0 0.0
  %4997 = vmatprep.subr.mxu0 0.0
  %4998 = vmatpush1.msra.mxu0 0.0
  %4999 = vmatprep.subr.mxu0 0.0
  %5000 = vmatpush1.msra.mxu0 0.0
  %5001 = vmatprep.subr.mxu0 0.0
  %5002 = vmatpush1.msra.mxu0 0.0
  %5003 = vmatprep.subr.mxu0 0.0
  %5004 = vmatpush1.msra.mxu0 0.0
  %5005 = vmatprep.subr.mxu0 0.0
  %5006 = vmatpush1.msra.mxu0 0.0
  %5007 = vmatprep.subr.mxu0 0.0
  %5008 = vmatpush1.msra.mxu0 0.0
  %5009 = vmatprep.subr.mxu0 0.0
  %5010 = vmatpush1.msra.mxu0 0.0
  %5011 = vmatprep.subr.mxu0 0.0
  %5012 = vmatpush1.msra.mxu0 0.0
  %5013 = vmatprep.subr.mxu0 0.0
  %5014 = vmatpush1.msra.mxu0 0.0
  %5015 = vmatprep.subr.mxu0 0.0
  %5016 = vmatpush1.msra.mxu0 0.0
  %5017 = vmatprep.subr.mxu0 0.0
  %5018 = vmatpush1.msra.mxu0 0.0
  %5019 = vmatprep.subr.mxu0 0.0
  %5020 = vmatpush1.msra.mxu0 0.0
  %5021 = vmatprep.subr.mxu0 0.0
  %5022 = vmatpush1.msra.mxu0 0.0
  %5023 = vmatprep.subr.mxu0 0.0
  %5024 = vmatpush1.msra.mxu0 0.0
  %5025 = vmatprep.subr.mxu0 0.0
  %5026 = vmatpush1.msra.mxu0 0.0
  %5027 = vmatprep.subr.mxu0 0.0
  %5028 = vmatpush1.msra.mxu0 0.0
  %5029 = vmatprep.subr.mxu0 0.0
  %5030 = vmatpush1.msra.mxu0 0.0
  %5031 = vmatprep.subr.mxu0 0.0
  %5032 = vmatpush1.msra.mxu0 0.0
  %5033 = vmatprep.subr.mxu0 0.0
  %5034 = vmatpush1.msra.mxu0 0.0
  %5035 = vmatprep.subr.mxu0 0.0
  %5036 = vmatpush1.msra.mxu0 0.0
  %5037 = vmatprep.subr.mxu0 0.0
  %5038 = vmatpush1.msra.mxu0 0.0
  %5039 = vmatprep.subr.mxu0 0.0
  %5040 = vmatpush1.msra.mxu0 0.0
  %5041 = vmatprep.subr.mxu0 0.0
  %5042 = vmatpush1.msra.mxu0 0.0
  %5043 = vmatprep.subr.mxu0 0.0
  %5044 = vmatpush1.msra.mxu0 0.0
  %5045 = vmatprep.subr.mxu0 0.0
  %5046 = vmatpush1.msra.mxu0 0.0
  %5047 = vmatprep.mubr.f32.mxu0 0.0
  %5048 = vmatmul.mubr.f32.gmra.mrb[0].mxu0 %v4981
  %v5049 = vpop.f32.mrb[0].mxu0
  %v5050 = vadd.f32 0.0, %v5049
  %v5051 = vpop.f32.mrb[0].mxu0
  %v5052 = vadd.f32 0.0, %v5051
  %5053 = vdwg.mxu0
  %v5056 = vcombine.low %v5050, %v5052
  %v5058 = vunpack.c.l.s4 1966171168
  %v5059 = vunpack.c.0.s8 %v5058
  %v5060 = vlaneseq
  %v5061 = vshrl.u32 %v5060, 7
  %v5062 = vsub.s32 %v5059, %v5061
  %v5063 = vrot.slane %v5056, %v5062
  %v5065 = vunpack.c.l.s4 1966171168
  %v5066 = vunpack.c.0.s8 %v5065
  %v5067 = vlaneseq
  %v5068 = vshrl.u32 %v5067, 7
  %v5069 = vsub.s32 %v5066, %v5068
  %v5070 = vrot.slane %v5063, %v5069
  %v5072 = vadd.f32 %v4877, %v5070
  %v5074 = vlaneseq
  %v5075 = vshrl.u32 %v5074, 7
  %v5076 = vsub.s32 0, %v5075
  %v5077 = vrot.slane %v4979, %v5076
  %v5078 = vlaneseq
  %v5079 = vshrl.u32 %v5078, 7
  %v5080 = vsub.s32 1, %v5079
  %v5081 = vrot.slane %v4979, %v5080
  %v5085 = vlaneseq
  %v5086 = vshrl.u32 %v5085, 7
  %v5087 = vsub.s32 0, %v5086
  %v5088 = vrot.slane %v5072, %v5087
  %v5089 = vlaneseq
  %v5090 = vshrl.u32 %v5089, 7
  %v5091 = vsub.s32 1, %v5090
  %v5092 = vrot.slane %v5072, %v5091
  %vm5095 = vcmask 1040384
  %v5096 = vsel %vm5095, %v5077, %v5088
  %v5097 = vsel %vm5095, %v5081, %v5092
  %v5098 = vmax.f32 %v5096, 0.0
  %v5099 = vmax.f32 %v5097, 0.0
  %vm5100 = vcmask 1041408
  %v5101 = vsel %vm5100, %v5098, 0.0
  %v5102 = vsel %vm5100, %v5099, 0.0
  %v5103 = vadd.f32 %v5101, %v5102
  %5104 = vadd.xlane.f32.xlu0 %v5103
  %v5105 = vpop.xlane.xlu0 %5104
  %v5106 = vrcp.pop 256.0
  %v5107 = vmul.f32 %v5105, %v5106
  %v5108 = vsub.f32 %v5098, %v5107
  %v5109 = vsub.f32 %v5099, %v5107
  %v5110 = vmul.f32 %v5108, %v5108
  %v5111 = vmul.f32 %v5109, %v5109
  %v5112 = vsel %vm5100, %v5110, 0.0
  %v5113 = vsel %vm5100, %v5111, 0.0
  %v5114 = vadd.f32 %v5112, %v5113
  %5115 = vadd.xlane.f32.xlu0 %v5114
  %v5116 = vpop.xlane.xlu0 %5115
  %v5117 = vmul.f32 %v5116, %v5106
  %v5118 = vadd.f32 %v5117, 1e-12
  %v5119 = vrsqrt.pop %v5118
  %v5120 = vmul.f32 %v5108, %v5119
  %v5121 = vmul.f32 %v5109, %v5119
  %v5122 = vld [vmem:[%s9] sm:$0xff]
  %v5123 = vld [vmem:[%s9 + $0x8] sm:$0xff]
  %v5124 = vld [vmem:[%s9 + $0x10] sm:$0xff]
  %v5125 = vld [vmem:[%s9 + $0x18] sm:$0xff]
  %v5126 = vld [vmem:[%s9 + $0x20] sm:$0xff]
  %v5127 = vld [vmem:[%s9 + $0x28] sm:$0xff]
  %v5128 = vld [vmem:[%s9 + $0x30] sm:$0xff]
  %v5129 = vld [vmem:[%s9 + $0x38] sm:$0xff]
  %v5130 = vld [vmem:[%s9 + $0x40] sm:$0xff]
  %v5131 = vld [vmem:[%s9 + $0x48] sm:$0xff]
  %v5132 = vld [vmem:[%s9 + $0x50] sm:$0xff]
  %v5133 = vld [vmem:[%s9 + $0x58] sm:$0xff]
  %v5134 = vld [vmem:[%s9 + $0x60] sm:$0xff]
  %v5135 = vld [vmem:[%s9 + $0x68] sm:$0xff]
  %v5136 = vld [vmem:[%s9 + $0x70] sm:$0xff]
  %v5137 = vld [vmem:[%s9 + $0x78] sm:$0xff]
  %v5138 = vld [vmem:[%s9 + $0x80] sm:$0xff]
  %v5139 = vld [vmem:[%s9 + $0x88] sm:$0xff]
  %v5140 = vld [vmem:[%s9 + $0x90] sm:$0xff]
  %v5141 = vld [vmem:[%s9 + $0x98] sm:$0xff]
  %v5142 = vld [vmem:[%s9 + $0xa0] sm:$0xff]
  %v5143 = vld [vmem:[%s9 + $0xa8] sm:$0xff]
  %v5144 = vld [vmem:[%s9 + $0xb0] sm:$0xff]
  %v5145 = vld [vmem:[%s9 + $0xb8] sm:$0xff]
  %v5146 = vld [vmem:[%s9 + $0xc0] sm:$0xff]
  %v5147 = vld [vmem:[%s9 + $0xc8] sm:$0xff]
  %v5148 = vld [vmem:[%s9 + $0xd0] sm:$0xff]
  %v5149 = vld [vmem:[%s9 + $0xd8] sm:$0xff]
  %v5150 = vld [vmem:[%s9 + $0xe0] sm:$0xff]
  %v5151 = vld [vmem:[%s9 + $0xe8] sm:$0xff]
  %v5152 = vld [vmem:[%s9 + $0xf0] sm:$0xff]
  %v5153 = vld [vmem:[%s9 + $0xf8] sm:$0xff]
  %v5154 = vld [vmem:[%s10] sm:$0x1]
  %v5156 = vlaneseq
  %v5157 = vshrl.u32 %v5156, 7
  %v5158 = vsub.s32 0, %v5157
  %v5159 = vrot.slane %v5154, %v5158
  %5161 = vmatprep.subr.mxu0 0.0
  %5162 = vmatpush1.msra.mxu0 %v5122
  %5163 = vmatprep.subr.mxu0 0.0
  %5164 = vmatpush1.msra.mxu0 %v5123
  %5165 = vmatprep.subr.mxu0 0.0
  %5166 = vmatpush1.msra.mxu0 %v5124
  %5167 = vmatprep.subr.mxu0 0.0
  %5168 = vmatpush1.msra.mxu0 %v5125
  %5169 = vmatprep.subr.mxu0 0.0
  %5170 = vmatpush1.msra.mxu0 %v5126
  %5171 = vmatprep.subr.mxu0 0.0
  %5172 = vmatpush1.msra.mxu0 %v5127
  %5173 = vmatprep.subr.mxu0 0.0
  %5174 = vmatpush1.msra.mxu0 %v5128
  %5175 = vmatprep.subr.mxu0 0.0
  %5176 = vmatpush1.msra.mxu0 %v5129
  %5177 = vmatprep.subr.mxu0 0.0
  %5178 = vmatpush1.msra.mxu0 %v5130
  %5179 = vmatprep.subr.mxu0 0.0
  %5180 = vmatpush1.msra.mxu0 %v5131
  %5181 = vmatprep.subr.mxu0 0.0
  %5182 = vmatpush1.msra.mxu0 %v5132
  %5183 = vmatprep.subr.mxu0 0.0
  %5184 = vmatpush1.msra.mxu0 %v5133
  %5185 = vmatprep.subr.mxu0 0.0
  %5186 = vmatpush1.msra.mxu0 %v5134
  %5187 = vmatprep.subr.mxu0 0.0
  %5188 = vmatpush1.msra.mxu0 %v5135
  %5189 = vmatprep.subr.mxu0 0.0
  %5190 = vmatpush1.msra.mxu0 %v5136
  %5191 = vmatprep.subr.mxu0 0.0
  %5192 = vmatpush1.msra.mxu0 %v5137
  %5193 = vmatprep.subr.mxu0 0.0
  %5194 = vmatpush1.msra.mxu0 %v5138
  %5195 = vmatprep.subr.mxu0 0.0
  %5196 = vmatpush1.msra.mxu0 %v5139
  %5197 = vmatprep.subr.mxu0 0.0
  %5198 = vmatpush1.msra.mxu0 %v5140
  %5199 = vmatprep.subr.mxu0 0.0
  %5200 = vmatpush1.msra.mxu0 %v5141
  %5201 = vmatprep.subr.mxu0 0.0
  %5202 = vmatpush1.msra.mxu0 %v5142
  %5203 = vmatprep.subr.mxu0 0.0
  %5204 = vmatpush1.msra.mxu0 %v5143
  %5205 = vmatprep.subr.mxu0 0.0
  %5206 = vmatpush1.msra.mxu0 %v5144
  %5207 = vmatprep.subr.mxu0 0.0
  %5208 = vmatpush1.msra.mxu0 %v5145
  %5209 = vmatprep.subr.mxu0 0.0
  %5210 = vmatpush1.msra.mxu0 %v5146
  %5211 = vmatprep.subr.mxu0 0.0
  %5212 = vmatpush1.msra.mxu0 %v5147
  %5213 = vmatprep.subr.mxu0 0.0
  %5214 = vmatpush1.msra.mxu0 %v5148
  %5215 = vmatprep.subr.mxu0 0.0
  %5216 = vmatpush1.msra.mxu0 %v5149
  %5217 = vmatprep.subr.mxu0 0.0
  %5218 = vmatpush1.msra.mxu0 %v5150
  %5219 = vmatprep.subr.mxu0 0.0
  %5220 = vmatpush1.msra.mxu0 %v5151
  %5221 = vmatprep.subr.mxu0 0.0
  %5222 = vmatpush1.msra.mxu0 %v5152
  %5223 = vmatprep.subr.mxu0 0.0
  %5224 = vmatpush1.msra.mxu0 %v5153
  %5225 = vmatprep.mubr.f32.mxu0 %v5121
  %5226 = vmatmul.mubr.f32.gmra.mrb[0].mxu0 %v5120
  %v5227 = vpop.f32.mrb[0].mxu0
  %v5228 = vadd.f32 %v5159, %v5227
  %v5229 = vpop.f32.mrb[0].mxu0
  %5230 = vdwg.mxu0
  %5231 = vst [vmem:[%s11] sm:$0x3] %v5228
  // Predicated region
  $region46: #{bytenet_forward.1} parent=0 // pred_check
    _
  $region47: #{bytenet_forward.1} parent=0 // pred_check_branch
    %5233 = sbr.rel (0) target = $region49
  $region48: #{bytenet_forward.1} parent=0 // pred_region
    _
  $region49: #{bytenet_forward.1} parent=0 // pred_fallthru
    _
  // Predicated region
  $region50: #{bytenet_forward.1} parent=0 // pred_check
    _
  $region51: #{bytenet_forward.1} parent=0 // pred_check_branch
    %5235 = sbr.rel (0) target = $region53
  $region52: #{bytenet_forward.1} parent=0 // pred_region
    _
  $region53: #{bytenet_forward.1} parent=0 // pred_fallthru
    _

</llo_original>
